<compile_context>
chip_gen: v5e
topology: v5e:2x2
jax: 0.10.0
libtpu: 0.0.40
codegen_flags: <defaults>
</compile_context>

<pallas_src>
import math

import jax
import jax.numpy as jnp
from jax.experimental import pallas as pl
from jax.experimental.pallas import tpu as pltpu

MAX_NEIGHBORS = 64  # matches max_num_neighbors=64; must be a power of two (fold)


# ----------------------------------------------------------------------------
# Pallas kernel: transposed per-edge MLP + masked max-aggregation over K.
# ----------------------------------------------------------------------------
def _pointconv_kernel(feat_ref, cnt_ref, w1_ref, b1_ref, w2_ref, b2_ref, out_ref):
    # feat_ref: (1, D, K*TM) bf16   lane index = k*TM + m  (m fastest)
    # cnt_ref:  (1, TM) int32       number of valid neighbors per query (prefix in k)
    # w1_ref:   (H, D) bf16    b1_ref: (H, 1) f32
    # w2_ref:   (C, H) bf16    b2_ref: (C, 1) f32
    # out_ref:  (C, TM) f32    (lane-dense store)
    tm = out_ref.shape[-1]
    f = feat_ref[0]                                                   # [D, K*TM] bf16
    kt_tm = f.shape[-1]                                               # K*TM

    # h^T = W1^T @ feat^T  (big dim on the MXU N/lane axis, f32 accumulation)
    h = jnp.dot(w1_ref[...], f, preferred_element_type=jnp.float32) + b1_ref[...]
    h = jnp.maximum(h, 0.0)                                           # ReLU in f32 (v5e-safe)

    # y^T = W2^T @ h^T  (bias deferred until after the K-max fold)
    y = jnp.dot(w2_ref[...], h.astype(jnp.bfloat16),
                preferred_element_type=jnp.float32)                   # [C, K*TM] f32

    # Rebuild the validity mask from per-query neighbor counts.  Valid
    # neighbors form a prefix in k (top_k returns them nearest-first), so lane
    # k*TM + m is valid iff k < cnt[m]  <=>  lane < cnt[m]*TM.
    cnt = cnt_ref[...]                                                # (1, TM) int32
    thresh = cnt * tm                                                 # (1, TM)
    while thresh.shape[-1] < kt_tm:                                   # log2(K) lane-dim concats
        thresh = jnp.concatenate([thresh, thresh], axis=-1)
    lane = jax.lax.broadcasted_iota(jnp.int32, (1, kt_tm), 1)
    y = jnp.where(lane < thresh, y, -jnp.inf)

    # max over K via lane-tile-aligned halving fold
    w = kt_tm
    while w > tm:                                                     # log2(K) steps
        w //= 2
        y = jnp.maximum(y[:, :w], y[:, w:])

    # deferred bias (-inf stays -inf), then guard zero-neighbor queries
    # (padding rows / empty balls) to 0 instead of -inf.
    y = y + b2_ref[...]                                               # [C, TM]
    out_ref[...] = jnp.where(cnt > 0, y, 0.0)


def pointconv_pallas(feat, counts, w1, b1, w2, b2, *, tile_m=None):
    """feat: [M, K, D] (bf16 preferred), counts: [M] int32 valid-neighbor prefix
    lengths. Weights in x @ W convention: w1 [D, H], b1 [1, H], w2 [H, C],
    b2 [1, C]. Returns [M, C] f32."""
    M, K, D = feat.shape
    H = w1.shape[1]
    C_out = w2.shape[1]
    assert K & (K - 1) == 0, "K must be a power of two"

    if tile_m is None:
        # Cap at M//2 (rounded down to 128) so the parallel grid has >= 2
        # steps whenever M allows it -> both v7x TensorCores get work.
        # Sweep 256/512 (raise vmem_limit_bytes to 64 MiB) on v6e/v5e.
        tile_m = max(128, min(256, (M // 2) // 128 * 128))
    M_pad = pl.cdiv(M, tile_m) * tile_m
    if M_pad != M:
        feat = jnp.pad(feat, ((0, M_pad - M), (0, 0), (0, 0)))
        counts = jnp.pad(counts, (0, M_pad - M))          # pad rows: count 0 -> output 0
    T = M_pad // tile_m

    # Layout plumbing (XLA side): per-tile slabs with (k, m) on the lane axis
    # (m fastest) and D on the sublane axis -> contiguous DMA, no lane padding.
    # Done entirely in bf16 so the transpose round-trip is half the f32 cost.
    feat_b = (feat.astype(jnp.bfloat16)
                  .reshape(T, tile_m, K, D)
                  .transpose(0, 3, 2, 1)
                  .reshape(T, D, K * tile_m))
    cnt_b = counts.astype(jnp.int32).reshape(1, M_pad)

    w1t = w1.T.astype(jnp.bfloat16)                   # [H, D]
    w2t = w2.T.astype(jnp.bfloat16)                   # [C, H]
    b1t = b1.reshape(H, 1).astype(jnp.float32)        # [H, 1]
    b2t = b2.reshape(C_out, 1).astype(jnp.float32)    # [C, 1]

    out_t = pl.pallas_call(
        _pointconv_kernel,
        out_shape=jax.ShapeDtypeStruct((C_out, M_pad), jnp.float32),
        grid_spec=pltpu.PrefetchScalarGridSpec(
            num_scalar_prefetch=0,
            grid=(T,),
            in_specs=[
                # feat slab: add pipeline_mode=pl.Buffered(3) here on v5e if
                # the profile shows exposed DMA (HBM-bound generation).
                pl.BlockSpec((1, D, K * tile_m), lambda i: (i, 0, 0)),
                pl.BlockSpec((1, tile_m), lambda i: (0, i)),
                pl.BlockSpec((H, D), lambda i: (0, 0)),
                pl.BlockSpec((H, 1), lambda i: (0, 0)),
                pl.BlockSpec((C_out, H), lambda i: (0, 0)),
                pl.BlockSpec((C_out, 1), lambda i: (0, 0)),
            ],
            out_specs=pl.BlockSpec((C_out, tile_m), lambda i: (0, i)),
        ),
        compiler_params=pltpu.CompilerParams(
            dimension_semantics=("parallel",),
            # ~3-4 MB live at tile_m=256 (bf16 feat + f32 h/y): safe on all
            # generations.  If sweeping tile_m=512+ raise this (<=48 MiB on
            # v7x's 64 MiB/TC; up to 64 MiB on v6e/v5e's 128 MiB).
            vmem_limit_bytes=32 * 1024 * 1024,
        ),
    )(feat_b, cnt_b, w1t, b1t, w2t, b2t)

    # TODO(synk): if the consumer accepts [C, M] (lane-dense), drop this .T.
    return out_t[:, :M].T                              # [M, C_out]


# ----------------------------------------------------------------------------
# Glue: farthest point sampling + radius neighborhood construction (plain JAX)
# ----------------------------------------------------------------------------
def _fps_single(pos_b, k):
    """Farthest point sampling on one batch element. pos_b: [Nb, 3] -> [k] ids."""
    n = pos_b.shape[0]
    # TODO(synk): torch_geometric fps uses a random start point; we deterministically start at index 0.
    idxs = jnp.zeros((k,), jnp.int32)
    dists = jnp.full((n,), jnp.inf, jnp.float32)

    def body(i, carry):
        dists, idxs = carry
        cur = pos_b[idxs[i]]
        d = jnp.sum((pos_b - cur[None, :]) ** 2, axis=-1)
        dists = jnp.minimum(dists, d)
        nxt = jnp.argmax(dists).astype(jnp.int32)
        idxs = idxs.at[i + 1].set(nxt)
        return dists, idxs

    _, idxs = jax.lax.fori_loop(0, k - 1, body, (dists, idxs))
    return idxs


def _build_neighborhood(x, pos, batch, *, ratio, r, n_per_batch):
    """fps + radius graph (capped at MAX_NEIGHBORS nearest) + edge-feature gather.
    Returns (feat [M,K,C_in+3] bf16, counts [M] int32, pos_q [M,3], batch_q [M]).
    Valid neighbors are a prefix in k (top_k returns them nearest-first)."""
    N, _ = x.shape
    B = N // n_per_batch
    k_per = int(math.ceil(ratio * n_per_batch))

    # --- fps (per batch element, equal-sized batches) ---
    pos_bt = pos.reshape(B, n_per_batch, 3)
    idx_per = jax.vmap(lambda p: _fps_single(p, k_per))(pos_bt)             # [B, k_per]
    idx = (idx_per + jnp.arange(B, dtype=jnp.int32)[:, None] * n_per_batch).reshape(-1)

    pos_q = pos[idx]                                                        # [M, 3]
    batch_q = batch[idx]                                                    # [M]
    # x_dst = x[idx] is unused by PointNetConv when add_self_loops=False.

    # --- radius neighbors, capped at MAX_NEIGHBORS (nearest-first via top_k) ---
    # TODO(synk): for large N replace this dense [M, N] distance matrix with a
    # scalar-prefetch Pallas gather over per-batch buckets.
    d2 = jnp.sum((pos_q[:, None, :] - pos[None, :, :]) ** 2, axis=-1)       # [M, N]
    within = (d2 <= r * r) & (batch_q[:, None] == batch[None, :])
    d2m = jnp.where(within, d2, jnp.inf)
    k_sel = min(MAX_NEIGHBORS, N)
    neg_d, nbr_idx = jax.lax.top_k(-d2m, k_sel)                             # sorted: valid first
    nbr_valid = jnp.isfinite(neg_d)                                         # in radius & same batch
    nbr_idx = jnp.where(nbr_valid, nbr_idx, 0).astype(jnp.int32)
    if k_sel < MAX_NEIGHBORS:
        padw = MAX_NEIGHBORS - k_sel
        nbr_idx = jnp.concatenate(
            [nbr_idx, jnp.zeros((nbr_idx.shape[0], padw), jnp.int32)], axis=1)
        nbr_valid = jnp.concatenate(
            [nbr_valid, jnp.zeros((nbr_valid.shape[0], padw), bool)], axis=1)
    counts = jnp.sum(nbr_valid, axis=1).astype(jnp.int32)                   # [M] prefix lengths

    # --- edge features: [x_j, pos_j - pos_i], gathered/stored in bf16 ---
    # (rel is computed in f32 first to avoid bf16 cancellation on nearby points)
    x_j = x.astype(jnp.bfloat16)[nbr_idx]                                   # [M, K, C_in] bf16
    rel = (pos[nbr_idx] - pos_q[:, None, :]).astype(jnp.bfloat16)           # [M, K, 3] bf16
    feat = jnp.concatenate([x_j, rel], axis=-1)                             # [M, K, C_in+3] bf16
    return feat, counts, pos_q, batch_q


def set_abstraction(x, pos, batch, params, *, ratio, r, n_per_batch):
    feat, counts, pos_q, batch_q = _build_neighborhood(
        x, pos, batch, ratio=ratio, r=r, n_per_batch=n_per_batch
    )
    w1, b1, w2, b2 = params
    out = pointconv_pallas(feat, counts, w1, b1, w2, b2)
    return out, pos_q, batch_q


# ----------------------------------------------------------------------------
# Pure-JAX reference for the Pallas hot path (mirrors the bf16 operand casts)
# ----------------------------------------------------------------------------
def _reference_pointconv(feat_bf16, counts, w1, b1, w2, b2):
    hp = jax.lax.Precision.HIGHEST
    f = feat_bf16.astype(jnp.float32)
    w1b = w1.astype(jnp.bfloat16).astype(jnp.float32)
    w2b = w2.astype(jnp.bfloat16).astype(jnp.float32)
    h = jnp.maximum(jnp.einsum("mkd,dh->mkh", f, w1b, precision=hp) + b1[0], 0.0)
    h = h.astype(jnp.bfloat16).astype(jnp.float32)
    y = jnp.einsum("mkh,hc->mkc", h, w2b, precision=hp) + b2[0]
    K = feat_bf16.shape[1]
    mask = jnp.arange(K, dtype=jnp.int32)[None, :] < counts[:, None]
    y = jnp.where(mask[..., None], y, -jnp.inf)
    out = jnp.max(y, axis=1)
    return jnp.where(counts[:, None] > 0, out, 0.0)


if __name__ == "__main__":
    B, n_per, C_in = 2, 16, 16
    N = B * n_per
    ratio, r = 0.5, 0.5
    H, C_out = 32, 32
    D_in = C_in + 3

    key = jax.random.PRNGKey(0)
    kx, kp, k1, k2, k3, k4 = jax.random.split(key, 6)
    x = jax.random.normal(kx, (N, C_in), jnp.float32)
    pos = jax.random.uniform(kp, (N, 3), jnp.float32)
    batch = jnp.repeat(jnp.arange(B, dtype=jnp.int32), n_per)

    # deterministic parameter init for the `nn` MLP: Linear(D_in,H) - ReLU - Linear(H,C_out)
    w1 = jax.random.normal(k1, (D_in, H), jnp.float32) * 0.1
    b1 = jax.random.normal(k2, (1, H), jnp.float32) * 0.1
    w2 = jax.random.normal(k3, (H, C_out), jnp.float32) * 0.1
    b2 = jax.random.normal(k4, (1, C_out), jnp.float32) * 0.1
    params = (w1, b1, w2, b2)

    out, pos_s, batch_s = set_abstraction(
        x, pos, batch, params, ratio=ratio, r=r, n_per_batch=n_per
    )
    jax.block_until_ready((out, pos_s, batch_s))

    # verify the Pallas hot path against a pure-JAX reference (bf16-matched)
    feat, counts, _, _ = _build_neighborhood(x, pos, batch, ratio=ratio, r=r, n_per_batch=n_per)
    ref = _reference_pointconv(feat, counts, *params)
    M_expect = B * int(math.ceil(ratio * n_per))
    assert out.shape == (M_expect, C_out)
    assert pos_s.shape == (M_expect, 3) and batch_s.shape == (M_expect,)
    assert jnp.allclose(out, ref, atol=5e-3, rtol=5e-3), "Pallas output mismatch"

    print("KERNEL_OK")
</pallas_src>

<mosaic_0001>
module attributes {stable_mosaic.version = 11 : i64} {
  func.func @_pointconv_kernel(%arg0: i32, %arg1: memref<1x19x8192xbf16, #tpu.memory_space<vmem>>, %arg2: memref<1x128xi32, #tpu.memory_space<vmem>>, %arg3: memref<32x19xbf16, #tpu.memory_space<vmem>>, %arg4: memref<32x1xf32, #tpu.memory_space<vmem>>, %arg5: memref<32x32xbf16, #tpu.memory_space<vmem>>, %arg6: memref<32x1xf32, #tpu.memory_space<vmem>>, %arg7: memref<32x128xf32, #tpu.memory_space<vmem>>) attributes {dimension_semantics = [#tpu.dimension_semantics<parallel>], iteration_bounds = array<i64: 1>, scalar_prefetch = 0 : i64, scratch_operands = 0 : i64, tpu.core_type = #tpu.core_type<tc>, window_params = [{transform_indices = @transform_0, window_bounds = array<i64: 1, 19, 8192>}, {transform_indices = @transform_1, window_bounds = array<i64: 1, 128>}, {pipeline_mode = #tpu.pipeline_mode<synchronous>, transform_indices = @transform_2, window_bounds = array<i64: 32, 19>}, {pipeline_mode = #tpu.pipeline_mode<synchronous>, transform_indices = @transform_3, window_bounds = array<i64: 32, 1>}, {pipeline_mode = #tpu.pipeline_mode<synchronous>, transform_indices = @transform_4, window_bounds = array<i64: 32, 32>}, {pipeline_mode = #tpu.pipeline_mode<synchronous>, transform_indices = @transform_5, window_bounds = array<i64: 32, 1>}, {transform_indices = @transform_6, window_bounds = array<i64: 32, 128>}]} {
    %c0 = arith.constant 0 : index
    %c0_0 = arith.constant 0 : index
    %c0_1 = arith.constant 0 : index
    %0 = vector.load %arg1[%c0, %c0_0, %c0_1] : memref<1x19x8192xbf16, #tpu.memory_space<vmem>>, vector<1x19x8192xbf16>
    %1 = vector.shape_cast %0 : vector<1x19x8192xbf16> to vector<19x8192xbf16>
    %c0_2 = arith.constant 0 : index
    %c0_3 = arith.constant 0 : index
    %2 = vector.load %arg3[%c0_2, %c0_3] : memref<32x19xbf16, #tpu.memory_space<vmem>>, vector<32x19xbf16>
    %cst = arith.constant dense<0.000000e+00> : vector<32x8192xf32>
    %3 = tpu.matmul %2, %1, %cst {dimension_numbers = #tpu.dot_dimension_numbers<[1], [0], [0], [1], [0, 0, 1, 1], [], []>} : vector<32x19xbf16>, vector<19x8192xbf16>, vector<32x8192xf32> -> vector<32x8192xf32>
    %c0_4 = arith.constant 0 : index
    %c0_5 = arith.constant 0 : index
    %4 = vector.load %arg4[%c0_4, %c0_5] : memref<32x1xf32, #tpu.memory_space<vmem>>, vector<32x1xf32>
    %5 = vector.broadcast %4 : vector<32x1xf32> to vector<32x8192xf32>
    %6 = arith.addf %3, %5 : vector<32x8192xf32>
    %cst_6 = arith.constant 0.000000e+00 : f32
    %7 = vector.broadcast %cst_6 : f32 to vector<32x8192xf32>
    %8 = arith.maximumf %6, %7 : vector<32x8192xf32>
    %c0_7 = arith.constant 0 : index
    %c0_8 = arith.constant 0 : index
    %9 = vector.load %arg5[%c0_7, %c0_8] : memref<32x32xbf16, #tpu.memory_space<vmem>>, vector<32x32xbf16>
    %10 = arith.truncf %8 : vector<32x8192xf32> to vector<32x8192xbf16>
    %cst_9 = arith.constant dense<0.000000e+00> : vector<32x8192xf32>
    %11 = tpu.matmul %9, %10, %cst_9 {dimension_numbers = #tpu.dot_dimension_numbers<[1], [0], [0], [1], [0, 0, 1, 1], [], []>} : vector<32x32xbf16>, vector<32x8192xbf16>, vector<32x8192xf32> -> vector<32x8192xf32>
    %c0_10 = arith.constant 0 : index
    %c0_11 = arith.constant 0 : index
    %12 = vector.load %arg2[%c0_10, %c0_11] : memref<1x128xi32, #tpu.memory_space<vmem>>, vector<1x128xi32>
    %c128_i32 = arith.constant 128 : i32
    %13 = vector.broadcast %c128_i32 : i32 to vector<1x128xi32>
    %14 = arith.muli %12, %13 : vector<1x128xi32>
    %15 = tpu.concatenate %14, %14 in 1 : vector<1x128xi32>, vector<1x128xi32> -> vector<1x256xi32>
    %16 = tpu.concatenate %15, %15 in 1 : vector<1x256xi32>, vector<1x256xi32> -> vector<1x512xi32>
    %17 = tpu.concatenate %16, %16 in 1 : vector<1x512xi32>, vector<1x512xi32> -> vector<1x1024xi32>
    %18 = tpu.concatenate %17, %17 in 1 : vector<1x1024xi32>, vector<1x1024xi32> -> vector<1x2048xi32>
    %19 = tpu.concatenate %18, %18 in 1 : vector<1x2048xi32>, vector<1x2048xi32> -> vector<1x4096xi32>
    %20 = tpu.concatenate %19, %19 in 1 : vector<1x4096xi32>, vector<1x4096xi32> -> vector<1x8192xi32>
    %21 = tpu.iota {dimensions = array<i32: 1>} : vector<1x8192xi32>
    %22 = arith.cmpi slt, %21, %20 : vector<1x8192xi32>
    %cst_12 = arith.constant 0xFF800000 : f32
    %23 = vector.shape_cast %22 : vector<1x8192xi1> to vector<1x8192xi1>
    %24 = vector.broadcast %23 : vector<1x8192xi1> to vector<32x8192xi1>
    %25 = vector.broadcast %cst_12 : f32 to vector<32x8192xf32>
    %26 = arith.select %24, %11, %25 : vector<32x8192xi1>, vector<32x8192xf32>
    %27 = vector.extract_strided_slice %26 {offsets = [0, 0], sizes = [32, 4096], strides = [1, 1]} : vector<32x8192xf32> to vector<32x4096xf32>
    %28 = vector.extract_strided_slice %26 {offsets = [0, 4096], sizes = [32, 4096], strides = [1, 1]} : vector<32x8192xf32> to vector<32x4096xf32>
    %29 = arith.maximumf %27, %28 : vector<32x4096xf32>
    %30 = vector.extract_strided_slice %29 {offsets = [0, 0], sizes = [32, 2048], strides = [1, 1]} : vector<32x4096xf32> to vector<32x2048xf32>
    %31 = vector.extract_strided_slice %29 {offsets = [0, 2048], sizes = [32, 2048], strides = [1, 1]} : vector<32x4096xf32> to vector<32x2048xf32>
    %32 = arith.maximumf %30, %31 : vector<32x2048xf32>
    %33 = vector.extract_strided_slice %32 {offsets = [0, 0], sizes = [32, 1024], strides = [1, 1]} : vector<32x2048xf32> to vector<32x1024xf32>
    %34 = vector.extract_strided_slice %32 {offsets = [0, 1024], sizes = [32, 1024], strides = [1, 1]} : vector<32x2048xf32> to vector<32x1024xf32>
    %35 = arith.maximumf %33, %34 : vector<32x1024xf32>
    %36 = vector.extract_strided_slice %35 {offsets = [0, 0], sizes = [32, 512], strides = [1, 1]} : vector<32x1024xf32> to vector<32x512xf32>
    %37 = vector.extract_strided_slice %35 {offsets = [0, 512], sizes = [32, 512], strides = [1, 1]} : vector<32x1024xf32> to vector<32x512xf32>
    %38 = arith.maximumf %36, %37 : vector<32x512xf32>
    %39 = vector.extract_strided_slice %38 {offsets = [0, 0], sizes = [32, 256], strides = [1, 1]} : vector<32x512xf32> to vector<32x256xf32>
    %40 = vector.extract_strided_slice %38 {offsets = [0, 256], sizes = [32, 256], strides = [1, 1]} : vector<32x512xf32> to vector<32x256xf32>
    %41 = arith.maximumf %39, %40 : vector<32x256xf32>
    %42 = vector.extract_strided_slice %41 {offsets = [0, 0], sizes = [32, 128], strides = [1, 1]} : vector<32x256xf32> to vector<32x128xf32>
    %43 = vector.extract_strided_slice %41 {offsets = [0, 128], sizes = [32, 128], strides = [1, 1]} : vector<32x256xf32> to vector<32x128xf32>
    %44 = arith.maximumf %42, %43 : vector<32x128xf32>
    %c0_13 = arith.constant 0 : index
    %c0_14 = arith.constant 0 : index
    %45 = vector.load %arg6[%c0_13, %c0_14] : memref<32x1xf32, #tpu.memory_space<vmem>>, vector<32x1xf32>
    %46 = vector.broadcast %45 : vector<32x1xf32> to vector<32x128xf32>
    %47 = arith.addf %44, %46 : vector<32x128xf32>
    %c0_i32 = arith.constant 0 : i32
    %48 = vector.broadcast %c0_i32 : i32 to vector<1x128xi32>
    %49 = arith.cmpi sgt, %12, %48 : vector<1x128xi32>
    %cst_15 = arith.constant 0.000000e+00 : f32
    %50 = vector.shape_cast %49 : vector<1x128xi1> to vector<1x128xi1>
    %51 = vector.broadcast %50 : vector<1x128xi1> to vector<32x128xi1>
    %52 = vector.broadcast %cst_15 : f32 to vector<32x128xf32>
    %53 = arith.select %51, %47, %52 : vector<32x128xi1>, vector<32x128xf32>
    %c0_16 = arith.constant 0 : index
    %c0_17 = arith.constant 0 : index
    %54 = vector.load %arg7[%c0_16, %c0_17] : memref<32x128xf32, #tpu.memory_space<vmem>>, vector<32x128xf32>
    tpu.vector_store %arg7[%c0_16, %c0_17], %53 {strides = array<i32>} : memref<32x128xf32, #tpu.memory_space<vmem>>, vector<32x128xf32>,
    return
  }
  func.func @transform_0(%arg0: i32) -> (i32, i32, i32) {
    %c0_i32 = arith.constant 0 : i32
    %c0_i32_0 = arith.constant 0 : i32
    %c0_i32_1 = arith.constant 0 : i32
    return %arg0, %c0_i32, %c0_i32_0 : i32, i32, i32
  }
  func.func @transform_1(%arg0: i32) -> (i32, i32) {
    %c0_i32 = arith.constant 0 : i32
    %c0_i32_0 = arith.constant 0 : i32
    return %c0_i32, %arg0 : i32, i32
  }
  func.func @transform_2(%arg0: i32) -> (i32, i32) {
    %c0_i32 = arith.constant 0 : i32
    %c0_i32_0 = arith.constant 0 : i32
    %c0_i32_1 = arith.constant 0 : i32
    return %c0_i32, %c0_i32_0 : i32, i32
  }
  func.func @transform_3(%arg0: i32) -> (i32, i32) {
    %c0_i32 = arith.constant 0 : i32
    %c0_i32_0 = arith.constant 0 : i32
    %c0_i32_1 = arith.constant 0 : i32
    return %c0_i32, %c0_i32_0 : i32, i32
  }
  func.func @transform_4(%arg0: i32) -> (i32, i32) {
    %c0_i32 = arith.constant 0 : i32
    %c0_i32_0 = arith.constant 0 : i32
    %c0_i32_1 = arith.constant 0 : i32
    return %c0_i32, %c0_i32_0 : i32, i32
  }
  func.func @transform_5(%arg0: i32) -> (i32, i32) {
    %c0_i32 = arith.constant 0 : i32
    %c0_i32_0 = arith.constant 0 : i32
    %c0_i32_1 = arith.constant 0 : i32
    return %c0_i32, %c0_i32_0 : i32, i32
  }
  func.func @transform_6(%arg0: i32) -> (i32, i32) {
    %c0_i32 = arith.constant 0 : i32
    %c0_i32_0 = arith.constant 0 : i32
    return %c0_i32, %arg0 : i32, i32
  }
}

</mosaic_0001>

<llo_original>
// kernel: tpu_custom_call.1
$region0: #{tpu_custom_call.1}
  #allocation0 [shape = 'u32[]', space=smem, size = 0x4, offset = 0x4, fixed_abs, tag = 'smem constant byte address 0x4 - core index']
  #allocation1 [shape = 'u32[72,128]{1,0:T(1,128)}', space=vmem, size = 0x9000, scoped, tag = 'internal scratch']
  %s0 = inlined_call_operand.hbm [shape: bf16[1,19,8192], index: 0, kind: input, shape index: {}]
  %s1 = inlined_call_operand.vmem [shape: s32[1,128], index: 1, kind: input, shape index: {}]
  %s2 = inlined_call_operand.vmem [shape: bf16[32,19], index: 2, kind: input, shape index: {}]
  %s3 = inlined_call_operand.vmem [shape: f32[32,1], index: 3, kind: input, shape index: {}]
  %s4 = inlined_call_operand.vmem [shape: bf16[32,32], index: 4, kind: input, shape index: {}]
  %s5 = inlined_call_operand.vmem [shape: f32[32,1], index: 5, kind: input, shape index: {}]
  %s6 = inlined_call_operand.hbm [shape: f32[32,128], index: 6, kind: output, shape index: {}]
  %s7 = sld [smem:[#allocation0]]
  $region38: #{tpu_custom_call.1} parent=0
    _
  %s9 = ssub.s32 1, %s7
  %s10 = scalar_select 0, %s9, %s7
  $region1: #{tpu_custom_call.1} parent=0
    #allocation2 [shape = 'u8[393216]{0}', space=vmem, size = 0x60000, scoped, tag = 'input window, operand 0, single buffered']
    #allocation3 [shape = 's32[1]{0}', space=sflag, size = 0x4, scoped, tag = 'scoped memory for tpu_custom_call.1']
    #allocation4 [shape = 's32[1]{0}', space=sflag, size = 0x4, scoped, tag = 'scoped memory for tpu_custom_call.1']
    #allocation5 [shape = 'u8[16384]{0}', space=vmem, size = 0x4000, scoped, tag = 'output window, operand 0, single buffered']
    %11 = vsyncpa [#allocation3], 0
    %12 = vsyncpa [#allocation4], 0
    // Predicated region
    $region2: #{tpu_custom_call.1} parent=1 // pred_check
      _
    $region3: #{tpu_custom_call.1} parent=1 // pred_check_branch
      %14 = sbr.rel (0) target = $region5
    $region4: #{tpu_custom_call.1} parent=1 // pred_region
      %16 = vsyncadd [#allocation3], 0
      %s17 = sshll.u32 %s0, 4
      %s18 = int_to_ptr.hbm [resolvable:$true] %s17
      %s19 = sshll.u32 [#allocation2], 4
      %s20 = int_to_ptr.vmem [resolvable:$true] %s19
      %25 = dma.hbm_to_vmem [thread:$0]  %s18, 12288, %s20, [#allocation3], 4096, 4096, 256
    $region5: #{tpu_custom_call.1} parent=1 // pred_fallthru
      _
    // Predicated region
    $region6: #{tpu_custom_call.1} parent=1 // pred_check
      _
    $region7: #{tpu_custom_call.1} parent=1 // pred_check_branch
      %27 = sbr.rel (0) target = $region9
    $region8: #{tpu_custom_call.1} parent=1 // pred_region
      _
    $region9: #{tpu_custom_call.1} parent=1 // pred_fallthru
      _
    // Predicated region
    $region10: #{tpu_custom_call.1} parent=1 // pred_check
      _
    $region11: #{tpu_custom_call.1} parent=1 // pred_check_branch
      %29 = sbr.rel (0) target = $region13
    $region12: #{tpu_custom_call.1} parent=1 // pred_region
      _
    $region13: #{tpu_custom_call.1} parent=1 // pred_fallthru
      _
    // Predicated region
    $region14: #{tpu_custom_call.1} parent=1 // pred_check
      _
    $region15: #{tpu_custom_call.1} parent=1 // pred_check_branch
      %31 = sbr.rel (0) target = $region17
    $region16: #{tpu_custom_call.1} parent=1 // pred_region
      _
    $region17: #{tpu_custom_call.1} parent=1 // pred_fallthru
      _
    // Predicated region
    $region18: #{tpu_custom_call.1} parent=1 // pred_check
      _
    $region19: #{tpu_custom_call.1} parent=1 // pred_check_branch
      %33 = sbr.rel (0) target = $region21
    $region20: #{tpu_custom_call.1} parent=1 // pred_region
      _
    $region21: #{tpu_custom_call.1} parent=1 // pred_fallthru
      _
    // Predicated region
    $region22: #{tpu_custom_call.1} parent=1 // pred_check
      _
    $region23: #{tpu_custom_call.1} parent=1 // pred_check_branch
      %35 = sbr.rel (0) target = $region25
    $region24: #{tpu_custom_call.1} parent=1 // pred_region
      _
    $region25: #{tpu_custom_call.1} parent=1 // pred_fallthru
      _
    // Predicated region
    $region26: #{tpu_custom_call.1} parent=1 // pred_check
      _
    $region27: #{tpu_custom_call.1} parent=1 // pred_check_branch
      %37 = sbr.rel (0) target = $region29
    $region28: #{tpu_custom_call.1} parent=1 // pred_region
      %39 = dma.done [#allocation3], 12288
    $region29: #{tpu_custom_call.1} parent=1 // pred_fallthru
      _
    %v41 = vld [vmem:[#allocation2] sm:$0xff]
    %v42 = vld [vmem:[#allocation2 + $0x8] sm:$0xff]
    %v43 = vld [vmem:[#allocation2 + $0x10] sm:$0xff]
    %v44 = vld [vmem:[#allocation2 + $0x18] sm:$0xff]
    %v45 = vld [vmem:[#allocation2 + $0x20] sm:$0xff]
    %v46 = vld [vmem:[#allocation2 + $0x28] sm:$0xff]
    %v47 = vld [vmem:[#allocation2 + $0x30] sm:$0xff]
    %v48 = vld [vmem:[#allocation2 + $0x38] sm:$0xff]
    %v49 = vld [vmem:[#allocation2 + $0x40] sm:$0xff]
    %v50 = vld [vmem:[#allocation2 + $0x48] sm:$0xff]
    %v51 = vld [vmem:[#allocation2 + $0x50] sm:$0xff]
    %v52 = vld [vmem:[#allocation2 + $0x58] sm:$0xff]
    %v53 = vld [vmem:[#allocation2 + $0x60] sm:$0xff]
    %v54 = vld [vmem:[#allocation2 + $0x68] sm:$0xff]
    %v55 = vld [vmem:[#allocation2 + $0x70] sm:$0xff]
    %v56 = vld [vmem:[#allocation2 + $0x78] sm:$0xff]
    %v57 = vld [vmem:[#allocation2 + $0x80] sm:$0xff]
    %v58 = vld [vmem:[#allocation2 + $0x88] sm:$0xff]
    %v59 = vld [vmem:[#allocation2 + $0x90] sm:$0xff]
    %v60 = vld [vmem:[#allocation2 + $0x98] sm:$0xff]
    %v61 = vld [vmem:[#allocation2 + $0xa0] sm:$0xff]
    %v62 = vld [vmem:[#allocation2 + $0xa8] sm:$0xff]
    %v63 = vld [vmem:[#allocation2 + $0xb0] sm:$0xff]
    %v64 = vld [vmem:[#allocation2 + $0xb8] sm:$0xff]
    %v65 = vld [vmem:[#allocation2 + $0xc0] sm:$0xff]
    %v66 = vld [vmem:[#allocation2 + $0xc8] sm:$0xff]
    %v67 = vld [vmem:[#allocation2 + $0xd0] sm:$0xff]
    %v68 = vld [vmem:[#allocation2 + $0xd8] sm:$0xff]
    %v69 = vld [vmem:[#allocation2 + $0xe0] sm:$0xff]
    %v70 = vld [vmem:[#allocation2 + $0xe8] sm:$0xff]
    %v71 = vld [vmem:[#allocation2 + $0xf0] sm:$0xff]
    %v72 = vld [vmem:[#allocation2 + $0xf8] sm:$0xff]
    %v73 = vld [vmem:[#allocation2 + $0x100] sm:$0xff]
    %v74 = vld [vmem:[#allocation2 + $0x108] sm:$0xff]
    %v75 = vld [vmem:[#allocation2 + $0x110] sm:$0xff]
    %v76 = vld [vmem:[#allocation2 + $0x118] sm:$0xff]
    %v77 = vld [vmem:[#allocation2 + $0x120] sm:$0xff]
    %v78 = vld [vmem:[#allocation2 + $0x128] sm:$0xff]
    %v79 = vld [vmem:[#allocation2 + $0x130] sm:$0xff]
    %v80 = vld [vmem:[#allocation2 + $0x138] sm:$0xff]
    %v81 = vld [vmem:[#allocation2 + $0x140] sm:$0xff]
    %v82 = vld [vmem:[#allocation2 + $0x148] sm:$0xff]
    %v83 = vld [vmem:[#allocation2 + $0x150] sm:$0xff]
    %v84 = vld [vmem:[#allocation2 + $0x158] sm:$0xff]
    %v85 = vld [vmem:[#allocation2 + $0x160] sm:$0xff]
    %v86 = vld [vmem:[#allocation2 + $0x168] sm:$0xff]
    %v87 = vld [vmem:[#allocation2 + $0x170] sm:$0xff]
    %v88 = vld [vmem:[#allocation2 + $0x178] sm:$0xff]
    %v89 = vld [vmem:[#allocation2 + $0x180] sm:$0xff]
    %v90 = vld [vmem:[#allocation2 + $0x188] sm:$0xff]
    %v91 = vld [vmem:[#allocation2 + $0x190] sm:$0xff]
    %v92 = vld [vmem:[#allocation2 + $0x198] sm:$0xff]
    %v93 = vld [vmem:[#allocation2 + $0x1a0] sm:$0xff]
    %v94 = vld [vmem:[#allocation2 + $0x1a8] sm:$0xff]
    %v95 = vld [vmem:[#allocation2 + $0x1b0] sm:$0xff]
    %v96 = vld [vmem:[#allocation2 + $0x1b8] sm:$0xff]
    %v97 = vld [vmem:[#allocation2 + $0x1c0] sm:$0xff]
    %v98 = vld [vmem:[#allocation2 + $0x1c8] sm:$0xff]
    %v99 = vld [vmem:[#allocation2 + $0x1d0] sm:$0xff]
    %v100 = vld [vmem:[#allocation2 + $0x1d8] sm:$0xff]
    %v101 = vld [vmem:[#allocation2 + $0x1e0] sm:$0xff]
    %v102 = vld [vmem:[#allocation2 + $0x1e8] sm:$0xff]
    %v103 = vld [vmem:[#allocation2 + $0x1f0] sm:$0xff]
    %v104 = vld [vmem:[#allocation2 + $0x1f8] sm:$0xff]
    %v105 = vld [vmem:[#allocation2 + $0x200] sm:$0x33]
    %v106 = vld [vmem:[#allocation2 + $0x208] sm:$0x33]
    %v107 = vld [vmem:[#allocation2 + $0x210] sm:$0x33]
    %v108 = vld [vmem:[#allocation2 + $0x218] sm:$0x33]
    %v109 = vld [vmem:[#allocation2 + $0x220] sm:$0x33]
    %v110 = vld [vmem:[#allocation2 + $0x228] sm:$0x33]
    %v111 = vld [vmem:[#allocation2 + $0x230] sm:$0x33]
    %v112 = vld [vmem:[#allocation2 + $0x238] sm:$0x33]
    %v113 = vld [vmem:[#allocation2 + $0x240] sm:$0x33]
    %v114 = vld [vmem:[#allocation2 + $0x248] sm:$0x33]
    %v115 = vld [vmem:[#allocation2 + $0x250] sm:$0x33]
    %v116 = vld [vmem:[#allocation2 + $0x258] sm:$0x33]
    %v117 = vld [vmem:[#allocation2 + $0x260] sm:$0x33]
    %v118 = vld [vmem:[#allocation2 + $0x268] sm:$0x33]
    %v119 = vld [vmem:[#allocation2 + $0x270] sm:$0x33]
    %v120 = vld [vmem:[#allocation2 + $0x278] sm:$0x33]
    %v121 = vld [vmem:[#allocation2 + $0x280] sm:$0x33]
    %v122 = vld [vmem:[#allocation2 + $0x288] sm:$0x33]
    %v123 = vld [vmem:[#allocation2 + $0x290] sm:$0x33]
    %v124 = vld [vmem:[#allocation2 + $0x298] sm:$0x33]
    %v125 = vld [vmem:[#allocation2 + $0x2a0] sm:$0x33]
    %v126 = vld [vmem:[#allocation2 + $0x2a8] sm:$0x33]
    %v127 = vld [vmem:[#allocation2 + $0x2b0] sm:$0x33]
    %v128 = vld [vmem:[#allocation2 + $0x2b8] sm:$0x33]
    %v129 = vld [vmem:[#allocation2 + $0x2c0] sm:$0x33]
    %v130 = vld [vmem:[#allocation2 + $0x2c8] sm:$0x33]
    %v131 = vld [vmem:[#allocation2 + $0x2d0] sm:$0x33]
    %v132 = vld [vmem:[#allocation2 + $0x2d8] sm:$0x33]
    %v133 = vld [vmem:[#allocation2 + $0x2e0] sm:$0x33]
    %v134 = vld [vmem:[#allocation2 + $0x2e8] sm:$0x33]
    %v135 = vld [vmem:[#allocation2 + $0x2f0] sm:$0x33]
    %v136 = vld [vmem:[#allocation2 + $0x2f8] sm:$0x33]
    %v137 = vld [vmem:[%s2] sm:$0xf]
    %v138 = vld [vmem:[%s2 + $0x4] sm:$0xf]
    %v139 = vld [vmem:[%s2 + $0x8] sm:$0xf]
    %v140 = vld [vmem:[%s2 + $0xc] sm:$0xf]
    %v141 = vld [vmem:[%s3] sm:$0xff]
    %v142 = vld [vmem:[%s3 + $0x8] sm:$0xff]
    %v143 = vld [vmem:[%s3 + $0x10] sm:$0xff]
    %v144 = vld [vmem:[%s3 + $0x18] sm:$0xff]
    %146 = vset.pattern.permute.xlu0 0
    %147 = vperm.xlu0 %146, %v141
    %v148 = vpop.permute.xlu0 %147
    %151 = vset.pattern.permute.xlu0 0
    %152 = vperm.xlu0 %151, %v142
    %v153 = vpop.permute.xlu0 %152
    %156 = vset.pattern.permute.xlu0 0
    %157 = vperm.xlu0 %156, %v143
    %v158 = vpop.permute.xlu0 %157
    %161 = vset.pattern.permute.xlu0 0
    %162 = vperm.xlu0 %161, %v144
    %v163 = vpop.permute.xlu0 %162
    %v169 = vunpack.c.l.b16 %v137
    %v170 = vunpack.c.l.b16 %v138
    %v171 = vunpack.c.l.b16 %v139
    %v172 = vunpack.c.l.b16 %v140
    %v173 = vpack.c.b16 %v170, %v169
    %v174 = vpack.c.b16 %v172, %v171
    %v271 = vunpack.c.l.b16 %v41
    %v272 = vunpack.c.h.b16 %v41
    %v273 = vunpack.c.l.b16 %v42
    %v274 = vunpack.c.h.b16 %v42
    %v275 = vunpack.c.l.b16 %v43
    %v276 = vunpack.c.h.b16 %v43
    %v277 = vunpack.c.l.b16 %v44
    %v278 = vunpack.c.h.b16 %v44
    %v279 = vunpack.c.l.b16 %v45
    %v280 = vunpack.c.h.b16 %v45
    %v281 = vunpack.c.l.b16 %v46
    %v282 = vunpack.c.h.b16 %v46
    %v283 = vunpack.c.l.b16 %v47
    %v284 = vunpack.c.h.b16 %v47
    %v285 = vunpack.c.l.b16 %v48
    %v286 = vunpack.c.h.b16 %v48
    %v287 = vunpack.c.l.b16 %v49
    %v288 = vunpack.c.h.b16 %v49
    %v289 = vunpack.c.l.b16 %v50
    %v290 = vunpack.c.h.b16 %v50
    %v291 = vunpack.c.l.b16 %v51
    %v292 = vunpack.c.h.b16 %v51
    %v293 = vunpack.c.l.b16 %v52
    %v294 = vunpack.c.h.b16 %v52
    %v295 = vunpack.c.l.b16 %v53
    %v296 = vunpack.c.h.b16 %v53
    %v297 = vunpack.c.l.b16 %v54
    %v298 = vunpack.c.h.b16 %v54
    %v299 = vunpack.c.l.b16 %v55
    %v300 = vunpack.c.h.b16 %v55
    %v301 = vunpack.c.l.b16 %v56
    %v302 = vunpack.c.h.b16 %v56
    %v303 = vunpack.c.l.b16 %v57
    %v304 = vunpack.c.h.b16 %v57
    %v305 = vunpack.c.l.b16 %v58
    %v306 = vunpack.c.h.b16 %v58
    %v307 = vunpack.c.l.b16 %v59
    %v308 = vunpack.c.h.b16 %v59
    %v309 = vunpack.c.l.b16 %v60
    %v310 = vunpack.c.h.b16 %v60
    %v311 = vunpack.c.l.b16 %v61
    %v312 = vunpack.c.h.b16 %v61
    %v313 = vunpack.c.l.b16 %v62
    %v314 = vunpack.c.h.b16 %v62
    %v315 = vunpack.c.l.b16 %v63
    %v316 = vunpack.c.h.b16 %v63
    %v317 = vunpack.c.l.b16 %v64
    %v318 = vunpack.c.h.b16 %v64
    %v319 = vunpack.c.l.b16 %v65
    %v320 = vunpack.c.h.b16 %v65
    %v321 = vunpack.c.l.b16 %v66
    %v322 = vunpack.c.h.b16 %v66
    %v323 = vunpack.c.l.b16 %v67
    %v324 = vunpack.c.h.b16 %v67
    %v325 = vunpack.c.l.b16 %v68
    %v326 = vunpack.c.h.b16 %v68
    %v327 = vunpack.c.l.b16 %v69
    %v328 = vunpack.c.h.b16 %v69
    %v329 = vunpack.c.l.b16 %v70
    %v330 = vunpack.c.h.b16 %v70
    %v331 = vunpack.c.l.b16 %v71
    %v332 = vunpack.c.h.b16 %v71
    %v333 = vunpack.c.l.b16 %v72
    %v334 = vunpack.c.h.b16 %v72
    %v335 = vunpack.c.l.b16 %v73
    %v336 = vunpack.c.h.b16 %v73
    %v337 = vunpack.c.l.b16 %v74
    %v338 = vunpack.c.h.b16 %v74
    %v339 = vunpack.c.l.b16 %v75
    %v340 = vunpack.c.h.b16 %v75
    %v341 = vunpack.c.l.b16 %v76
    %v342 = vunpack.c.h.b16 %v76
    %v343 = vunpack.c.l.b16 %v77
    %v344 = vunpack.c.h.b16 %v77
    %v345 = vunpack.c.l.b16 %v78
    %v346 = vunpack.c.h.b16 %v78
    %v347 = vunpack.c.l.b16 %v79
    %v348 = vunpack.c.h.b16 %v79
    %v349 = vunpack.c.l.b16 %v80
    %v350 = vunpack.c.h.b16 %v80
    %v351 = vunpack.c.l.b16 %v81
    %v352 = vunpack.c.h.b16 %v81
    %v353 = vunpack.c.l.b16 %v82
    %v354 = vunpack.c.h.b16 %v82
    %v355 = vunpack.c.l.b16 %v83
    %v356 = vunpack.c.h.b16 %v83
    %v357 = vunpack.c.l.b16 %v84
    %v358 = vunpack.c.h.b16 %v84
    %v359 = vunpack.c.l.b16 %v85
    %v360 = vunpack.c.h.b16 %v85
    %v361 = vunpack.c.l.b16 %v86
    %v362 = vunpack.c.h.b16 %v86
    %v363 = vunpack.c.l.b16 %v87
    %v364 = vunpack.c.h.b16 %v87
    %v365 = vunpack.c.l.b16 %v88
    %v366 = vunpack.c.h.b16 %v88
    %v367 = vunpack.c.l.b16 %v89
    %v368 = vunpack.c.h.b16 %v89
    %v369 = vunpack.c.l.b16 %v90
    %v370 = vunpack.c.h.b16 %v90
    %v371 = vunpack.c.l.b16 %v91
    %v372 = vunpack.c.h.b16 %v91
    %v373 = vunpack.c.l.b16 %v92
    %v374 = vunpack.c.h.b16 %v92
    %v375 = vunpack.c.l.b16 %v93
    %v376 = vunpack.c.h.b16 %v93
    %v377 = vunpack.c.l.b16 %v94
    %v378 = vunpack.c.h.b16 %v94
    %v379 = vunpack.c.l.b16 %v95
    %v380 = vunpack.c.h.b16 %v95
    %v381 = vunpack.c.l.b16 %v96
    %v382 = vunpack.c.h.b16 %v96
    %v383 = vunpack.c.l.b16 %v97
    %v384 = vunpack.c.h.b16 %v97
    %v385 = vunpack.c.l.b16 %v98
    %v386 = vunpack.c.h.b16 %v98
    %v387 = vunpack.c.l.b16 %v99
    %v388 = vunpack.c.h.b16 %v99
    %v389 = vunpack.c.l.b16 %v100
    %v390 = vunpack.c.h.b16 %v100
    %v391 = vunpack.c.l.b16 %v101
    %v392 = vunpack.c.h.b16 %v101
    %v393 = vunpack.c.l.b16 %v102
    %v394 = vunpack.c.h.b16 %v102
    %v395 = vunpack.c.l.b16 %v103
    %v396 = vunpack.c.h.b16 %v103
    %v397 = vunpack.c.l.b16 %v104
    %v398 = vunpack.c.h.b16 %v104
    %v399 = vunpack.c.l.b16 %v105
    %v400 = vunpack.c.h.b16 %v105
    %v401 = vunpack.c.l.b16 %v106
    %v402 = vunpack.c.h.b16 %v106
    %v403 = vunpack.c.l.b16 %v107
    %v404 = vunpack.c.h.b16 %v107
    %v405 = vunpack.c.l.b16 %v108
    %v406 = vunpack.c.h.b16 %v108
    %v407 = vunpack.c.l.b16 %v109
    %v408 = vunpack.c.h.b16 %v109
    %v409 = vunpack.c.l.b16 %v110
    %v410 = vunpack.c.h.b16 %v110
    %v411 = vunpack.c.l.b16 %v111
    %v412 = vunpack.c.h.b16 %v111
    %v413 = vunpack.c.l.b16 %v112
    %v414 = vunpack.c.h.b16 %v112
    %v415 = vunpack.c.l.b16 %v113
    %v416 = vunpack.c.h.b16 %v113
    %v417 = vunpack.c.l.b16 %v114
    %v418 = vunpack.c.h.b16 %v114
    %v419 = vunpack.c.l.b16 %v115
    %v420 = vunpack.c.h.b16 %v115
    %v421 = vunpack.c.l.b16 %v116
    %v422 = vunpack.c.h.b16 %v116
    %v423 = vunpack.c.l.b16 %v117
    %v424 = vunpack.c.h.b16 %v117
    %v425 = vunpack.c.l.b16 %v118
    %v426 = vunpack.c.h.b16 %v118
    %v427 = vunpack.c.l.b16 %v119
    %v428 = vunpack.c.h.b16 %v119
    %v429 = vunpack.c.l.b16 %v120
    %v430 = vunpack.c.h.b16 %v120
    %v431 = vunpack.c.l.b16 %v121
    %v432 = vunpack.c.h.b16 %v121
    %v433 = vunpack.c.l.b16 %v122
    %v434 = vunpack.c.h.b16 %v122
    %v435 = vunpack.c.l.b16 %v123
    %v436 = vunpack.c.h.b16 %v123
    %v437 = vunpack.c.l.b16 %v124
    %v438 = vunpack.c.h.b16 %v124
    %v439 = vunpack.c.l.b16 %v125
    %v440 = vunpack.c.h.b16 %v125
    %v441 = vunpack.c.l.b16 %v126
    %v442 = vunpack.c.h.b16 %v126
    %v443 = vunpack.c.l.b16 %v127
    %v444 = vunpack.c.h.b16 %v127
    %v445 = vunpack.c.l.b16 %v128
    %v446 = vunpack.c.h.b16 %v128
    %v447 = vunpack.c.l.b16 %v129
    %v448 = vunpack.c.h.b16 %v129
    %v449 = vunpack.c.l.b16 %v130
    %v450 = vunpack.c.h.b16 %v130
    %v451 = vunpack.c.l.b16 %v131
    %v452 = vunpack.c.h.b16 %v131
    %v453 = vunpack.c.l.b16 %v132
    %v454 = vunpack.c.h.b16 %v132
    %v455 = vunpack.c.l.b16 %v133
    %v456 = vunpack.c.h.b16 %v133
    %v457 = vunpack.c.l.b16 %v134
    %v458 = vunpack.c.h.b16 %v134
    %v459 = vunpack.c.l.b16 %v135
    %v460 = vunpack.c.h.b16 %v135
    %v461 = vunpack.c.l.b16 %v136
    %v462 = vunpack.c.h.b16 %v136
    %v463 = vpack.c.b16 %v335, %v271
    %v464 = vpack.c.b16 %v336, %v272
    %v465 = vpack.c.b16 %v337, %v273
    %v466 = vpack.c.b16 %v338, %v274
    %v467 = vpack.c.b16 %v339, %v275
    %v468 = vpack.c.b16 %v340, %v276
    %v469 = vpack.c.b16 %v341, %v277
    %v470 = vpack.c.b16 %v342, %v278
    %v471 = vpack.c.b16 %v343, %v279
    %v472 = vpack.c.b16 %v344, %v280
    %v473 = vpack.c.b16 %v345, %v281
    %v474 = vpack.c.b16 %v346, %v282
    %v475 = vpack.c.b16 %v347, %v283
    %v476 = vpack.c.b16 %v348, %v284
    %v477 = vpack.c.b16 %v349, %v285
    %v478 = vpack.c.b16 %v350, %v286
    %v479 = vpack.c.b16 %v351, %v287
    %v480 = vpack.c.b16 %v352, %v288
    %v481 = vpack.c.b16 %v353, %v289
    %v482 = vpack.c.b16 %v354, %v290
    %v483 = vpack.c.b16 %v355, %v291
    %v484 = vpack.c.b16 %v356, %v292
    %v485 = vpack.c.b16 %v357, %v293
    %v486 = vpack.c.b16 %v358, %v294
    %v487 = vpack.c.b16 %v359, %v295
    %v488 = vpack.c.b16 %v360, %v296
    %v489 = vpack.c.b16 %v361, %v297
    %v490 = vpack.c.b16 %v362, %v298
    %v491 = vpack.c.b16 %v363, %v299
    %v492 = vpack.c.b16 %v364, %v300
    %v493 = vpack.c.b16 %v365, %v301
    %v494 = vpack.c.b16 %v366, %v302
    %v495 = vpack.c.b16 %v367, %v303
    %v496 = vpack.c.b16 %v368, %v304
    %v497 = vpack.c.b16 %v369, %v305
    %v498 = vpack.c.b16 %v370, %v306
    %v499 = vpack.c.b16 %v371, %v307
    %v500 = vpack.c.b16 %v372, %v308
    %v501 = vpack.c.b16 %v373, %v309
    %v502 = vpack.c.b16 %v374, %v310
    %v503 = vpack.c.b16 %v375, %v311
    %v504 = vpack.c.b16 %v376, %v312
    %v505 = vpack.c.b16 %v377, %v313
    %v506 = vpack.c.b16 %v378, %v314
    %v507 = vpack.c.b16 %v379, %v315
    %v508 = vpack.c.b16 %v380, %v316
    %v509 = vpack.c.b16 %v381, %v317
    %v510 = vpack.c.b16 %v382, %v318
    %v511 = vpack.c.b16 %v383, %v319
    %v512 = vpack.c.b16 %v384, %v320
    %v513 = vpack.c.b16 %v385, %v321
    %v514 = vpack.c.b16 %v386, %v322
    %v515 = vpack.c.b16 %v387, %v323
    %v516 = vpack.c.b16 %v388, %v324
    %v517 = vpack.c.b16 %v389, %v325
    %v518 = vpack.c.b16 %v390, %v326
    %v519 = vpack.c.b16 %v391, %v327
    %v520 = vpack.c.b16 %v392, %v328
    %v521 = vpack.c.b16 %v393, %v329
    %v522 = vpack.c.b16 %v394, %v330
    %v523 = vpack.c.b16 %v395, %v331
    %v524 = vpack.c.b16 %v396, %v332
    %v525 = vpack.c.b16 %v397, %v333
    %v526 = vpack.c.b16 %v398, %v334
    %v527 = vpack.c.b16 %v399, %v399
    %v528 = vpack.c.b16 %v400, %v400
    %v529 = vpack.c.b16 %v401, %v401
    %v530 = vpack.c.b16 %v402, %v402
    %v531 = vpack.c.b16 %v403, %v403
    %v532 = vpack.c.b16 %v404, %v404
    %v533 = vpack.c.b16 %v405, %v405
    %v534 = vpack.c.b16 %v406, %v406
    %v535 = vpack.c.b16 %v407, %v407
    %v536 = vpack.c.b16 %v408, %v408
    %v537 = vpack.c.b16 %v409, %v409
    %v538 = vpack.c.b16 %v410, %v410
    %v539 = vpack.c.b16 %v411, %v411
    %v540 = vpack.c.b16 %v412, %v412
    %v541 = vpack.c.b16 %v413, %v413
    %v542 = vpack.c.b16 %v414, %v414
    %v543 = vpack.c.b16 %v415, %v415
    %v544 = vpack.c.b16 %v416, %v416
    %v545 = vpack.c.b16 %v417, %v417
    %v546 = vpack.c.b16 %v418, %v418
    %v547 = vpack.c.b16 %v419, %v419
    %v548 = vpack.c.b16 %v420, %v420
    %v549 = vpack.c.b16 %v421, %v421
    %v550 = vpack.c.b16 %v422, %v422
    %v551 = vpack.c.b16 %v423, %v423
    %v552 = vpack.c.b16 %v424, %v424
    %v553 = vpack.c.b16 %v425, %v425
    %v554 = vpack.c.b16 %v426, %v426
    %v555 = vpack.c.b16 %v427, %v427
    %v556 = vpack.c.b16 %v428, %v428
    %v557 = vpack.c.b16 %v429, %v429
    %v558 = vpack.c.b16 %v430, %v430
    %v559 = vpack.c.b16 %v431, %v431
    %v560 = vpack.c.b16 %v432, %v432
    %v561 = vpack.c.b16 %v433, %v433
    %v562 = vpack.c.b16 %v434, %v434
    %v563 = vpack.c.b16 %v435, %v435
    %v564 = vpack.c.b16 %v436, %v436
    %v565 = vpack.c.b16 %v437, %v437
    %v566 = vpack.c.b16 %v438, %v438
    %v567 = vpack.c.b16 %v439, %v439
    %v568 = vpack.c.b16 %v440, %v440
    %v569 = vpack.c.b16 %v441, %v441
    %v570 = vpack.c.b16 %v442, %v442
    %v571 = vpack.c.b16 %v443, %v443
    %v572 = vpack.c.b16 %v444, %v444
    %v573 = vpack.c.b16 %v445, %v445
    %v574 = vpack.c.b16 %v446, %v446
    %v575 = vpack.c.b16 %v447, %v447
    %v576 = vpack.c.b16 %v448, %v448
    %v577 = vpack.c.b16 %v449, %v449
    %v578 = vpack.c.b16 %v450, %v450
    %v579 = vpack.c.b16 %v451, %v451
    %v580 = vpack.c.b16 %v452, %v452
    %v581 = vpack.c.b16 %v453, %v453
    %v582 = vpack.c.b16 %v454, %v454
    %v583 = vpack.c.b16 %v455, %v455
    %v584 = vpack.c.b16 %v456, %v456
    %v585 = vpack.c.b16 %v457, %v457
    %v586 = vpack.c.b16 %v458, %v458
    %v587 = vpack.c.b16 %v459, %v459
    %v588 = vpack.c.b16 %v460, %v460
    %v589 = vpack.c.b16 %v461, %v461
    %v590 = vpack.c.b16 %v462, %v462
    %vm655 = vcmask 154624
    %v657 = vsel %vm655, %v173, 0
    %v660 = vsel %vm655, %v174, 0
    %vm662 = vcmask 1040384
    %vm663 = vcmask 1041408
    %v664 = vsel %vm662, 4294967295, 65535
    %v665 = vsel %vm663, %v664, 0
    %v667 = vand.u32 %v527, %v665
    %v670 = vand.u32 %v528, %v665
    %v673 = vand.u32 %v529, %v665
    %v676 = vand.u32 %v530, %v665
    %v679 = vand.u32 %v531, %v665
    %v682 = vand.u32 %v532, %v665
    %v685 = vand.u32 %v533, %v665
    %v688 = vand.u32 %v534, %v665
    %v691 = vand.u32 %v535, %v665
    %v694 = vand.u32 %v536, %v665
    %v697 = vand.u32 %v537, %v665
    %v700 = vand.u32 %v538, %v665
    %v703 = vand.u32 %v539, %v665
    %v706 = vand.u32 %v540, %v665
    %v709 = vand.u32 %v541, %v665
    %v712 = vand.u32 %v542, %v665
    %v715 = vand.u32 %v543, %v665
    %v718 = vand.u32 %v544, %v665
    %v721 = vand.u32 %v545, %v665
    %v724 = vand.u32 %v546, %v665
    %v727 = vand.u32 %v547, %v665
    %v730 = vand.u32 %v548, %v665
    %v733 = vand.u32 %v549, %v665
    %v736 = vand.u32 %v550, %v665
    %v739 = vand.u32 %v551, %v665
    %v742 = vand.u32 %v552, %v665
    %v745 = vand.u32 %v553, %v665
    %v748 = vand.u32 %v554, %v665
    %v751 = vand.u32 %v555, %v665
    %v754 = vand.u32 %v556, %v665
    %v757 = vand.u32 %v557, %v665
    %v760 = vand.u32 %v558, %v665
    %v763 = vand.u32 %v559, %v665
    %v766 = vand.u32 %v560, %v665
    %v769 = vand.u32 %v561, %v665
    %v772 = vand.u32 %v562, %v665
    %v775 = vand.u32 %v563, %v665
    %v778 = vand.u32 %v564, %v665
    %v781 = vand.u32 %v565, %v665
    %v784 = vand.u32 %v566, %v665
    %v787 = vand.u32 %v567, %v665
    %v790 = vand.u32 %v568, %v665
    %v793 = vand.u32 %v569, %v665
    %v796 = vand.u32 %v570, %v665
    %v799 = vand.u32 %v571, %v665
    %v802 = vand.u32 %v572, %v665
    %v805 = vand.u32 %v573, %v665
    %v808 = vand.u32 %v574, %v665
    %v811 = vand.u32 %v575, %v665
    %v814 = vand.u32 %v576, %v665
    %v817 = vand.u32 %v577, %v665
    %v820 = vand.u32 %v578, %v665
    %v823 = vand.u32 %v579, %v665
    %v826 = vand.u32 %v580, %v665
    %v829 = vand.u32 %v581, %v665
    %v832 = vand.u32 %v582, %v665
    %v835 = vand.u32 %v583, %v665
    %v838 = vand.u32 %v584, %v665
    %v841 = vand.u32 %v585, %v665
    %v844 = vand.u32 %v586, %v665
    %v847 = vand.u32 %v587, %v665
    %v850 = vand.u32 %v588, %v665
    %v853 = vand.u32 %v589, %v665
    %v856 = vand.u32 %v590, %v665
    %858 = vmatpush.bf16.msra.mxu0 0
    %859 = vmatpush.bf16.msra.mxu0 0
    %860 = vmatpush.bf16.msra.mxu0 0
    %861 = vmatpush.bf16.msra.mxu0 0
    %862 = vmatpush.bf16.msra.mxu0 0
    %863 = vmatpush.bf16.msra.mxu0 0
    %864 = vmatpush.bf16.msra.mxu0 %v667
    %865 = vmatpush.bf16.msra.mxu0 %v463
    %866 = vmatmul.bf16.gmra.mxu0 %v657
    %v867 = vpop.f32.mrf.mxu0
    %v868 = vadd.f32 %v148, %v867
    %v869 = vpop.f32.mrf.mxu0
    %v870 = vadd.f32 %v153, %v869
    %871 = vmatmul.bf16.gmra.mxu0 %v660
    %v872 = vpop.f32.mrf.mxu0
    %v873 = vadd.f32 %v158, %v872
    %v874 = vpop.f32.mrf.mxu0
    %v875 = vadd.f32 %v163, %v874
    %876 = vdwg.mxu0
    %877 = vmatpush.bf16.msra.mxu0 0
    %878 = vmatpush.bf16.msra.mxu0 0
    %879 = vmatpush.bf16.msra.mxu0 0
    %880 = vmatpush.bf16.msra.mxu0 0
    %881 = vmatpush.bf16.msra.mxu0 0
    %882 = vmatpush.bf16.msra.mxu0 0
    %883 = vmatpush.bf16.msra.mxu0 %v670
    %884 = vmatpush.bf16.msra.mxu0 %v464
    %885 = vmatmul.bf16.gmra.mxu0 %v657
    %v886 = vpop.f32.mrf.mxu0
    %v887 = vadd.f32 %v148, %v886
    %v888 = vpop.f32.mrf.mxu0
    %v889 = vadd.f32 %v153, %v888
    %890 = vmatmul.bf16.gmra.mxu0 %v660
    %v891 = vpop.f32.mrf.mxu0
    %v892 = vadd.f32 %v158, %v891
    %v893 = vpop.f32.mrf.mxu0
    %v894 = vadd.f32 %v163, %v893
    %895 = vdwg.mxu0
    %896 = vmatpush.bf16.msra.mxu0 0
    %897 = vmatpush.bf16.msra.mxu0 0
    %898 = vmatpush.bf16.msra.mxu0 0
    %899 = vmatpush.bf16.msra.mxu0 0
    %900 = vmatpush.bf16.msra.mxu0 0
    %901 = vmatpush.bf16.msra.mxu0 0
    %902 = vmatpush.bf16.msra.mxu0 %v673
    %903 = vmatpush.bf16.msra.mxu0 %v465
    %904 = vmatmul.bf16.gmra.mxu0 %v657
    %v905 = vpop.f32.mrf.mxu0
    %v906 = vadd.f32 %v148, %v905
    %v907 = vpop.f32.mrf.mxu0
    %v908 = vadd.f32 %v153, %v907
    %909 = vmatmul.bf16.gmra.mxu0 %v660
    %v910 = vpop.f32.mrf.mxu0
    %v911 = vadd.f32 %v158, %v910
    %v912 = vpop.f32.mrf.mxu0
    %v913 = vadd.f32 %v163, %v912
    %914 = vdwg.mxu0
    %915 = vmatpush.bf16.msra.mxu0 0
    %916 = vmatpush.bf16.msra.mxu0 0
    %917 = vmatpush.bf16.msra.mxu0 0
    %918 = vmatpush.bf16.msra.mxu0 0
    %919 = vmatpush.bf16.msra.mxu0 0
    %920 = vmatpush.bf16.msra.mxu0 0
    %921 = vmatpush.bf16.msra.mxu0 %v676
    %922 = vmatpush.bf16.msra.mxu0 %v466
    %923 = vmatmul.bf16.gmra.mxu0 %v657
    %v924 = vpop.f32.mrf.mxu0
    %v925 = vadd.f32 %v148, %v924
    %v926 = vpop.f32.mrf.mxu0
    %v927 = vadd.f32 %v153, %v926
    %928 = vmatmul.bf16.gmra.mxu0 %v660
    %v929 = vpop.f32.mrf.mxu0
    %v930 = vadd.f32 %v158, %v929
    %v931 = vpop.f32.mrf.mxu0
    %v932 = vadd.f32 %v163, %v931
    %933 = vdwg.mxu0
    %934 = vmatpush.bf16.msra.mxu0 0
    %935 = vmatpush.bf16.msra.mxu0 0
    %936 = vmatpush.bf16.msra.mxu0 0
    %937 = vmatpush.bf16.msra.mxu0 0
    %938 = vmatpush.bf16.msra.mxu0 0
    %939 = vmatpush.bf16.msra.mxu0 0
    %940 = vmatpush.bf16.msra.mxu0 %v679
    %941 = vmatpush.bf16.msra.mxu0 %v467
    %942 = vmatmul.bf16.gmra.mxu0 %v657
    %v943 = vpop.f32.mrf.mxu0
    %v944 = vadd.f32 %v148, %v943
    %v945 = vpop.f32.mrf.mxu0
    %v946 = vadd.f32 %v153, %v945
    %947 = vmatmul.bf16.gmra.mxu0 %v660
    %v948 = vpop.f32.mrf.mxu0
    %v949 = vadd.f32 %v158, %v948
    %v950 = vpop.f32.mrf.mxu0
    %v951 = vadd.f32 %v163, %v950
    %952 = vdwg.mxu0
    %953 = vmatpush.bf16.msra.mxu0 0
    %954 = vmatpush.bf16.msra.mxu0 0
    %955 = vmatpush.bf16.msra.mxu0 0
    %956 = vmatpush.bf16.msra.mxu0 0
    %957 = vmatpush.bf16.msra.mxu0 0
    %958 = vmatpush.bf16.msra.mxu0 0
    %959 = vmatpush.bf16.msra.mxu0 %v682
    %960 = vmatpush.bf16.msra.mxu0 %v468
    %961 = vmatmul.bf16.gmra.mxu0 %v657
    %v962 = vpop.f32.mrf.mxu0
    %v963 = vadd.f32 %v148, %v962
    %v964 = vpop.f32.mrf.mxu0
    %v965 = vadd.f32 %v153, %v964
    %966 = vmatmul.bf16.gmra.mxu0 %v660
    %v967 = vpop.f32.mrf.mxu0
    %v968 = vadd.f32 %v158, %v967
    %v969 = vpop.f32.mrf.mxu0
    %v970 = vadd.f32 %v163, %v969
    %971 = vdwg.mxu0
    %972 = vmatpush.bf16.msra.mxu0 0
    %973 = vmatpush.bf16.msra.mxu0 0
    %974 = vmatpush.bf16.msra.mxu0 0
    %975 = vmatpush.bf16.msra.mxu0 0
    %976 = vmatpush.bf16.msra.mxu0 0
    %977 = vmatpush.bf16.msra.mxu0 0
    %978 = vmatpush.bf16.msra.mxu0 %v685
    %979 = vmatpush.bf16.msra.mxu0 %v469
    %980 = vmatmul.bf16.gmra.mxu0 %v657
    %v981 = vpop.f32.mrf.mxu0
    %v982 = vadd.f32 %v148, %v981
    %v983 = vpop.f32.mrf.mxu0
    %v984 = vadd.f32 %v153, %v983
    %985 = vmatmul.bf16.gmra.mxu0 %v660
    %v986 = vpop.f32.mrf.mxu0
    %v987 = vadd.f32 %v158, %v986
    %v988 = vpop.f32.mrf.mxu0
    %v989 = vadd.f32 %v163, %v988
    %990 = vdwg.mxu0
    %991 = vmatpush.bf16.msra.mxu0 0
    %992 = vmatpush.bf16.msra.mxu0 0
    %993 = vmatpush.bf16.msra.mxu0 0
    %994 = vmatpush.bf16.msra.mxu0 0
    %995 = vmatpush.bf16.msra.mxu0 0
    %996 = vmatpush.bf16.msra.mxu0 0
    %997 = vmatpush.bf16.msra.mxu0 %v688
    %998 = vmatpush.bf16.msra.mxu0 %v470
    %999 = vmatmul.bf16.gmra.mxu0 %v657
    %v1000 = vpop.f32.mrf.mxu0
    %v1001 = vadd.f32 %v148, %v1000
    %v1002 = vpop.f32.mrf.mxu0
    %v1003 = vadd.f32 %v153, %v1002
    %1004 = vmatmul.bf16.gmra.mxu0 %v660
    %v1005 = vpop.f32.mrf.mxu0
    %v1006 = vadd.f32 %v158, %v1005
    %v1007 = vpop.f32.mrf.mxu0
    %v1008 = vadd.f32 %v163, %v1007
    %1009 = vdwg.mxu0
    %1010 = vmatpush.bf16.msra.mxu0 0
    %1011 = vmatpush.bf16.msra.mxu0 0
    %1012 = vmatpush.bf16.msra.mxu0 0
    %1013 = vmatpush.bf16.msra.mxu0 0
    %1014 = vmatpush.bf16.msra.mxu0 0
    %1015 = vmatpush.bf16.msra.mxu0 0
    %1016 = vmatpush.bf16.msra.mxu0 %v691
    %1017 = vmatpush.bf16.msra.mxu0 %v471
    %1018 = vmatmul.bf16.gmra.mxu0 %v657
    %v1019 = vpop.f32.mrf.mxu0
    %v1020 = vadd.f32 %v148, %v1019
    %v1021 = vpop.f32.mrf.mxu0
    %v1022 = vadd.f32 %v153, %v1021
    %1023 = vmatmul.bf16.gmra.mxu0 %v660
    %v1024 = vpop.f32.mrf.mxu0
    %v1025 = vadd.f32 %v158, %v1024
    %v1026 = vpop.f32.mrf.mxu0
    %v1027 = vadd.f32 %v163, %v1026
    %1028 = vdwg.mxu0
    %1029 = vmatpush.bf16.msra.mxu0 0
    %1030 = vmatpush.bf16.msra.mxu0 0
    %1031 = vmatpush.bf16.msra.mxu0 0
    %1032 = vmatpush.bf16.msra.mxu0 0
    %1033 = vmatpush.bf16.msra.mxu0 0
    %1034 = vmatpush.bf16.msra.mxu0 0
    %1035 = vmatpush.bf16.msra.mxu0 %v694
    %1036 = vmatpush.bf16.msra.mxu0 %v472
    %1037 = vmatmul.bf16.gmra.mxu0 %v657
    %v1038 = vpop.f32.mrf.mxu0
    %v1039 = vadd.f32 %v148, %v1038
    %v1040 = vpop.f32.mrf.mxu0
    %v1041 = vadd.f32 %v153, %v1040
    %1042 = vmatmul.bf16.gmra.mxu0 %v660
    %v1043 = vpop.f32.mrf.mxu0
    %v1044 = vadd.f32 %v158, %v1043
    %v1045 = vpop.f32.mrf.mxu0
    %v1046 = vadd.f32 %v163, %v1045
    %1047 = vdwg.mxu0
    %1048 = vmatpush.bf16.msra.mxu0 0
    %1049 = vmatpush.bf16.msra.mxu0 0
    %1050 = vmatpush.bf16.msra.mxu0 0
    %1051 = vmatpush.bf16.msra.mxu0 0
    %1052 = vmatpush.bf16.msra.mxu0 0
    %1053 = vmatpush.bf16.msra.mxu0 0
    %1054 = vmatpush.bf16.msra.mxu0 %v697
    %1055 = vmatpush.bf16.msra.mxu0 %v473
    %1056 = vmatmul.bf16.gmra.mxu0 %v657
    %v1057 = vpop.f32.mrf.mxu0
    %v1058 = vadd.f32 %v148, %v1057
    %v1059 = vpop.f32.mrf.mxu0
    %v1060 = vadd.f32 %v153, %v1059
    %1061 = vmatmul.bf16.gmra.mxu0 %v660
    %v1062 = vpop.f32.mrf.mxu0
    %v1063 = vadd.f32 %v158, %v1062
    %v1064 = vpop.f32.mrf.mxu0
    %v1065 = vadd.f32 %v163, %v1064
    %1066 = vdwg.mxu0
    %1067 = vmatpush.bf16.msra.mxu0 0
    %1068 = vmatpush.bf16.msra.mxu0 0
    %1069 = vmatpush.bf16.msra.mxu0 0
    %1070 = vmatpush.bf16.msra.mxu0 0
    %1071 = vmatpush.bf16.msra.mxu0 0
    %1072 = vmatpush.bf16.msra.mxu0 0
    %1073 = vmatpush.bf16.msra.mxu0 %v700
    %1074 = vmatpush.bf16.msra.mxu0 %v474
    %1075 = vmatmul.bf16.gmra.mxu0 %v657
    %v1076 = vpop.f32.mrf.mxu0
    %v1077 = vadd.f32 %v148, %v1076
    %v1078 = vpop.f32.mrf.mxu0
    %v1079 = vadd.f32 %v153, %v1078
    %1080 = vmatmul.bf16.gmra.mxu0 %v660
    %v1081 = vpop.f32.mrf.mxu0
    %v1082 = vadd.f32 %v158, %v1081
    %v1083 = vpop.f32.mrf.mxu0
    %v1084 = vadd.f32 %v163, %v1083
    %1085 = vdwg.mxu0
    %1086 = vmatpush.bf16.msra.mxu0 0
    %1087 = vmatpush.bf16.msra.mxu0 0
    %1088 = vmatpush.bf16.msra.mxu0 0
    %1089 = vmatpush.bf16.msra.mxu0 0
    %1090 = vmatpush.bf16.msra.mxu0 0
    %1091 = vmatpush.bf16.msra.mxu0 0
    %1092 = vmatpush.bf16.msra.mxu0 %v703
    %1093 = vmatpush.bf16.msra.mxu0 %v475
    %1094 = vmatmul.bf16.gmra.mxu0 %v657
    %v1095 = vpop.f32.mrf.mxu0
    %v1096 = vadd.f32 %v148, %v1095
    %v1097 = vpop.f32.mrf.mxu0
    %v1098 = vadd.f32 %v153, %v1097
    %1099 = vmatmul.bf16.gmra.mxu0 %v660
    %v1100 = vpop.f32.mrf.mxu0
    %v1101 = vadd.f32 %v158, %v1100
    %v1102 = vpop.f32.mrf.mxu0
    %v1103 = vadd.f32 %v163, %v1102
    %1104 = vdwg.mxu0
    %1105 = vmatpush.bf16.msra.mxu0 0
    %1106 = vmatpush.bf16.msra.mxu0 0
    %1107 = vmatpush.bf16.msra.mxu0 0
    %1108 = vmatpush.bf16.msra.mxu0 0
    %1109 = vmatpush.bf16.msra.mxu0 0
    %1110 = vmatpush.bf16.msra.mxu0 0
    %1111 = vmatpush.bf16.msra.mxu0 %v706
    %1112 = vmatpush.bf16.msra.mxu0 %v476
    %1113 = vmatmul.bf16.gmra.mxu0 %v657
    %v1114 = vpop.f32.mrf.mxu0
    %v1115 = vadd.f32 %v148, %v1114
    %v1116 = vpop.f32.mrf.mxu0
    %v1117 = vadd.f32 %v153, %v1116
    %1118 = vmatmul.bf16.gmra.mxu0 %v660
    %v1119 = vpop.f32.mrf.mxu0
    %v1120 = vadd.f32 %v158, %v1119
    %v1121 = vpop.f32.mrf.mxu0
    %v1122 = vadd.f32 %v163, %v1121
    %1123 = vdwg.mxu0
    %1124 = vmatpush.bf16.msra.mxu0 0
    %1125 = vmatpush.bf16.msra.mxu0 0
    %1126 = vmatpush.bf16.msra.mxu0 0
    %1127 = vmatpush.bf16.msra.mxu0 0
    %1128 = vmatpush.bf16.msra.mxu0 0
    %1129 = vmatpush.bf16.msra.mxu0 0
    %1130 = vmatpush.bf16.msra.mxu0 %v709
    %1131 = vmatpush.bf16.msra.mxu0 %v477
    %1132 = vmatmul.bf16.gmra.mxu0 %v657
    %v1133 = vpop.f32.mrf.mxu0
    %v1134 = vadd.f32 %v148, %v1133
    %v1135 = vpop.f32.mrf.mxu0
    %v1136 = vadd.f32 %v153, %v1135
    %1137 = vmatmul.bf16.gmra.mxu0 %v660
    %v1138 = vpop.f32.mrf.mxu0
    %v1139 = vadd.f32 %v158, %v1138
    %v1140 = vpop.f32.mrf.mxu0
    %v1141 = vadd.f32 %v163, %v1140
    %1142 = vdwg.mxu0
    %1143 = vmatpush.bf16.msra.mxu0 0
    %1144 = vmatpush.bf16.msra.mxu0 0
    %1145 = vmatpush.bf16.msra.mxu0 0
    %1146 = vmatpush.bf16.msra.mxu0 0
    %1147 = vmatpush.bf16.msra.mxu0 0
    %1148 = vmatpush.bf16.msra.mxu0 0
    %1149 = vmatpush.bf16.msra.mxu0 %v712
    %1150 = vmatpush.bf16.msra.mxu0 %v478
    %1151 = vmatmul.bf16.gmra.mxu0 %v657
    %v1152 = vpop.f32.mrf.mxu0
    %v1153 = vadd.f32 %v148, %v1152
    %v1154 = vpop.f32.mrf.mxu0
    %v1155 = vadd.f32 %v153, %v1154
    %1156 = vmatmul.bf16.gmra.mxu0 %v660
    %v1157 = vpop.f32.mrf.mxu0
    %v1158 = vadd.f32 %v158, %v1157
    %v1159 = vpop.f32.mrf.mxu0
    %v1160 = vadd.f32 %v163, %v1159
    %1161 = vdwg.mxu0
    %1162 = vmatpush.bf16.msra.mxu0 0
    %1163 = vmatpush.bf16.msra.mxu0 0
    %1164 = vmatpush.bf16.msra.mxu0 0
    %1165 = vmatpush.bf16.msra.mxu0 0
    %1166 = vmatpush.bf16.msra.mxu0 0
    %1167 = vmatpush.bf16.msra.mxu0 0
    %1168 = vmatpush.bf16.msra.mxu0 %v715
    %1169 = vmatpush.bf16.msra.mxu0 %v479
    %1170 = vmatmul.bf16.gmra.mxu0 %v657
    %v1171 = vpop.f32.mrf.mxu0
    %v1172 = vadd.f32 %v148, %v1171
    %v1173 = vpop.f32.mrf.mxu0
    %v1174 = vadd.f32 %v153, %v1173
    %1175 = vmatmul.bf16.gmra.mxu0 %v660
    %v1176 = vpop.f32.mrf.mxu0
    %v1177 = vadd.f32 %v158, %v1176
    %v1178 = vpop.f32.mrf.mxu0
    %v1179 = vadd.f32 %v163, %v1178
    %1180 = vdwg.mxu0
    %1181 = vmatpush.bf16.msra.mxu0 0
    %1182 = vmatpush.bf16.msra.mxu0 0
    %1183 = vmatpush.bf16.msra.mxu0 0
    %1184 = vmatpush.bf16.msra.mxu0 0
    %1185 = vmatpush.bf16.msra.mxu0 0
    %1186 = vmatpush.bf16.msra.mxu0 0
    %1187 = vmatpush.bf16.msra.mxu0 %v718
    %1188 = vmatpush.bf16.msra.mxu0 %v480
    %1189 = vmatmul.bf16.gmra.mxu0 %v657
    %v1190 = vpop.f32.mrf.mxu0
    %v1191 = vadd.f32 %v148, %v1190
    %v1192 = vpop.f32.mrf.mxu0
    %v1193 = vadd.f32 %v153, %v1192
    %1194 = vmatmul.bf16.gmra.mxu0 %v660
    %v1195 = vpop.f32.mrf.mxu0
    %v1196 = vadd.f32 %v158, %v1195
    %v1197 = vpop.f32.mrf.mxu0
    %v1198 = vadd.f32 %v163, %v1197
    %1199 = vdwg.mxu0
    %1200 = vmatpush.bf16.msra.mxu0 0
    %1201 = vmatpush.bf16.msra.mxu0 0
    %1202 = vmatpush.bf16.msra.mxu0 0
    %1203 = vmatpush.bf16.msra.mxu0 0
    %1204 = vmatpush.bf16.msra.mxu0 0
    %1205 = vmatpush.bf16.msra.mxu0 0
    %1206 = vmatpush.bf16.msra.mxu0 %v721
    %1207 = vmatpush.bf16.msra.mxu0 %v481
    %1208 = vmatmul.bf16.gmra.mxu0 %v657
    %v1209 = vpop.f32.mrf.mxu0
    %v1210 = vadd.f32 %v148, %v1209
    %v1211 = vpop.f32.mrf.mxu0
    %v1212 = vadd.f32 %v153, %v1211
    %1213 = vmatmul.bf16.gmra.mxu0 %v660
    %v1214 = vpop.f32.mrf.mxu0
    %v1215 = vadd.f32 %v158, %v1214
    %v1216 = vpop.f32.mrf.mxu0
    %v1217 = vadd.f32 %v163, %v1216
    %1218 = vdwg.mxu0
    %1219 = vmatpush.bf16.msra.mxu0 0
    %1220 = vmatpush.bf16.msra.mxu0 0
    %1221 = vmatpush.bf16.msra.mxu0 0
    %1222 = vmatpush.bf16.msra.mxu0 0
    %1223 = vmatpush.bf16.msra.mxu0 0
    %1224 = vmatpush.bf16.msra.mxu0 0
    %1225 = vmatpush.bf16.msra.mxu0 %v724
    %1226 = vmatpush.bf16.msra.mxu0 %v482
    %1227 = vmatmul.bf16.gmra.mxu0 %v657
    %v1228 = vpop.f32.mrf.mxu0
    %v1229 = vadd.f32 %v148, %v1228
    %v1230 = vpop.f32.mrf.mxu0
    %v1231 = vadd.f32 %v153, %v1230
    %1232 = vmatmul.bf16.gmra.mxu0 %v660
    %v1233 = vpop.f32.mrf.mxu0
    %v1234 = vadd.f32 %v158, %v1233
    %v1235 = vpop.f32.mrf.mxu0
    %v1236 = vadd.f32 %v163, %v1235
    %1237 = vdwg.mxu0
    %1238 = vmatpush.bf16.msra.mxu0 0
    %1239 = vmatpush.bf16.msra.mxu0 0
    %1240 = vmatpush.bf16.msra.mxu0 0
    %1241 = vmatpush.bf16.msra.mxu0 0
    %1242 = vmatpush.bf16.msra.mxu0 0
    %1243 = vmatpush.bf16.msra.mxu0 0
    %1244 = vmatpush.bf16.msra.mxu0 %v727
    %1245 = vmatpush.bf16.msra.mxu0 %v483
    %1246 = vmatmul.bf16.gmra.mxu0 %v657
    %v1247 = vpop.f32.mrf.mxu0
    %v1248 = vadd.f32 %v148, %v1247
    %v1249 = vpop.f32.mrf.mxu0
    %v1250 = vadd.f32 %v153, %v1249
    %1251 = vmatmul.bf16.gmra.mxu0 %v660
    %v1252 = vpop.f32.mrf.mxu0
    %v1253 = vadd.f32 %v158, %v1252
    %v1254 = vpop.f32.mrf.mxu0
    %v1255 = vadd.f32 %v163, %v1254
    %1256 = vdwg.mxu0
    %1257 = vmatpush.bf16.msra.mxu0 0
    %1258 = vmatpush.bf16.msra.mxu0 0
    %1259 = vmatpush.bf16.msra.mxu0 0
    %1260 = vmatpush.bf16.msra.mxu0 0
    %1261 = vmatpush.bf16.msra.mxu0 0
    %1262 = vmatpush.bf16.msra.mxu0 0
    %1263 = vmatpush.bf16.msra.mxu0 %v730
    %1264 = vmatpush.bf16.msra.mxu0 %v484
    %1265 = vmatmul.bf16.gmra.mxu0 %v657
    %v1266 = vpop.f32.mrf.mxu0
    %v1267 = vadd.f32 %v148, %v1266
    %v1268 = vpop.f32.mrf.mxu0
    %v1269 = vadd.f32 %v153, %v1268
    %1270 = vmatmul.bf16.gmra.mxu0 %v660
    %v1271 = vpop.f32.mrf.mxu0
    %v1272 = vadd.f32 %v158, %v1271
    %v1273 = vpop.f32.mrf.mxu0
    %v1274 = vadd.f32 %v163, %v1273
    %1275 = vdwg.mxu0
    %1276 = vmatpush.bf16.msra.mxu0 0
    %1277 = vmatpush.bf16.msra.mxu0 0
    %1278 = vmatpush.bf16.msra.mxu0 0
    %1279 = vmatpush.bf16.msra.mxu0 0
    %1280 = vmatpush.bf16.msra.mxu0 0
    %1281 = vmatpush.bf16.msra.mxu0 0
    %1282 = vmatpush.bf16.msra.mxu0 %v733
    %1283 = vmatpush.bf16.msra.mxu0 %v485
    %1284 = vmatmul.bf16.gmra.mxu0 %v657
    %v1285 = vpop.f32.mrf.mxu0
    %v1286 = vadd.f32 %v148, %v1285
    %v1287 = vpop.f32.mrf.mxu0
    %v1288 = vadd.f32 %v153, %v1287
    %1289 = vmatmul.bf16.gmra.mxu0 %v660
    %v1290 = vpop.f32.mrf.mxu0
    %v1291 = vadd.f32 %v158, %v1290
    %v1292 = vpop.f32.mrf.mxu0
    %v1293 = vadd.f32 %v163, %v1292
    %1294 = vdwg.mxu0
    %1295 = vmatpush.bf16.msra.mxu0 0
    %1296 = vmatpush.bf16.msra.mxu0 0
    %1297 = vmatpush.bf16.msra.mxu0 0
    %1298 = vmatpush.bf16.msra.mxu0 0
    %1299 = vmatpush.bf16.msra.mxu0 0
    %1300 = vmatpush.bf16.msra.mxu0 0
    %1301 = vmatpush.bf16.msra.mxu0 %v736
    %1302 = vmatpush.bf16.msra.mxu0 %v486
    %1303 = vmatmul.bf16.gmra.mxu0 %v657
    %v1304 = vpop.f32.mrf.mxu0
    %v1305 = vadd.f32 %v148, %v1304
    %v1306 = vpop.f32.mrf.mxu0
    %v1307 = vadd.f32 %v153, %v1306
    %1308 = vmatmul.bf16.gmra.mxu0 %v660
    %v1309 = vpop.f32.mrf.mxu0
    %v1310 = vadd.f32 %v158, %v1309
    %v1311 = vpop.f32.mrf.mxu0
    %v1312 = vadd.f32 %v163, %v1311
    %1313 = vdwg.mxu0
    %1314 = vmatpush.bf16.msra.mxu0 0
    %1315 = vmatpush.bf16.msra.mxu0 0
    %1316 = vmatpush.bf16.msra.mxu0 0
    %1317 = vmatpush.bf16.msra.mxu0 0
    %1318 = vmatpush.bf16.msra.mxu0 0
    %1319 = vmatpush.bf16.msra.mxu0 0
    %1320 = vmatpush.bf16.msra.mxu0 %v739
    %1321 = vmatpush.bf16.msra.mxu0 %v487
    %1322 = vmatmul.bf16.gmra.mxu0 %v657
    %v1323 = vpop.f32.mrf.mxu0
    %v1324 = vadd.f32 %v148, %v1323
    %v1325 = vpop.f32.mrf.mxu0
    %v1326 = vadd.f32 %v153, %v1325
    %1327 = vmatmul.bf16.gmra.mxu0 %v660
    %v1328 = vpop.f32.mrf.mxu0
    %v1329 = vadd.f32 %v158, %v1328
    %v1330 = vpop.f32.mrf.mxu0
    %v1331 = vadd.f32 %v163, %v1330
    %1332 = vdwg.mxu0
    %1333 = vmatpush.bf16.msra.mxu0 0
    %1334 = vmatpush.bf16.msra.mxu0 0
    %1335 = vmatpush.bf16.msra.mxu0 0
    %1336 = vmatpush.bf16.msra.mxu0 0
    %1337 = vmatpush.bf16.msra.mxu0 0
    %1338 = vmatpush.bf16.msra.mxu0 0
    %1339 = vmatpush.bf16.msra.mxu0 %v742
    %1340 = vmatpush.bf16.msra.mxu0 %v488
    %1341 = vmatmul.bf16.gmra.mxu0 %v657
    %v1342 = vpop.f32.mrf.mxu0
    %v1343 = vadd.f32 %v148, %v1342
    %v1344 = vpop.f32.mrf.mxu0
    %v1345 = vadd.f32 %v153, %v1344
    %1346 = vmatmul.bf16.gmra.mxu0 %v660
    %v1347 = vpop.f32.mrf.mxu0
    %v1348 = vadd.f32 %v158, %v1347
    %v1349 = vpop.f32.mrf.mxu0
    %v1350 = vadd.f32 %v163, %v1349
    %1351 = vdwg.mxu0
    %1352 = vmatpush.bf16.msra.mxu0 0
    %1353 = vmatpush.bf16.msra.mxu0 0
    %1354 = vmatpush.bf16.msra.mxu0 0
    %1355 = vmatpush.bf16.msra.mxu0 0
    %1356 = vmatpush.bf16.msra.mxu0 0
    %1357 = vmatpush.bf16.msra.mxu0 0
    %1358 = vmatpush.bf16.msra.mxu0 %v745
    %1359 = vmatpush.bf16.msra.mxu0 %v489
    %1360 = vmatmul.bf16.gmra.mxu0 %v657
    %v1361 = vpop.f32.mrf.mxu0
    %v1362 = vadd.f32 %v148, %v1361
    %v1363 = vpop.f32.mrf.mxu0
    %v1364 = vadd.f32 %v153, %v1363
    %1365 = vmatmul.bf16.gmra.mxu0 %v660
    %v1366 = vpop.f32.mrf.mxu0
    %v1367 = vadd.f32 %v158, %v1366
    %v1368 = vpop.f32.mrf.mxu0
    %v1369 = vadd.f32 %v163, %v1368
    %1370 = vdwg.mxu0
    %1371 = vmatpush.bf16.msra.mxu0 0
    %1372 = vmatpush.bf16.msra.mxu0 0
    %1373 = vmatpush.bf16.msra.mxu0 0
    %1374 = vmatpush.bf16.msra.mxu0 0
    %1375 = vmatpush.bf16.msra.mxu0 0
    %1376 = vmatpush.bf16.msra.mxu0 0
    %1377 = vmatpush.bf16.msra.mxu0 %v748
    %1378 = vmatpush.bf16.msra.mxu0 %v490
    %1379 = vmatmul.bf16.gmra.mxu0 %v657
    %v1380 = vpop.f32.mrf.mxu0
    %v1381 = vadd.f32 %v148, %v1380
    %v1382 = vpop.f32.mrf.mxu0
    %v1383 = vadd.f32 %v153, %v1382
    %1384 = vmatmul.bf16.gmra.mxu0 %v660
    %v1385 = vpop.f32.mrf.mxu0
    %v1386 = vadd.f32 %v158, %v1385
    %v1387 = vpop.f32.mrf.mxu0
    %v1388 = vadd.f32 %v163, %v1387
    %1389 = vdwg.mxu0
    %1390 = vmatpush.bf16.msra.mxu0 0
    %1391 = vmatpush.bf16.msra.mxu0 0
    %1392 = vmatpush.bf16.msra.mxu0 0
    %1393 = vmatpush.bf16.msra.mxu0 0
    %1394 = vmatpush.bf16.msra.mxu0 0
    %1395 = vmatpush.bf16.msra.mxu0 0
    %1396 = vmatpush.bf16.msra.mxu0 %v751
    %1397 = vmatpush.bf16.msra.mxu0 %v491
    %1398 = vmatmul.bf16.gmra.mxu0 %v657
    %v1399 = vpop.f32.mrf.mxu0
    %v1400 = vadd.f32 %v148, %v1399
    %v1401 = vpop.f32.mrf.mxu0
    %v1402 = vadd.f32 %v153, %v1401
    %1403 = vmatmul.bf16.gmra.mxu0 %v660
    %v1404 = vpop.f32.mrf.mxu0
    %v1405 = vadd.f32 %v158, %v1404
    %v1406 = vpop.f32.mrf.mxu0
    %v1407 = vadd.f32 %v163, %v1406
    %1408 = vdwg.mxu0
    %1409 = vmatpush.bf16.msra.mxu0 0
    %1410 = vmatpush.bf16.msra.mxu0 0
    %1411 = vmatpush.bf16.msra.mxu0 0
    %1412 = vmatpush.bf16.msra.mxu0 0
    %1413 = vmatpush.bf16.msra.mxu0 0
    %1414 = vmatpush.bf16.msra.mxu0 0
    %1415 = vmatpush.bf16.msra.mxu0 %v754
    %1416 = vmatpush.bf16.msra.mxu0 %v492
    %1417 = vmatmul.bf16.gmra.mxu0 %v657
    %v1418 = vpop.f32.mrf.mxu0
    %v1419 = vadd.f32 %v148, %v1418
    %v1420 = vpop.f32.mrf.mxu0
    %v1421 = vadd.f32 %v153, %v1420
    %1422 = vmatmul.bf16.gmra.mxu0 %v660
    %v1423 = vpop.f32.mrf.mxu0
    %v1424 = vadd.f32 %v158, %v1423
    %v1425 = vpop.f32.mrf.mxu0
    %v1426 = vadd.f32 %v163, %v1425
    %1427 = vdwg.mxu0
    %1428 = vmatpush.bf16.msra.mxu0 0
    %1429 = vmatpush.bf16.msra.mxu0 0
    %1430 = vmatpush.bf16.msra.mxu0 0
    %1431 = vmatpush.bf16.msra.mxu0 0
    %1432 = vmatpush.bf16.msra.mxu0 0
    %1433 = vmatpush.bf16.msra.mxu0 0
    %1434 = vmatpush.bf16.msra.mxu0 %v757
    %1435 = vmatpush.bf16.msra.mxu0 %v493
    %1436 = vmatmul.bf16.gmra.mxu0 %v657
    %v1437 = vpop.f32.mrf.mxu0
    %v1438 = vadd.f32 %v148, %v1437
    %v1439 = vpop.f32.mrf.mxu0
    %v1440 = vadd.f32 %v153, %v1439
    %1441 = vmatmul.bf16.gmra.mxu0 %v660
    %v1442 = vpop.f32.mrf.mxu0
    %v1443 = vadd.f32 %v158, %v1442
    %v1444 = vpop.f32.mrf.mxu0
    %v1445 = vadd.f32 %v163, %v1444
    %1446 = vdwg.mxu0
    %1447 = vmatpush.bf16.msra.mxu0 0
    %1448 = vmatpush.bf16.msra.mxu0 0
    %1449 = vmatpush.bf16.msra.mxu0 0
    %1450 = vmatpush.bf16.msra.mxu0 0
    %1451 = vmatpush.bf16.msra.mxu0 0
    %1452 = vmatpush.bf16.msra.mxu0 0
    %1453 = vmatpush.bf16.msra.mxu0 %v760
    %1454 = vmatpush.bf16.msra.mxu0 %v494
    %1455 = vmatmul.bf16.gmra.mxu0 %v657
    %v1456 = vpop.f32.mrf.mxu0
    %v1457 = vadd.f32 %v148, %v1456
    %v1458 = vpop.f32.mrf.mxu0
    %v1459 = vadd.f32 %v153, %v1458
    %1460 = vmatmul.bf16.gmra.mxu0 %v660
    %v1461 = vpop.f32.mrf.mxu0
    %v1462 = vadd.f32 %v158, %v1461
    %v1463 = vpop.f32.mrf.mxu0
    %v1464 = vadd.f32 %v163, %v1463
    %1465 = vdwg.mxu0
    %1466 = vmatpush.bf16.msra.mxu0 0
    %1467 = vmatpush.bf16.msra.mxu0 0
    %1468 = vmatpush.bf16.msra.mxu0 0
    %1469 = vmatpush.bf16.msra.mxu0 0
    %1470 = vmatpush.bf16.msra.mxu0 0
    %1471 = vmatpush.bf16.msra.mxu0 0
    %1472 = vmatpush.bf16.msra.mxu0 %v763
    %1473 = vmatpush.bf16.msra.mxu0 %v495
    %1474 = vmatmul.bf16.gmra.mxu0 %v657
    %v1475 = vpop.f32.mrf.mxu0
    %v1476 = vadd.f32 %v148, %v1475
    %v1477 = vpop.f32.mrf.mxu0
    %v1478 = vadd.f32 %v153, %v1477
    %1479 = vmatmul.bf16.gmra.mxu0 %v660
    %v1480 = vpop.f32.mrf.mxu0
    %v1481 = vadd.f32 %v158, %v1480
    %v1482 = vpop.f32.mrf.mxu0
    %v1483 = vadd.f32 %v163, %v1482
    %1484 = vdwg.mxu0
    %1485 = vmatpush.bf16.msra.mxu0 0
    %1486 = vmatpush.bf16.msra.mxu0 0
    %1487 = vmatpush.bf16.msra.mxu0 0
    %1488 = vmatpush.bf16.msra.mxu0 0
    %1489 = vmatpush.bf16.msra.mxu0 0
    %1490 = vmatpush.bf16.msra.mxu0 0
    %1491 = vmatpush.bf16.msra.mxu0 %v766
    %1492 = vmatpush.bf16.msra.mxu0 %v496
    %1493 = vmatmul.bf16.gmra.mxu0 %v657
    %v1494 = vpop.f32.mrf.mxu0
    %v1495 = vadd.f32 %v148, %v1494
    %v1496 = vpop.f32.mrf.mxu0
    %v1497 = vadd.f32 %v153, %v1496
    %1498 = vmatmul.bf16.gmra.mxu0 %v660
    %v1499 = vpop.f32.mrf.mxu0
    %v1500 = vadd.f32 %v158, %v1499
    %v1501 = vpop.f32.mrf.mxu0
    %v1502 = vadd.f32 %v163, %v1501
    %1503 = vdwg.mxu0
    %1504 = vmatpush.bf16.msra.mxu0 0
    %1505 = vmatpush.bf16.msra.mxu0 0
    %1506 = vmatpush.bf16.msra.mxu0 0
    %1507 = vmatpush.bf16.msra.mxu0 0
    %1508 = vmatpush.bf16.msra.mxu0 0
    %1509 = vmatpush.bf16.msra.mxu0 0
    %1510 = vmatpush.bf16.msra.mxu0 %v769
    %1511 = vmatpush.bf16.msra.mxu0 %v497
    %1512 = vmatmul.bf16.gmra.mxu0 %v657
    %v1513 = vpop.f32.mrf.mxu0
    %v1514 = vadd.f32 %v148, %v1513
    %v1515 = vpop.f32.mrf.mxu0
    %v1516 = vadd.f32 %v153, %v1515
    %1517 = vmatmul.bf16.gmra.mxu0 %v660
    %v1518 = vpop.f32.mrf.mxu0
    %v1519 = vadd.f32 %v158, %v1518
    %v1520 = vpop.f32.mrf.mxu0
    %v1521 = vadd.f32 %v163, %v1520
    %1522 = vdwg.mxu0
    %1523 = vmatpush.bf16.msra.mxu0 0
    %1524 = vmatpush.bf16.msra.mxu0 0
    %1525 = vmatpush.bf16.msra.mxu0 0
    %1526 = vmatpush.bf16.msra.mxu0 0
    %1527 = vmatpush.bf16.msra.mxu0 0
    %1528 = vmatpush.bf16.msra.mxu0 0
    %1529 = vmatpush.bf16.msra.mxu0 %v772
    %1530 = vmatpush.bf16.msra.mxu0 %v498
    %1531 = vmatmul.bf16.gmra.mxu0 %v657
    %v1532 = vpop.f32.mrf.mxu0
    %v1533 = vadd.f32 %v148, %v1532
    %v1534 = vpop.f32.mrf.mxu0
    %v1535 = vadd.f32 %v153, %v1534
    %1536 = vmatmul.bf16.gmra.mxu0 %v660
    %v1537 = vpop.f32.mrf.mxu0
    %v1538 = vadd.f32 %v158, %v1537
    %v1539 = vpop.f32.mrf.mxu0
    %v1540 = vadd.f32 %v163, %v1539
    %1541 = vdwg.mxu0
    %1542 = vmatpush.bf16.msra.mxu0 0
    %1543 = vmatpush.bf16.msra.mxu0 0
    %1544 = vmatpush.bf16.msra.mxu0 0
    %1545 = vmatpush.bf16.msra.mxu0 0
    %1546 = vmatpush.bf16.msra.mxu0 0
    %1547 = vmatpush.bf16.msra.mxu0 0
    %1548 = vmatpush.bf16.msra.mxu0 %v775
    %1549 = vmatpush.bf16.msra.mxu0 %v499
    %1550 = vmatmul.bf16.gmra.mxu0 %v657
    %v1551 = vpop.f32.mrf.mxu0
    %v1552 = vadd.f32 %v148, %v1551
    %v1553 = vpop.f32.mrf.mxu0
    %v1554 = vadd.f32 %v153, %v1553
    %1555 = vmatmul.bf16.gmra.mxu0 %v660
    %v1556 = vpop.f32.mrf.mxu0
    %v1557 = vadd.f32 %v158, %v1556
    %v1558 = vpop.f32.mrf.mxu0
    %v1559 = vadd.f32 %v163, %v1558
    %1560 = vdwg.mxu0
    %1561 = vmatpush.bf16.msra.mxu0 0
    %1562 = vmatpush.bf16.msra.mxu0 0
    %1563 = vmatpush.bf16.msra.mxu0 0
    %1564 = vmatpush.bf16.msra.mxu0 0
    %1565 = vmatpush.bf16.msra.mxu0 0
    %1566 = vmatpush.bf16.msra.mxu0 0
    %1567 = vmatpush.bf16.msra.mxu0 %v778
    %1568 = vmatpush.bf16.msra.mxu0 %v500
    %1569 = vmatmul.bf16.gmra.mxu0 %v657
    %v1570 = vpop.f32.mrf.mxu0
    %v1571 = vadd.f32 %v148, %v1570
    %v1572 = vpop.f32.mrf.mxu0
    %v1573 = vadd.f32 %v153, %v1572
    %1574 = vmatmul.bf16.gmra.mxu0 %v660
    %v1575 = vpop.f32.mrf.mxu0
    %v1576 = vadd.f32 %v158, %v1575
    %v1577 = vpop.f32.mrf.mxu0
    %v1578 = vadd.f32 %v163, %v1577
    %1579 = vdwg.mxu0
    %1580 = vmatpush.bf16.msra.mxu0 0
    %1581 = vmatpush.bf16.msra.mxu0 0
    %1582 = vmatpush.bf16.msra.mxu0 0
    %1583 = vmatpush.bf16.msra.mxu0 0
    %1584 = vmatpush.bf16.msra.mxu0 0
    %1585 = vmatpush.bf16.msra.mxu0 0
    %1586 = vmatpush.bf16.msra.mxu0 %v781
    %1587 = vmatpush.bf16.msra.mxu0 %v501
    %1588 = vmatmul.bf16.gmra.mxu0 %v657
    %v1589 = vpop.f32.mrf.mxu0
    %v1590 = vadd.f32 %v148, %v1589
    %v1591 = vpop.f32.mrf.mxu0
    %v1592 = vadd.f32 %v153, %v1591
    %1593 = vmatmul.bf16.gmra.mxu0 %v660
    %v1594 = vpop.f32.mrf.mxu0
    %v1595 = vadd.f32 %v158, %v1594
    %v1596 = vpop.f32.mrf.mxu0
    %v1597 = vadd.f32 %v163, %v1596
    %1598 = vdwg.mxu0
    %1599 = vmatpush.bf16.msra.mxu0 0
    %1600 = vmatpush.bf16.msra.mxu0 0
    %1601 = vmatpush.bf16.msra.mxu0 0
    %1602 = vmatpush.bf16.msra.mxu0 0
    %1603 = vmatpush.bf16.msra.mxu0 0
    %1604 = vmatpush.bf16.msra.mxu0 0
    %1605 = vmatpush.bf16.msra.mxu0 %v784
    %1606 = vmatpush.bf16.msra.mxu0 %v502
    %1607 = vmatmul.bf16.gmra.mxu0 %v657
    %v1608 = vpop.f32.mrf.mxu0
    %v1609 = vadd.f32 %v148, %v1608
    %v1610 = vpop.f32.mrf.mxu0
    %v1611 = vadd.f32 %v153, %v1610
    %1612 = vmatmul.bf16.gmra.mxu0 %v660
    %v1613 = vpop.f32.mrf.mxu0
    %v1614 = vadd.f32 %v158, %v1613
    %v1615 = vpop.f32.mrf.mxu0
    %v1616 = vadd.f32 %v163, %v1615
    %1617 = vdwg.mxu0
    %1618 = vmatpush.bf16.msra.mxu0 0
    %1619 = vmatpush.bf16.msra.mxu0 0
    %1620 = vmatpush.bf16.msra.mxu0 0
    %1621 = vmatpush.bf16.msra.mxu0 0
    %1622 = vmatpush.bf16.msra.mxu0 0
    %1623 = vmatpush.bf16.msra.mxu0 0
    %1624 = vmatpush.bf16.msra.mxu0 %v787
    %1625 = vmatpush.bf16.msra.mxu0 %v503
    %1626 = vmatmul.bf16.gmra.mxu0 %v657
    %v1627 = vpop.f32.mrf.mxu0
    %v1628 = vadd.f32 %v148, %v1627
    %v1629 = vpop.f32.mrf.mxu0
    %v1630 = vadd.f32 %v153, %v1629
    %1631 = vmatmul.bf16.gmra.mxu0 %v660
    %v1632 = vpop.f32.mrf.mxu0
    %v1633 = vadd.f32 %v158, %v1632
    %v1634 = vpop.f32.mrf.mxu0
    %v1635 = vadd.f32 %v163, %v1634
    %1636 = vdwg.mxu0
    %1637 = vmatpush.bf16.msra.mxu0 0
    %1638 = vmatpush.bf16.msra.mxu0 0
    %1639 = vmatpush.bf16.msra.mxu0 0
    %1640 = vmatpush.bf16.msra.mxu0 0
    %1641 = vmatpush.bf16.msra.mxu0 0
    %1642 = vmatpush.bf16.msra.mxu0 0
    %1643 = vmatpush.bf16.msra.mxu0 %v790
    %1644 = vmatpush.bf16.msra.mxu0 %v504
    %1645 = vmatmul.bf16.gmra.mxu0 %v657
    %v1646 = vpop.f32.mrf.mxu0
    %v1647 = vadd.f32 %v148, %v1646
    %v1648 = vpop.f32.mrf.mxu0
    %v1649 = vadd.f32 %v153, %v1648
    %1650 = vmatmul.bf16.gmra.mxu0 %v660
    %v1651 = vpop.f32.mrf.mxu0
    %v1652 = vadd.f32 %v158, %v1651
    %v1653 = vpop.f32.mrf.mxu0
    %v1654 = vadd.f32 %v163, %v1653
    %1655 = vdwg.mxu0
    %1656 = vmatpush.bf16.msra.mxu0 0
    %1657 = vmatpush.bf16.msra.mxu0 0
    %1658 = vmatpush.bf16.msra.mxu0 0
    %1659 = vmatpush.bf16.msra.mxu0 0
    %1660 = vmatpush.bf16.msra.mxu0 0
    %1661 = vmatpush.bf16.msra.mxu0 0
    %1662 = vmatpush.bf16.msra.mxu0 %v793
    %1663 = vmatpush.bf16.msra.mxu0 %v505
    %1664 = vmatmul.bf16.gmra.mxu0 %v657
    %v1665 = vpop.f32.mrf.mxu0
    %v1666 = vadd.f32 %v148, %v1665
    %v1667 = vpop.f32.mrf.mxu0
    %v1668 = vadd.f32 %v153, %v1667
    %1669 = vmatmul.bf16.gmra.mxu0 %v660
    %v1670 = vpop.f32.mrf.mxu0
    %v1671 = vadd.f32 %v158, %v1670
    %v1672 = vpop.f32.mrf.mxu0
    %v1673 = vadd.f32 %v163, %v1672
    %1674 = vdwg.mxu0
    %1675 = vmatpush.bf16.msra.mxu0 0
    %1676 = vmatpush.bf16.msra.mxu0 0
    %1677 = vmatpush.bf16.msra.mxu0 0
    %1678 = vmatpush.bf16.msra.mxu0 0
    %1679 = vmatpush.bf16.msra.mxu0 0
    %1680 = vmatpush.bf16.msra.mxu0 0
    %1681 = vmatpush.bf16.msra.mxu0 %v796
    %1682 = vmatpush.bf16.msra.mxu0 %v506
    %1683 = vmatmul.bf16.gmra.mxu0 %v657
    %v1684 = vpop.f32.mrf.mxu0
    %v1685 = vadd.f32 %v148, %v1684
    %v1686 = vpop.f32.mrf.mxu0
    %v1687 = vadd.f32 %v153, %v1686
    %1688 = vmatmul.bf16.gmra.mxu0 %v660
    %v1689 = vpop.f32.mrf.mxu0
    %v1690 = vadd.f32 %v158, %v1689
    %v1691 = vpop.f32.mrf.mxu0
    %v1692 = vadd.f32 %v163, %v1691
    %1693 = vdwg.mxu0
    %1694 = vmatpush.bf16.msra.mxu0 0
    %1695 = vmatpush.bf16.msra.mxu0 0
    %1696 = vmatpush.bf16.msra.mxu0 0
    %1697 = vmatpush.bf16.msra.mxu0 0
    %1698 = vmatpush.bf16.msra.mxu0 0
    %1699 = vmatpush.bf16.msra.mxu0 0
    %1700 = vmatpush.bf16.msra.mxu0 %v799
    %1701 = vmatpush.bf16.msra.mxu0 %v507
    %1702 = vmatmul.bf16.gmra.mxu0 %v657
    %v1703 = vpop.f32.mrf.mxu0
    %v1704 = vadd.f32 %v148, %v1703
    %v1705 = vpop.f32.mrf.mxu0
    %v1706 = vadd.f32 %v153, %v1705
    %1707 = vmatmul.bf16.gmra.mxu0 %v660
    %v1708 = vpop.f32.mrf.mxu0
    %v1709 = vadd.f32 %v158, %v1708
    %v1710 = vpop.f32.mrf.mxu0
    %v1711 = vadd.f32 %v163, %v1710
    %1712 = vdwg.mxu0
    %1713 = vmatpush.bf16.msra.mxu0 0
    %1714 = vmatpush.bf16.msra.mxu0 0
    %1715 = vmatpush.bf16.msra.mxu0 0
    %1716 = vmatpush.bf16.msra.mxu0 0
    %1717 = vmatpush.bf16.msra.mxu0 0
    %1718 = vmatpush.bf16.msra.mxu0 0
    %1719 = vmatpush.bf16.msra.mxu0 %v802
    %1720 = vmatpush.bf16.msra.mxu0 %v508
    %1721 = vmatmul.bf16.gmra.mxu0 %v657
    %v1722 = vpop.f32.mrf.mxu0
    %v1723 = vadd.f32 %v148, %v1722
    %v1724 = vpop.f32.mrf.mxu0
    %v1725 = vadd.f32 %v153, %v1724
    %1726 = vmatmul.bf16.gmra.mxu0 %v660
    %v1727 = vpop.f32.mrf.mxu0
    %v1728 = vadd.f32 %v158, %v1727
    %v1729 = vpop.f32.mrf.mxu0
    %v1730 = vadd.f32 %v163, %v1729
    %1731 = vdwg.mxu0
    %1732 = vmatpush.bf16.msra.mxu0 0
    %1733 = vmatpush.bf16.msra.mxu0 0
    %1734 = vmatpush.bf16.msra.mxu0 0
    %1735 = vmatpush.bf16.msra.mxu0 0
    %1736 = vmatpush.bf16.msra.mxu0 0
    %1737 = vmatpush.bf16.msra.mxu0 0
    %1738 = vmatpush.bf16.msra.mxu0 %v805
    %1739 = vmatpush.bf16.msra.mxu0 %v509
    %1740 = vmatmul.bf16.gmra.mxu0 %v657
    %v1741 = vpop.f32.mrf.mxu0
    %v1742 = vadd.f32 %v148, %v1741
    %v1743 = vpop.f32.mrf.mxu0
    %v1744 = vadd.f32 %v153, %v1743
    %1745 = vmatmul.bf16.gmra.mxu0 %v660
    %v1746 = vpop.f32.mrf.mxu0
    %v1747 = vadd.f32 %v158, %v1746
    %v1748 = vpop.f32.mrf.mxu0
    %v1749 = vadd.f32 %v163, %v1748
    %1750 = vdwg.mxu0
    %1751 = vmatpush.bf16.msra.mxu0 0
    %1752 = vmatpush.bf16.msra.mxu0 0
    %1753 = vmatpush.bf16.msra.mxu0 0
    %1754 = vmatpush.bf16.msra.mxu0 0
    %1755 = vmatpush.bf16.msra.mxu0 0
    %1756 = vmatpush.bf16.msra.mxu0 0
    %1757 = vmatpush.bf16.msra.mxu0 %v808
    %1758 = vmatpush.bf16.msra.mxu0 %v510
    %1759 = vmatmul.bf16.gmra.mxu0 %v657
    %v1760 = vpop.f32.mrf.mxu0
    %v1761 = vadd.f32 %v148, %v1760
    %v1762 = vpop.f32.mrf.mxu0
    %v1763 = vadd.f32 %v153, %v1762
    %1764 = vmatmul.bf16.gmra.mxu0 %v660
    %v1765 = vpop.f32.mrf.mxu0
    %v1766 = vadd.f32 %v158, %v1765
    %v1767 = vpop.f32.mrf.mxu0
    %v1768 = vadd.f32 %v163, %v1767
    %1769 = vdwg.mxu0
    %1770 = vmatpush.bf16.msra.mxu0 0
    %1771 = vmatpush.bf16.msra.mxu0 0
    %1772 = vmatpush.bf16.msra.mxu0 0
    %1773 = vmatpush.bf16.msra.mxu0 0
    %1774 = vmatpush.bf16.msra.mxu0 0
    %1775 = vmatpush.bf16.msra.mxu0 0
    %1776 = vmatpush.bf16.msra.mxu0 %v811
    %1777 = vmatpush.bf16.msra.mxu0 %v511
    %1778 = vmatmul.bf16.gmra.mxu0 %v657
    %v1779 = vpop.f32.mrf.mxu0
    %v1780 = vadd.f32 %v148, %v1779
    %v1781 = vpop.f32.mrf.mxu0
    %v1782 = vadd.f32 %v153, %v1781
    %1783 = vmatmul.bf16.gmra.mxu0 %v660
    %v1784 = vpop.f32.mrf.mxu0
    %v1785 = vadd.f32 %v158, %v1784
    %v1786 = vpop.f32.mrf.mxu0
    %v1787 = vadd.f32 %v163, %v1786
    %1788 = vdwg.mxu0
    %1789 = vmatpush.bf16.msra.mxu0 0
    %1790 = vmatpush.bf16.msra.mxu0 0
    %1791 = vmatpush.bf16.msra.mxu0 0
    %1792 = vmatpush.bf16.msra.mxu0 0
    %1793 = vmatpush.bf16.msra.mxu0 0
    %1794 = vmatpush.bf16.msra.mxu0 0
    %1795 = vmatpush.bf16.msra.mxu0 %v814
    %1796 = vmatpush.bf16.msra.mxu0 %v512
    %1797 = vmatmul.bf16.gmra.mxu0 %v657
    %v1798 = vpop.f32.mrf.mxu0
    %v1799 = vadd.f32 %v148, %v1798
    %v1800 = vpop.f32.mrf.mxu0
    %v1801 = vadd.f32 %v153, %v1800
    %1802 = vmatmul.bf16.gmra.mxu0 %v660
    %v1803 = vpop.f32.mrf.mxu0
    %v1804 = vadd.f32 %v158, %v1803
    %v1805 = vpop.f32.mrf.mxu0
    %v1806 = vadd.f32 %v163, %v1805
    %1807 = vdwg.mxu0
    %1808 = vmatpush.bf16.msra.mxu0 0
    %1809 = vmatpush.bf16.msra.mxu0 0
    %1810 = vmatpush.bf16.msra.mxu0 0
    %1811 = vmatpush.bf16.msra.mxu0 0
    %1812 = vmatpush.bf16.msra.mxu0 0
    %1813 = vmatpush.bf16.msra.mxu0 0
    %1814 = vmatpush.bf16.msra.mxu0 %v817
    %1815 = vmatpush.bf16.msra.mxu0 %v513
    %1816 = vmatmul.bf16.gmra.mxu0 %v657
    %v1817 = vpop.f32.mrf.mxu0
    %v1818 = vadd.f32 %v148, %v1817
    %v1819 = vpop.f32.mrf.mxu0
    %v1820 = vadd.f32 %v153, %v1819
    %1821 = vmatmul.bf16.gmra.mxu0 %v660
    %v1822 = vpop.f32.mrf.mxu0
    %v1823 = vadd.f32 %v158, %v1822
    %v1824 = vpop.f32.mrf.mxu0
    %v1825 = vadd.f32 %v163, %v1824
    %1826 = vdwg.mxu0
    %1827 = vmatpush.bf16.msra.mxu0 0
    %1828 = vmatpush.bf16.msra.mxu0 0
    %1829 = vmatpush.bf16.msra.mxu0 0
    %1830 = vmatpush.bf16.msra.mxu0 0
    %1831 = vmatpush.bf16.msra.mxu0 0
    %1832 = vmatpush.bf16.msra.mxu0 0
    %1833 = vmatpush.bf16.msra.mxu0 %v820
    %1834 = vmatpush.bf16.msra.mxu0 %v514
    %1835 = vmatmul.bf16.gmra.mxu0 %v657
    %v1836 = vpop.f32.mrf.mxu0
    %v1837 = vadd.f32 %v148, %v1836
    %v1838 = vpop.f32.mrf.mxu0
    %v1839 = vadd.f32 %v153, %v1838
    %1840 = vmatmul.bf16.gmra.mxu0 %v660
    %v1841 = vpop.f32.mrf.mxu0
    %v1842 = vadd.f32 %v158, %v1841
    %v1843 = vpop.f32.mrf.mxu0
    %v1844 = vadd.f32 %v163, %v1843
    %1845 = vdwg.mxu0
    %1846 = vmatpush.bf16.msra.mxu0 0
    %1847 = vmatpush.bf16.msra.mxu0 0
    %1848 = vmatpush.bf16.msra.mxu0 0
    %1849 = vmatpush.bf16.msra.mxu0 0
    %1850 = vmatpush.bf16.msra.mxu0 0
    %1851 = vmatpush.bf16.msra.mxu0 0
    %1852 = vmatpush.bf16.msra.mxu0 %v823
    %1853 = vmatpush.bf16.msra.mxu0 %v515
    %1854 = vmatmul.bf16.gmra.mxu0 %v657
    %v1855 = vpop.f32.mrf.mxu0
    %v1856 = vadd.f32 %v148, %v1855
    %v1857 = vpop.f32.mrf.mxu0
    %v1858 = vadd.f32 %v153, %v1857
    %1859 = vmatmul.bf16.gmra.mxu0 %v660
    %v1860 = vpop.f32.mrf.mxu0
    %v1861 = vadd.f32 %v158, %v1860
    %v1862 = vpop.f32.mrf.mxu0
    %v1863 = vadd.f32 %v163, %v1862
    %1864 = vdwg.mxu0
    %1865 = vmatpush.bf16.msra.mxu0 0
    %1866 = vmatpush.bf16.msra.mxu0 0
    %1867 = vmatpush.bf16.msra.mxu0 0
    %1868 = vmatpush.bf16.msra.mxu0 0
    %1869 = vmatpush.bf16.msra.mxu0 0
    %1870 = vmatpush.bf16.msra.mxu0 0
    %1871 = vmatpush.bf16.msra.mxu0 %v826
    %1872 = vmatpush.bf16.msra.mxu0 %v516
    %1873 = vmatmul.bf16.gmra.mxu0 %v657
    %v1874 = vpop.f32.mrf.mxu0
    %v1875 = vadd.f32 %v148, %v1874
    %v1876 = vpop.f32.mrf.mxu0
    %v1877 = vadd.f32 %v153, %v1876
    %1878 = vmatmul.bf16.gmra.mxu0 %v660
    %v1879 = vpop.f32.mrf.mxu0
    %v1880 = vadd.f32 %v158, %v1879
    %v1881 = vpop.f32.mrf.mxu0
    %v1882 = vadd.f32 %v163, %v1881
    %1883 = vdwg.mxu0
    %1884 = vmatpush.bf16.msra.mxu0 0
    %1885 = vmatpush.bf16.msra.mxu0 0
    %1886 = vmatpush.bf16.msra.mxu0 0
    %1887 = vmatpush.bf16.msra.mxu0 0
    %1888 = vmatpush.bf16.msra.mxu0 0
    %1889 = vmatpush.bf16.msra.mxu0 0
    %1890 = vmatpush.bf16.msra.mxu0 %v829
    %1891 = vmatpush.bf16.msra.mxu0 %v517
    %1892 = vmatmul.bf16.gmra.mxu0 %v657
    %v1893 = vpop.f32.mrf.mxu0
    %v1894 = vadd.f32 %v148, %v1893
    %v1895 = vpop.f32.mrf.mxu0
    %v1896 = vadd.f32 %v153, %v1895
    %1897 = vmatmul.bf16.gmra.mxu0 %v660
    %v1898 = vpop.f32.mrf.mxu0
    %v1899 = vadd.f32 %v158, %v1898
    %v1900 = vpop.f32.mrf.mxu0
    %v1901 = vadd.f32 %v163, %v1900
    %1902 = vdwg.mxu0
    %1903 = vmatpush.bf16.msra.mxu0 0
    %1904 = vmatpush.bf16.msra.mxu0 0
    %1905 = vmatpush.bf16.msra.mxu0 0
    %1906 = vmatpush.bf16.msra.mxu0 0
    %1907 = vmatpush.bf16.msra.mxu0 0
    %1908 = vmatpush.bf16.msra.mxu0 0
    %1909 = vmatpush.bf16.msra.mxu0 %v832
    %1910 = vmatpush.bf16.msra.mxu0 %v518
    %1911 = vmatmul.bf16.gmra.mxu0 %v657
    %v1912 = vpop.f32.mrf.mxu0
    %v1913 = vadd.f32 %v148, %v1912
    %v1914 = vpop.f32.mrf.mxu0
    %v1915 = vadd.f32 %v153, %v1914
    %1916 = vmatmul.bf16.gmra.mxu0 %v660
    %v1917 = vpop.f32.mrf.mxu0
    %v1918 = vadd.f32 %v158, %v1917
    %v1919 = vpop.f32.mrf.mxu0
    %v1920 = vadd.f32 %v163, %v1919
    %1921 = vdwg.mxu0
    %1922 = vmatpush.bf16.msra.mxu0 0
    %1923 = vmatpush.bf16.msra.mxu0 0
    %1924 = vmatpush.bf16.msra.mxu0 0
    %1925 = vmatpush.bf16.msra.mxu0 0
    %1926 = vmatpush.bf16.msra.mxu0 0
    %1927 = vmatpush.bf16.msra.mxu0 0
    %1928 = vmatpush.bf16.msra.mxu0 %v835
    %1929 = vmatpush.bf16.msra.mxu0 %v519
    %1930 = vmatmul.bf16.gmra.mxu0 %v657
    %v1931 = vpop.f32.mrf.mxu0
    %v1932 = vadd.f32 %v148, %v1931
    %v1933 = vpop.f32.mrf.mxu0
    %v1934 = vadd.f32 %v153, %v1933
    %1935 = vmatmul.bf16.gmra.mxu0 %v660
    %v1936 = vpop.f32.mrf.mxu0
    %v1937 = vadd.f32 %v158, %v1936
    %v1938 = vpop.f32.mrf.mxu0
    %v1939 = vadd.f32 %v163, %v1938
    %1940 = vdwg.mxu0
    %1941 = vmatpush.bf16.msra.mxu0 0
    %1942 = vmatpush.bf16.msra.mxu0 0
    %1943 = vmatpush.bf16.msra.mxu0 0
    %1944 = vmatpush.bf16.msra.mxu0 0
    %1945 = vmatpush.bf16.msra.mxu0 0
    %1946 = vmatpush.bf16.msra.mxu0 0
    %1947 = vmatpush.bf16.msra.mxu0 %v838
    %1948 = vmatpush.bf16.msra.mxu0 %v520
    %1949 = vmatmul.bf16.gmra.mxu0 %v657
    %v1950 = vpop.f32.mrf.mxu0
    %v1951 = vadd.f32 %v148, %v1950
    %v1952 = vpop.f32.mrf.mxu0
    %v1953 = vadd.f32 %v153, %v1952
    %1954 = vmatmul.bf16.gmra.mxu0 %v660
    %v1955 = vpop.f32.mrf.mxu0
    %v1956 = vadd.f32 %v158, %v1955
    %v1957 = vpop.f32.mrf.mxu0
    %v1958 = vadd.f32 %v163, %v1957
    %1959 = vdwg.mxu0
    %1960 = vmatpush.bf16.msra.mxu0 0
    %1961 = vmatpush.bf16.msra.mxu0 0
    %1962 = vmatpush.bf16.msra.mxu0 0
    %1963 = vmatpush.bf16.msra.mxu0 0
    %1964 = vmatpush.bf16.msra.mxu0 0
    %1965 = vmatpush.bf16.msra.mxu0 0
    %1966 = vmatpush.bf16.msra.mxu0 %v841
    %1967 = vmatpush.bf16.msra.mxu0 %v521
    %1968 = vmatmul.bf16.gmra.mxu0 %v657
    %v1969 = vpop.f32.mrf.mxu0
    %v1970 = vadd.f32 %v148, %v1969
    %v1971 = vpop.f32.mrf.mxu0
    %v1972 = vadd.f32 %v153, %v1971
    %1973 = vmatmul.bf16.gmra.mxu0 %v660
    %v1974 = vpop.f32.mrf.mxu0
    %v1975 = vadd.f32 %v158, %v1974
    %v1976 = vpop.f32.mrf.mxu0
    %v1977 = vadd.f32 %v163, %v1976
    %1978 = vdwg.mxu0
    %1979 = vmatpush.bf16.msra.mxu0 0
    %1980 = vmatpush.bf16.msra.mxu0 0
    %1981 = vmatpush.bf16.msra.mxu0 0
    %1982 = vmatpush.bf16.msra.mxu0 0
    %1983 = vmatpush.bf16.msra.mxu0 0
    %1984 = vmatpush.bf16.msra.mxu0 0
    %1985 = vmatpush.bf16.msra.mxu0 %v844
    %1986 = vmatpush.bf16.msra.mxu0 %v522
    %1987 = vmatmul.bf16.gmra.mxu0 %v657
    %v1988 = vpop.f32.mrf.mxu0
    %v1989 = vadd.f32 %v148, %v1988
    %v1990 = vpop.f32.mrf.mxu0
    %v1991 = vadd.f32 %v153, %v1990
    %1992 = vmatmul.bf16.gmra.mxu0 %v660
    %v1993 = vpop.f32.mrf.mxu0
    %v1994 = vadd.f32 %v158, %v1993
    %v1995 = vpop.f32.mrf.mxu0
    %v1996 = vadd.f32 %v163, %v1995
    %1997 = vdwg.mxu0
    %1998 = vmatpush.bf16.msra.mxu0 0
    %1999 = vmatpush.bf16.msra.mxu0 0
    %2000 = vmatpush.bf16.msra.mxu0 0
    %2001 = vmatpush.bf16.msra.mxu0 0
    %2002 = vmatpush.bf16.msra.mxu0 0
    %2003 = vmatpush.bf16.msra.mxu0 0
    %2004 = vmatpush.bf16.msra.mxu0 %v847
    %2005 = vmatpush.bf16.msra.mxu0 %v523
    %2006 = vmatmul.bf16.gmra.mxu0 %v657
    %v2007 = vpop.f32.mrf.mxu0
    %v2008 = vadd.f32 %v148, %v2007
    %v2009 = vpop.f32.mrf.mxu0
    %v2010 = vadd.f32 %v153, %v2009
    %2011 = vmatmul.bf16.gmra.mxu0 %v660
    %v2012 = vpop.f32.mrf.mxu0
    %v2013 = vadd.f32 %v158, %v2012
    %v2014 = vpop.f32.mrf.mxu0
    %v2015 = vadd.f32 %v163, %v2014
    %2016 = vdwg.mxu0
    %2017 = vmatpush.bf16.msra.mxu0 0
    %2018 = vmatpush.bf16.msra.mxu0 0
    %2019 = vmatpush.bf16.msra.mxu0 0
    %2020 = vmatpush.bf16.msra.mxu0 0
    %2021 = vmatpush.bf16.msra.mxu0 0
    %2022 = vmatpush.bf16.msra.mxu0 0
    %2023 = vmatpush.bf16.msra.mxu0 %v850
    %2024 = vmatpush.bf16.msra.mxu0 %v524
    %2025 = vmatmul.bf16.gmra.mxu0 %v657
    %v2026 = vpop.f32.mrf.mxu0
    %v2027 = vadd.f32 %v148, %v2026
    %v2028 = vpop.f32.mrf.mxu0
    %v2029 = vadd.f32 %v153, %v2028
    %2030 = vmatmul.bf16.gmra.mxu0 %v660
    %v2031 = vpop.f32.mrf.mxu0
    %v2032 = vadd.f32 %v158, %v2031
    %v2033 = vpop.f32.mrf.mxu0
    %v2034 = vadd.f32 %v163, %v2033
    %2035 = vdwg.mxu0
    %2036 = vmatpush.bf16.msra.mxu0 0
    %2037 = vmatpush.bf16.msra.mxu0 0
    %2038 = vmatpush.bf16.msra.mxu0 0
    %2039 = vmatpush.bf16.msra.mxu0 0
    %2040 = vmatpush.bf16.msra.mxu0 0
    %2041 = vmatpush.bf16.msra.mxu0 0
    %2042 = vmatpush.bf16.msra.mxu0 %v853
    %2043 = vmatpush.bf16.msra.mxu0 %v525
    %2044 = vmatmul.bf16.gmra.mxu0 %v657
    %v2045 = vpop.f32.mrf.mxu0
    %v2046 = vadd.f32 %v148, %v2045
    %v2047 = vpop.f32.mrf.mxu0
    %v2048 = vadd.f32 %v153, %v2047
    %2049 = vmatmul.bf16.gmra.mxu0 %v660
    %v2050 = vpop.f32.mrf.mxu0
    %v2051 = vadd.f32 %v158, %v2050
    %v2052 = vpop.f32.mrf.mxu0
    %v2053 = vadd.f32 %v163, %v2052
    %2054 = vdwg.mxu0
    %2055 = vmatpush.bf16.msra.mxu0 0
    %2056 = vmatpush.bf16.msra.mxu0 0
    %2057 = vmatpush.bf16.msra.mxu0 0
    %2058 = vmatpush.bf16.msra.mxu0 0
    %2059 = vmatpush.bf16.msra.mxu0 0
    %2060 = vmatpush.bf16.msra.mxu0 0
    %2061 = vmatpush.bf16.msra.mxu0 %v856
    %2062 = vmatpush.bf16.msra.mxu0 %v526
    %2063 = vmatmul.bf16.gmra.mxu0 %v657
    %v2064 = vpop.f32.mrf.mxu0
    %v2065 = vadd.f32 %v148, %v2064
    %v2066 = vpop.f32.mrf.mxu0
    %v2067 = vadd.f32 %v153, %v2066
    %2068 = vmatmul.bf16.gmra.mxu0 %v660
    %v2069 = vpop.f32.mrf.mxu0
    %v2070 = vadd.f32 %v158, %v2069
    %v2071 = vpop.f32.mrf.mxu0
    %v2072 = vadd.f32 %v163, %v2071
    %2073 = vdwg.mxu0
    %v2074 = vmax.f32 %v868, 0.0
    %v2075 = vmax.f32 %v887, 0.0
    %v2076 = vmax.f32 %v906, 0.0
    %v2077 = vmax.f32 %v925, 0.0
    %v2078 = vmax.f32 %v944, 0.0
    %v2079 = vmax.f32 %v963, 0.0
    %v2080 = vmax.f32 %v982, 0.0
    %v2081 = vmax.f32 %v1001, 0.0
    %v2082 = vmax.f32 %v1020, 0.0
    %v2083 = vmax.f32 %v1039, 0.0
    %v2084 = vmax.f32 %v1058, 0.0
    %v2085 = vmax.f32 %v1077, 0.0
    %v2086 = vmax.f32 %v1096, 0.0
    %v2087 = vmax.f32 %v1115, 0.0
    %v2088 = vmax.f32 %v1134, 0.0
    %v2089 = vmax.f32 %v1153, 0.0
    %v2090 = vmax.f32 %v1172, 0.0
    %v2091 = vmax.f32 %v1191, 0.0
    %v2092 = vmax.f32 %v1210, 0.0
    %v2093 = vmax.f32 %v1229, 0.0
    %v2094 = vmax.f32 %v1248, 0.0
    %v2095 = vmax.f32 %v1267, 0.0
    %v2096 = vmax.f32 %v1286, 0.0
    %v2097 = vmax.f32 %v1305, 0.0
    %v2098 = vmax.f32 %v1324, 0.0
    %v2099 = vmax.f32 %v1343, 0.0
    %v2100 = vmax.f32 %v1362, 0.0
    %v2101 = vmax.f32 %v1381, 0.0
    %v2102 = vmax.f32 %v1400, 0.0
    %v2103 = vmax.f32 %v1419, 0.0
    %v2104 = vmax.f32 %v1438, 0.0
    %v2105 = vmax.f32 %v1457, 0.0
    %v2106 = vmax.f32 %v1476, 0.0
    %v2107 = vmax.f32 %v1495, 0.0
    %v2108 = vmax.f32 %v1514, 0.0
    %v2109 = vmax.f32 %v1533, 0.0
    %v2110 = vmax.f32 %v1552, 0.0
    %v2111 = vmax.f32 %v1571, 0.0
    %v2112 = vmax.f32 %v1590, 0.0
    %v2113 = vmax.f32 %v1609, 0.0
    %v2114 = vmax.f32 %v1628, 0.0
    %v2115 = vmax.f32 %v1647, 0.0
    %v2116 = vmax.f32 %v1666, 0.0
    %v2117 = vmax.f32 %v1685, 0.0
    %v2118 = vmax.f32 %v1704, 0.0
    %v2119 = vmax.f32 %v1723, 0.0
    %v2120 = vmax.f32 %v1742, 0.0
    %v2121 = vmax.f32 %v1761, 0.0
    %v2122 = vmax.f32 %v1780, 0.0
    %v2123 = vmax.f32 %v1799, 0.0
    %v2124 = vmax.f32 %v1818, 0.0
    %v2125 = vmax.f32 %v1837, 0.0
    %v2126 = vmax.f32 %v1856, 0.0
    %v2127 = vmax.f32 %v1875, 0.0
    %v2128 = vmax.f32 %v1894, 0.0
    %v2129 = vmax.f32 %v1913, 0.0
    %v2130 = vmax.f32 %v1932, 0.0
    %v2131 = vmax.f32 %v1951, 0.0
    %v2132 = vmax.f32 %v1970, 0.0
    %v2133 = vmax.f32 %v1989, 0.0
    %v2134 = vmax.f32 %v2008, 0.0
    %v2135 = vmax.f32 %v2027, 0.0
    %v2136 = vmax.f32 %v2046, 0.0
    %v2137 = vmax.f32 %v2065, 0.0
    %v2138 = vmax.f32 %v870, 0.0
    %v2139 = vmax.f32 %v889, 0.0
    %v2140 = vmax.f32 %v908, 0.0
    %v2141 = vmax.f32 %v927, 0.0
    %v2142 = vmax.f32 %v946, 0.0
    %v2143 = vmax.f32 %v965, 0.0
    %v2144 = vmax.f32 %v984, 0.0
    %v2145 = vmax.f32 %v1003, 0.0
    %v2146 = vmax.f32 %v1022, 0.0
    %v2147 = vmax.f32 %v1041, 0.0
    %v2148 = vmax.f32 %v1060, 0.0
    %v2149 = vmax.f32 %v1079, 0.0
    %v2150 = vmax.f32 %v1098, 0.0
    %v2151 = vmax.f32 %v1117, 0.0
    %v2152 = vmax.f32 %v1136, 0.0
    %v2153 = vmax.f32 %v1155, 0.0
    %v2154 = vmax.f32 %v1174, 0.0
    %v2155 = vmax.f32 %v1193, 0.0
    %v2156 = vmax.f32 %v1212, 0.0
    %v2157 = vmax.f32 %v1231, 0.0
    %v2158 = vmax.f32 %v1250, 0.0
    %v2159 = vmax.f32 %v1269, 0.0
    %v2160 = vmax.f32 %v1288, 0.0
    %v2161 = vmax.f32 %v1307, 0.0
    %v2162 = vmax.f32 %v1326, 0.0
    %v2163 = vmax.f32 %v1345, 0.0
    %v2164 = vmax.f32 %v1364, 0.0
    %v2165 = vmax.f32 %v1383, 0.0
    %v2166 = vmax.f32 %v1402, 0.0
    %v2167 = vmax.f32 %v1421, 0.0
    %v2168 = vmax.f32 %v1440, 0.0
    %v2169 = vmax.f32 %v1459, 0.0
    %v2170 = vmax.f32 %v1478, 0.0
    %v2171 = vmax.f32 %v1497, 0.0
    %v2172 = vmax.f32 %v1516, 0.0
    %v2173 = vmax.f32 %v1535, 0.0
    %v2174 = vmax.f32 %v1554, 0.0
    %v2175 = vmax.f32 %v1573, 0.0
    %v2176 = vmax.f32 %v1592, 0.0
    %v2177 = vmax.f32 %v1611, 0.0
    %v2178 = vmax.f32 %v1630, 0.0
    %v2179 = vmax.f32 %v1649, 0.0
    %v2180 = vmax.f32 %v1668, 0.0
    %v2181 = vmax.f32 %v1687, 0.0
    %v2182 = vmax.f32 %v1706, 0.0
    %v2183 = vmax.f32 %v1725, 0.0
    %v2184 = vmax.f32 %v1744, 0.0
    %v2185 = vmax.f32 %v1763, 0.0
    %v2186 = vmax.f32 %v1782, 0.0
    %v2187 = vmax.f32 %v1801, 0.0
    %v2188 = vmax.f32 %v1820, 0.0
    %v2189 = vmax.f32 %v1839, 0.0
    %v2190 = vmax.f32 %v1858, 0.0
    %v2191 = vmax.f32 %v1877, 0.0
    %v2192 = vmax.f32 %v1896, 0.0
    %v2193 = vmax.f32 %v1915, 0.0
    %v2194 = vmax.f32 %v1934, 0.0
    %v2195 = vmax.f32 %v1953, 0.0
    %v2196 = vmax.f32 %v1972, 0.0
    %v2197 = vmax.f32 %v1991, 0.0
    %v2198 = vmax.f32 %v2010, 0.0
    %v2199 = vmax.f32 %v2029, 0.0
    %v2200 = vmax.f32 %v2048, 0.0
    %v2201 = vmax.f32 %v2067, 0.0
    %v2202 = vmax.f32 %v873, 0.0
    %v2203 = vmax.f32 %v892, 0.0
    %v2204 = vmax.f32 %v911, 0.0
    %v2205 = vmax.f32 %v930, 0.0
    %v2206 = vmax.f32 %v949, 0.0
    %v2207 = vmax.f32 %v968, 0.0
    %v2208 = vmax.f32 %v987, 0.0
    %v2209 = vmax.f32 %v1006, 0.0
    %v2210 = vmax.f32 %v1025, 0.0
    %v2211 = vmax.f32 %v1044, 0.0
    %v2212 = vmax.f32 %v1063, 0.0
    %v2213 = vmax.f32 %v1082, 0.0
    %v2214 = vmax.f32 %v1101, 0.0
    %v2215 = vmax.f32 %v1120, 0.0
    %v2216 = vmax.f32 %v1139, 0.0
    %v2217 = vmax.f32 %v1158, 0.0
    %v2218 = vmax.f32 %v1177, 0.0
    %v2219 = vmax.f32 %v1196, 0.0
    %v2220 = vmax.f32 %v1215, 0.0
    %v2221 = vmax.f32 %v1234, 0.0
    %v2222 = vmax.f32 %v1253, 0.0
    %v2223 = vmax.f32 %v1272, 0.0
    %v2224 = vmax.f32 %v1291, 0.0
    %v2225 = vmax.f32 %v1310, 0.0
    %v2226 = vmax.f32 %v1329, 0.0
    %v2227 = vmax.f32 %v1348, 0.0
    %v2228 = vmax.f32 %v1367, 0.0
    %v2229 = vmax.f32 %v1386, 0.0
    %v2230 = vmax.f32 %v1405, 0.0
    %v2231 = vmax.f32 %v1424, 0.0
    %v2232 = vmax.f32 %v1443, 0.0
    %v2233 = vmax.f32 %v1462, 0.0
    %v2234 = vmax.f32 %v1481, 0.0
    %v2235 = vmax.f32 %v1500, 0.0
    %v2236 = vmax.f32 %v1519, 0.0
    %v2237 = vmax.f32 %v1538, 0.0
    %v2238 = vmax.f32 %v1557, 0.0
    %v2239 = vmax.f32 %v1576, 0.0
    %v2240 = vmax.f32 %v1595, 0.0
    %v2241 = vmax.f32 %v1614, 0.0
    %v2242 = vmax.f32 %v1633, 0.0
    %v2243 = vmax.f32 %v1652, 0.0
    %v2244 = vmax.f32 %v1671, 0.0
    %v2245 = vmax.f32 %v1690, 0.0
    %v2246 = vmax.f32 %v1709, 0.0
    %v2247 = vmax.f32 %v1728, 0.0
    %v2248 = vmax.f32 %v1747, 0.0
    %v2249 = vmax.f32 %v1766, 0.0
    %v2250 = vmax.f32 %v1785, 0.0
    %v2251 = vmax.f32 %v1804, 0.0
    %v2252 = vmax.f32 %v1823, 0.0
    %v2253 = vmax.f32 %v1842, 0.0
    %v2254 = vmax.f32 %v1861, 0.0
    %v2255 = vmax.f32 %v1880, 0.0
    %v2256 = vmax.f32 %v1899, 0.0
    %v2257 = vmax.f32 %v1918, 0.0
    %v2258 = vmax.f32 %v1937, 0.0
    %v2259 = vmax.f32 %v1956, 0.0
    %v2260 = vmax.f32 %v1975, 0.0
    %v2261 = vmax.f32 %v1994, 0.0
    %v2262 = vmax.f32 %v2013, 0.0
    %v2263 = vmax.f32 %v2032, 0.0
    %v2264 = vmax.f32 %v2051, 0.0
    %v2265 = vmax.f32 %v2070, 0.0
    %v2266 = vmax.f32 %v875, 0.0
    %v2267 = vmax.f32 %v894, 0.0
    %v2268 = vmax.f32 %v913, 0.0
    %v2269 = vmax.f32 %v932, 0.0
    %v2270 = vmax.f32 %v951, 0.0
    %v2271 = vmax.f32 %v970, 0.0
    %v2272 = vmax.f32 %v989, 0.0
    %v2273 = vmax.f32 %v1008, 0.0
    %v2274 = vmax.f32 %v1027, 0.0
    %v2275 = vmax.f32 %v1046, 0.0
    %v2276 = vmax.f32 %v1065, 0.0
    %v2277 = vmax.f32 %v1084, 0.0
    %v2278 = vmax.f32 %v1103, 0.0
    %v2279 = vmax.f32 %v1122, 0.0
    %v2280 = vmax.f32 %v1141, 0.0
    %v2281 = vmax.f32 %v1160, 0.0
    %v2282 = vmax.f32 %v1179, 0.0
    %v2283 = vmax.f32 %v1198, 0.0
    %v2284 = vmax.f32 %v1217, 0.0
    %v2285 = vmax.f32 %v1236, 0.0
    %v2286 = vmax.f32 %v1255, 0.0
    %v2287 = vmax.f32 %v1274, 0.0
    %v2288 = vmax.f32 %v1293, 0.0
    %v2289 = vmax.f32 %v1312, 0.0
    %v2290 = vmax.f32 %v1331, 0.0
    %v2291 = vmax.f32 %v1350, 0.0
    %v2292 = vmax.f32 %v1369, 0.0
    %v2293 = vmax.f32 %v1388, 0.0
    %v2294 = vmax.f32 %v1407, 0.0
    %v2295 = vmax.f32 %v1426, 0.0
    %v2296 = vmax.f32 %v1445, 0.0
    %v2297 = vmax.f32 %v1464, 0.0
    %v2298 = vmax.f32 %v1483, 0.0
    %v2299 = vmax.f32 %v1502, 0.0
    %v2300 = vmax.f32 %v1521, 0.0
    %v2301 = vmax.f32 %v1540, 0.0
    %v2302 = vmax.f32 %v1559, 0.0
    %v2303 = vmax.f32 %v1578, 0.0
    %v2304 = vmax.f32 %v1597, 0.0
    %v2305 = vmax.f32 %v1616, 0.0
    %v2306 = vmax.f32 %v1635, 0.0
    %v2307 = vmax.f32 %v1654, 0.0
    %v2308 = vmax.f32 %v1673, 0.0
    %v2309 = vmax.f32 %v1692, 0.0
    %v2310 = vmax.f32 %v1711, 0.0
    %v2311 = vmax.f32 %v1730, 0.0
    %v2312 = vmax.f32 %v1749, 0.0
    %v2313 = vmax.f32 %v1768, 0.0
    %v2314 = vmax.f32 %v1787, 0.0
    %v2315 = vmax.f32 %v1806, 0.0
    %v2316 = vmax.f32 %v1825, 0.0
    %v2317 = vmax.f32 %v1844, 0.0
    %v2318 = vmax.f32 %v1863, 0.0
    %v2319 = vmax.f32 %v1882, 0.0
    %v2320 = vmax.f32 %v1901, 0.0
    %v2321 = vmax.f32 %v1920, 0.0
    %v2322 = vmax.f32 %v1939, 0.0
    %v2323 = vmax.f32 %v1958, 0.0
    %v2324 = vmax.f32 %v1977, 0.0
    %v2325 = vmax.f32 %v1996, 0.0
    %v2326 = vmax.f32 %v2015, 0.0
    %v2327 = vmax.f32 %v2034, 0.0
    %v2328 = vmax.f32 %v2053, 0.0
    %v2329 = vmax.f32 %v2072, 0.0
    %v2330 = vld [vmem:[%s4] sm:$0xf]
    %v2331 = vld [vmem:[%s4 + $0x4] sm:$0xf]
    %v2332 = vld [vmem:[%s4 + $0x8] sm:$0xf]
    %v2333 = vld [vmem:[%s4 + $0xc] sm:$0xf]
    %v2334 = vpack.c.bf16 %v2138, %v2074
    %v2335 = vpack.c.bf16 %v2139, %v2075
    %v2336 = vpack.c.bf16 %v2140, %v2076
    %v2337 = vpack.c.bf16 %v2141, %v2077
    %v2338 = vpack.c.bf16 %v2142, %v2078
    %v2339 = vpack.c.bf16 %v2143, %v2079
    %v2340 = vpack.c.bf16 %v2144, %v2080
    %v2341 = vpack.c.bf16 %v2145, %v2081
    %v2342 = vpack.c.bf16 %v2146, %v2082
    %v2343 = vpack.c.bf16 %v2147, %v2083
    %v2344 = vpack.c.bf16 %v2148, %v2084
    %v2345 = vpack.c.bf16 %v2149, %v2085
    %v2346 = vpack.c.bf16 %v2150, %v2086
    %v2347 = vpack.c.bf16 %v2151, %v2087
    %v2348 = vpack.c.bf16 %v2152, %v2088
    %v2349 = vpack.c.bf16 %v2153, %v2089
    %v2350 = vpack.c.bf16 %v2154, %v2090
    %v2351 = vpack.c.bf16 %v2155, %v2091
    %v2352 = vpack.c.bf16 %v2156, %v2092
    %v2353 = vpack.c.bf16 %v2157, %v2093
    %v2354 = vpack.c.bf16 %v2158, %v2094
    %v2355 = vpack.c.bf16 %v2159, %v2095
    %v2356 = vpack.c.bf16 %v2160, %v2096
    %v2357 = vpack.c.bf16 %v2161, %v2097
    %v2358 = vpack.c.bf16 %v2162, %v2098
    %v2359 = vpack.c.bf16 %v2163, %v2099
    %v2360 = vpack.c.bf16 %v2164, %v2100
    %v2361 = vpack.c.bf16 %v2165, %v2101
    %v2362 = vpack.c.bf16 %v2166, %v2102
    %v2363 = vpack.c.bf16 %v2167, %v2103
    %v2364 = vpack.c.bf16 %v2168, %v2104
    %v2365 = vpack.c.bf16 %v2169, %v2105
    %v2366 = vpack.c.bf16 %v2170, %v2106
    %v2367 = vpack.c.bf16 %v2171, %v2107
    %v2368 = vpack.c.bf16 %v2172, %v2108
    %v2369 = vpack.c.bf16 %v2173, %v2109
    %v2370 = vpack.c.bf16 %v2174, %v2110
    %v2371 = vpack.c.bf16 %v2175, %v2111
    %v2372 = vpack.c.bf16 %v2176, %v2112
    %v2373 = vpack.c.bf16 %v2177, %v2113
    %v2374 = vpack.c.bf16 %v2178, %v2114
    %v2375 = vpack.c.bf16 %v2179, %v2115
    %v2376 = vpack.c.bf16 %v2180, %v2116
    %v2377 = vpack.c.bf16 %v2181, %v2117
    %v2378 = vpack.c.bf16 %v2182, %v2118
    %v2379 = vpack.c.bf16 %v2183, %v2119
    %v2380 = vpack.c.bf16 %v2184, %v2120
    %v2381 = vpack.c.bf16 %v2185, %v2121
    %v2382 = vpack.c.bf16 %v2186, %v2122
    %v2383 = vpack.c.bf16 %v2187, %v2123
    %v2384 = vpack.c.bf16 %v2188, %v2124
    %v2385 = vpack.c.bf16 %v2189, %v2125
    %v2386 = vpack.c.bf16 %v2190, %v2126
    %v2387 = vpack.c.bf16 %v2191, %v2127
    %v2388 = vpack.c.bf16 %v2192, %v2128
    %v2389 = vpack.c.bf16 %v2193, %v2129
    %v2390 = vpack.c.bf16 %v2194, %v2130
    %v2391 = vpack.c.bf16 %v2195, %v2131
    %v2392 = vpack.c.bf16 %v2196, %v2132
    %v2393 = vpack.c.bf16 %v2197, %v2133
    %v2394 = vpack.c.bf16 %v2198, %v2134
    %v2395 = vpack.c.bf16 %v2199, %v2135
    %v2396 = vpack.c.bf16 %v2200, %v2136
    %v2397 = vpack.c.bf16 %v2201, %v2137
    %v2398 = vpack.c.bf16 %v2266, %v2202
    %v2399 = vpack.c.bf16 %v2267, %v2203
    %v2400 = vpack.c.bf16 %v2268, %v2204
    %v2401 = vpack.c.bf16 %v2269, %v2205
    %v2402 = vpack.c.bf16 %v2270, %v2206
    %v2403 = vpack.c.bf16 %v2271, %v2207
    %v2404 = vpack.c.bf16 %v2272, %v2208
    %v2405 = vpack.c.bf16 %v2273, %v2209
    %v2406 = vpack.c.bf16 %v2274, %v2210
    %v2407 = vpack.c.bf16 %v2275, %v2211
    %v2408 = vpack.c.bf16 %v2276, %v2212
    %v2409 = vpack.c.bf16 %v2277, %v2213
    %v2410 = vpack.c.bf16 %v2278, %v2214
    %v2411 = vpack.c.bf16 %v2279, %v2215
    %v2412 = vpack.c.bf16 %v2280, %v2216
    %v2413 = vpack.c.bf16 %v2281, %v2217
    %v2414 = vpack.c.bf16 %v2282, %v2218
    %v2415 = vpack.c.bf16 %v2283, %v2219
    %v2416 = vpack.c.bf16 %v2284, %v2220
    %v2417 = vpack.c.bf16 %v2285, %v2221
    %v2418 = vpack.c.bf16 %v2286, %v2222
    %v2419 = vpack.c.bf16 %v2287, %v2223
    %v2420 = vpack.c.bf16 %v2288, %v2224
    %v2421 = vpack.c.bf16 %v2289, %v2225
    %v2422 = vpack.c.bf16 %v2290, %v2226
    %v2423 = vpack.c.bf16 %v2291, %v2227
    %v2424 = vpack.c.bf16 %v2292, %v2228
    %v2425 = vpack.c.bf16 %v2293, %v2229
    %v2426 = vpack.c.bf16 %v2294, %v2230
    %v2427 = vpack.c.bf16 %v2295, %v2231
    %v2428 = vpack.c.bf16 %v2296, %v2232
    %v2429 = vpack.c.bf16 %v2297, %v2233
    %v2430 = vpack.c.bf16 %v2298, %v2234
    %v2431 = vpack.c.bf16 %v2299, %v2235
    %v2432 = vpack.c.bf16 %v2300, %v2236
    %v2433 = vpack.c.bf16 %v2301, %v2237
    %v2434 = vpack.c.bf16 %v2302, %v2238
    %v2435 = vpack.c.bf16 %v2303, %v2239
    %v2436 = vpack.c.bf16 %v2304, %v2240
    %v2437 = vpack.c.bf16 %v2305, %v2241
    %v2438 = vpack.c.bf16 %v2306, %v2242
    %v2439 = vpack.c.bf16 %v2307, %v2243
    %v2440 = vpack.c.bf16 %v2308, %v2244
    %v2441 = vpack.c.bf16 %v2309, %v2245
    %v2442 = vpack.c.bf16 %v2310, %v2246
    %v2443 = vpack.c.bf16 %v2311, %v2247
    %v2444 = vpack.c.bf16 %v2312, %v2248
    %v2445 = vpack.c.bf16 %v2313, %v2249
    %v2446 = vpack.c.bf16 %v2314, %v2250
    %v2447 = vpack.c.bf16 %v2315, %v2251
    %v2448 = vpack.c.bf16 %v2316, %v2252
    %v2449 = vpack.c.bf16 %v2317, %v2253
    %v2450 = vpack.c.bf16 %v2318, %v2254
    %v2451 = vpack.c.bf16 %v2319, %v2255
    %v2452 = vpack.c.bf16 %v2320, %v2256
    %v2453 = vpack.c.bf16 %v2321, %v2257
    %v2454 = vpack.c.bf16 %v2322, %v2258
    %v2455 = vpack.c.bf16 %v2323, %v2259
    %v2456 = vpack.c.bf16 %v2324, %v2260
    %v2457 = vpack.c.bf16 %v2325, %v2261
    %v2458 = vpack.c.bf16 %v2326, %v2262
    %v2459 = vpack.c.bf16 %v2327, %v2263
    %v2460 = vpack.c.bf16 %v2328, %v2264
    %v2461 = vpack.c.bf16 %v2329, %v2265
    %v2466 = vunpack.c.l.b16 %v2330
    %v2467 = vunpack.c.l.b16 %v2331
    %v2468 = vunpack.c.l.b16 %v2332
    %v2469 = vunpack.c.l.b16 %v2333
    %v2470 = vpack.c.b16 %v2467, %v2466
    %v2471 = vpack.c.b16 %v2469, %v2468
    %vm2472 = vcmask 261120
    %v2474 = vsel %vm2472, %v2470, 0
    %v2477 = vsel %vm2472, %v2471, 0
    %2479 = vmatpush.bf16.msra.mxu0 0
    %2480 = vmatpush.bf16.msra.mxu0 0
    %2481 = vmatpush.bf16.msra.mxu0 0
    %2482 = vmatpush.bf16.msra.mxu0 0
    %2483 = vmatpush.bf16.msra.mxu0 0
    %2484 = vmatpush.bf16.msra.mxu0 0
    %2485 = vmatpush.bf16.msra.mxu0 %v2398
    %2486 = vmatpush.bf16.msra.mxu0 %v2334
    %2487 = vmatmul.bf16.gmra.mxu0 %v2474
    %v2488 = vpop.f32.mrf.mxu0
    %v2489 = vadd.f32 0.0, %v2488
    %v2490 = vpop.f32.mrf.mxu0
    %v2491 = vadd.f32 0.0, %v2490
    %2492 = vmatmul.bf16.gmra.mxu0 %v2477
    %v2493 = vpop.f32.mrf.mxu0
    %v2494 = vadd.f32 0.0, %v2493
    %v2495 = vpop.f32.mrf.mxu0
    %v2496 = vadd.f32 0.0, %v2495
    %2497 = vdwg.mxu0
    %2498 = vmatpush.bf16.msra.mxu0 0
    %2499 = vmatpush.bf16.msra.mxu0 0
    %2500 = vmatpush.bf16.msra.mxu0 0
    %2501 = vmatpush.bf16.msra.mxu0 0
    %2502 = vmatpush.bf16.msra.mxu0 0
    %2503 = vmatpush.bf16.msra.mxu0 0
    %2504 = vmatpush.bf16.msra.mxu0 %v2399
    %2505 = vmatpush.bf16.msra.mxu0 %v2335
    %2506 = vmatmul.bf16.gmra.mxu0 %v2474
    %v2507 = vpop.f32.mrf.mxu0
    %v2508 = vadd.f32 0.0, %v2507
    %v2509 = vpop.f32.mrf.mxu0
    %v2510 = vadd.f32 0.0, %v2509
    %2511 = vmatmul.bf16.gmra.mxu0 %v2477
    %v2512 = vpop.f32.mrf.mxu0
    %v2513 = vadd.f32 0.0, %v2512
    %v2514 = vpop.f32.mrf.mxu0
    %v2515 = vadd.f32 0.0, %v2514
    %2516 = vdwg.mxu0
    %2517 = vmatpush.bf16.msra.mxu0 0
    %2518 = vmatpush.bf16.msra.mxu0 0
    %2519 = vmatpush.bf16.msra.mxu0 0
    %2520 = vmatpush.bf16.msra.mxu0 0
    %2521 = vmatpush.bf16.msra.mxu0 0
    %2522 = vmatpush.bf16.msra.mxu0 0
    %2523 = vmatpush.bf16.msra.mxu0 %v2400
    %2524 = vmatpush.bf16.msra.mxu0 %v2336
    %2525 = vmatmul.bf16.gmra.mxu0 %v2474
    %v2526 = vpop.f32.mrf.mxu0
    %v2527 = vadd.f32 0.0, %v2526
    %v2528 = vpop.f32.mrf.mxu0
    %v2529 = vadd.f32 0.0, %v2528
    %2530 = vmatmul.bf16.gmra.mxu0 %v2477
    %v2531 = vpop.f32.mrf.mxu0
    %v2532 = vadd.f32 0.0, %v2531
    %v2533 = vpop.f32.mrf.mxu0
    %v2534 = vadd.f32 0.0, %v2533
    %2535 = vdwg.mxu0
    %2536 = vmatpush.bf16.msra.mxu0 0
    %2537 = vmatpush.bf16.msra.mxu0 0
    %2538 = vmatpush.bf16.msra.mxu0 0
    %2539 = vmatpush.bf16.msra.mxu0 0
    %2540 = vmatpush.bf16.msra.mxu0 0
    %2541 = vmatpush.bf16.msra.mxu0 0
    %2542 = vmatpush.bf16.msra.mxu0 %v2401
    %2543 = vmatpush.bf16.msra.mxu0 %v2337
    %2544 = vmatmul.bf16.gmra.mxu0 %v2474
    %v2545 = vpop.f32.mrf.mxu0
    %v2546 = vadd.f32 0.0, %v2545
    %v2547 = vpop.f32.mrf.mxu0
    %v2548 = vadd.f32 0.0, %v2547
    %2549 = vmatmul.bf16.gmra.mxu0 %v2477
    %v2550 = vpop.f32.mrf.mxu0
    %v2551 = vadd.f32 0.0, %v2550
    %v2552 = vpop.f32.mrf.mxu0
    %v2553 = vadd.f32 0.0, %v2552
    %2554 = vdwg.mxu0
    %2555 = vmatpush.bf16.msra.mxu0 0
    %2556 = vmatpush.bf16.msra.mxu0 0
    %2557 = vmatpush.bf16.msra.mxu0 0
    %2558 = vmatpush.bf16.msra.mxu0 0
    %2559 = vmatpush.bf16.msra.mxu0 0
    %2560 = vmatpush.bf16.msra.mxu0 0
    %2561 = vmatpush.bf16.msra.mxu0 %v2402
    %2562 = vmatpush.bf16.msra.mxu0 %v2338
    %2563 = vmatmul.bf16.gmra.mxu0 %v2474
    %v2564 = vpop.f32.mrf.mxu0
    %v2565 = vadd.f32 0.0, %v2564
    %v2566 = vpop.f32.mrf.mxu0
    %v2567 = vadd.f32 0.0, %v2566
    %2568 = vmatmul.bf16.gmra.mxu0 %v2477
    %v2569 = vpop.f32.mrf.mxu0
    %v2570 = vadd.f32 0.0, %v2569
    %v2571 = vpop.f32.mrf.mxu0
    %v2572 = vadd.f32 0.0, %v2571
    %2573 = vdwg.mxu0
    %2574 = vmatpush.bf16.msra.mxu0 0
    %2575 = vmatpush.bf16.msra.mxu0 0
    %2576 = vmatpush.bf16.msra.mxu0 0
    %2577 = vmatpush.bf16.msra.mxu0 0
    %2578 = vmatpush.bf16.msra.mxu0 0
    %2579 = vmatpush.bf16.msra.mxu0 0
    %2580 = vmatpush.bf16.msra.mxu0 %v2403
    %2581 = vmatpush.bf16.msra.mxu0 %v2339
    %2582 = vmatmul.bf16.gmra.mxu0 %v2474
    %v2583 = vpop.f32.mrf.mxu0
    %v2584 = vadd.f32 0.0, %v2583
    %v2585 = vpop.f32.mrf.mxu0
    %v2586 = vadd.f32 0.0, %v2585
    %2587 = vmatmul.bf16.gmra.mxu0 %v2477
    %v2588 = vpop.f32.mrf.mxu0
    %v2589 = vadd.f32 0.0, %v2588
    %v2590 = vpop.f32.mrf.mxu0
    %v2591 = vadd.f32 0.0, %v2590
    %2592 = vdwg.mxu0
    %2593 = vmatpush.bf16.msra.mxu0 0
    %2594 = vmatpush.bf16.msra.mxu0 0
    %2595 = vmatpush.bf16.msra.mxu0 0
    %2596 = vmatpush.bf16.msra.mxu0 0
    %2597 = vmatpush.bf16.msra.mxu0 0
    %2598 = vmatpush.bf16.msra.mxu0 0
    %2599 = vmatpush.bf16.msra.mxu0 %v2404
    %2600 = vmatpush.bf16.msra.mxu0 %v2340
    %2601 = vmatmul.bf16.gmra.mxu0 %v2474
    %v2602 = vpop.f32.mrf.mxu0
    %v2603 = vadd.f32 0.0, %v2602
    %v2604 = vpop.f32.mrf.mxu0
    %v2605 = vadd.f32 0.0, %v2604
    %2606 = vmatmul.bf16.gmra.mxu0 %v2477
    %v2607 = vpop.f32.mrf.mxu0
    %v2608 = vadd.f32 0.0, %v2607
    %v2609 = vpop.f32.mrf.mxu0
    %v2610 = vadd.f32 0.0, %v2609
    %2611 = vdwg.mxu0
    %2612 = vmatpush.bf16.msra.mxu0 0
    %2613 = vmatpush.bf16.msra.mxu0 0
    %2614 = vmatpush.bf16.msra.mxu0 0
    %2615 = vmatpush.bf16.msra.mxu0 0
    %2616 = vmatpush.bf16.msra.mxu0 0
    %2617 = vmatpush.bf16.msra.mxu0 0
    %2618 = vmatpush.bf16.msra.mxu0 %v2405
    %2619 = vmatpush.bf16.msra.mxu0 %v2341
    %2620 = vmatmul.bf16.gmra.mxu0 %v2474
    %v2621 = vpop.f32.mrf.mxu0
    %v2622 = vadd.f32 0.0, %v2621
    %v2623 = vpop.f32.mrf.mxu0
    %v2624 = vadd.f32 0.0, %v2623
    %2625 = vmatmul.bf16.gmra.mxu0 %v2477
    %v2626 = vpop.f32.mrf.mxu0
    %v2627 = vadd.f32 0.0, %v2626
    %v2628 = vpop.f32.mrf.mxu0
    %v2629 = vadd.f32 0.0, %v2628
    %2630 = vdwg.mxu0
    %2631 = vmatpush.bf16.msra.mxu0 0
    %2632 = vmatpush.bf16.msra.mxu0 0
    %2633 = vmatpush.bf16.msra.mxu0 0
    %2634 = vmatpush.bf16.msra.mxu0 0
    %2635 = vmatpush.bf16.msra.mxu0 0
    %2636 = vmatpush.bf16.msra.mxu0 0
    %2637 = vmatpush.bf16.msra.mxu0 %v2406
    %2638 = vmatpush.bf16.msra.mxu0 %v2342
    %2639 = vmatmul.bf16.gmra.mxu0 %v2474
    %v2640 = vpop.f32.mrf.mxu0
    %v2641 = vadd.f32 0.0, %v2640
    %v2642 = vpop.f32.mrf.mxu0
    %v2643 = vadd.f32 0.0, %v2642
    %2644 = vmatmul.bf16.gmra.mxu0 %v2477
    %v2645 = vpop.f32.mrf.mxu0
    %v2646 = vadd.f32 0.0, %v2645
    %v2647 = vpop.f32.mrf.mxu0
    %v2648 = vadd.f32 0.0, %v2647
    %2649 = vdwg.mxu0
    %2650 = vmatpush.bf16.msra.mxu0 0
    %2651 = vmatpush.bf16.msra.mxu0 0
    %2652 = vmatpush.bf16.msra.mxu0 0
    %2653 = vmatpush.bf16.msra.mxu0 0
    %2654 = vmatpush.bf16.msra.mxu0 0
    %2655 = vmatpush.bf16.msra.mxu0 0
    %2656 = vmatpush.bf16.msra.mxu0 %v2407
    %2657 = vmatpush.bf16.msra.mxu0 %v2343
    %2658 = vmatmul.bf16.gmra.mxu0 %v2474
    %v2659 = vpop.f32.mrf.mxu0
    %v2660 = vadd.f32 0.0, %v2659
    %v2661 = vpop.f32.mrf.mxu0
    %v2662 = vadd.f32 0.0, %v2661
    %2663 = vmatmul.bf16.gmra.mxu0 %v2477
    %v2664 = vpop.f32.mrf.mxu0
    %v2665 = vadd.f32 0.0, %v2664
    %v2666 = vpop.f32.mrf.mxu0
    %v2667 = vadd.f32 0.0, %v2666
    %2668 = vdwg.mxu0
    %2669 = vmatpush.bf16.msra.mxu0 0
    %2670 = vmatpush.bf16.msra.mxu0 0
    %2671 = vmatpush.bf16.msra.mxu0 0
    %2672 = vmatpush.bf16.msra.mxu0 0
    %2673 = vmatpush.bf16.msra.mxu0 0
    %2674 = vmatpush.bf16.msra.mxu0 0
    %2675 = vmatpush.bf16.msra.mxu0 %v2408
    %2676 = vmatpush.bf16.msra.mxu0 %v2344
    %2677 = vmatmul.bf16.gmra.mxu0 %v2474
    %v2678 = vpop.f32.mrf.mxu0
    %v2679 = vadd.f32 0.0, %v2678
    %v2680 = vpop.f32.mrf.mxu0
    %v2681 = vadd.f32 0.0, %v2680
    %2682 = vmatmul.bf16.gmra.mxu0 %v2477
    %v2683 = vpop.f32.mrf.mxu0
    %v2684 = vadd.f32 0.0, %v2683
    %v2685 = vpop.f32.mrf.mxu0
    %v2686 = vadd.f32 0.0, %v2685
    %2687 = vdwg.mxu0
    %2688 = vmatpush.bf16.msra.mxu0 0
    %2689 = vmatpush.bf16.msra.mxu0 0
    %2690 = vmatpush.bf16.msra.mxu0 0
    %2691 = vmatpush.bf16.msra.mxu0 0
    %2692 = vmatpush.bf16.msra.mxu0 0
    %2693 = vmatpush.bf16.msra.mxu0 0
    %2694 = vmatpush.bf16.msra.mxu0 %v2409
    %2695 = vmatpush.bf16.msra.mxu0 %v2345
    %2696 = vmatmul.bf16.gmra.mxu0 %v2474
    %v2697 = vpop.f32.mrf.mxu0
    %v2698 = vadd.f32 0.0, %v2697
    %v2699 = vpop.f32.mrf.mxu0
    %v2700 = vadd.f32 0.0, %v2699
    %2701 = vmatmul.bf16.gmra.mxu0 %v2477
    %v2702 = vpop.f32.mrf.mxu0
    %v2703 = vadd.f32 0.0, %v2702
    %v2704 = vpop.f32.mrf.mxu0
    %v2705 = vadd.f32 0.0, %v2704
    %2706 = vdwg.mxu0
    %2707 = vmatpush.bf16.msra.mxu0 0
    %2708 = vmatpush.bf16.msra.mxu0 0
    %2709 = vmatpush.bf16.msra.mxu0 0
    %2710 = vmatpush.bf16.msra.mxu0 0
    %2711 = vmatpush.bf16.msra.mxu0 0
    %2712 = vmatpush.bf16.msra.mxu0 0
    %2713 = vmatpush.bf16.msra.mxu0 %v2410
    %2714 = vmatpush.bf16.msra.mxu0 %v2346
    %2715 = vmatmul.bf16.gmra.mxu0 %v2474
    %v2716 = vpop.f32.mrf.mxu0
    %v2717 = vadd.f32 0.0, %v2716
    %v2718 = vpop.f32.mrf.mxu0
    %v2719 = vadd.f32 0.0, %v2718
    %2720 = vmatmul.bf16.gmra.mxu0 %v2477
    %v2721 = vpop.f32.mrf.mxu0
    %v2722 = vadd.f32 0.0, %v2721
    %v2723 = vpop.f32.mrf.mxu0
    %v2724 = vadd.f32 0.0, %v2723
    %2725 = vdwg.mxu0
    %2726 = vmatpush.bf16.msra.mxu0 0
    %2727 = vmatpush.bf16.msra.mxu0 0
    %2728 = vmatpush.bf16.msra.mxu0 0
    %2729 = vmatpush.bf16.msra.mxu0 0
    %2730 = vmatpush.bf16.msra.mxu0 0
    %2731 = vmatpush.bf16.msra.mxu0 0
    %2732 = vmatpush.bf16.msra.mxu0 %v2411
    %2733 = vmatpush.bf16.msra.mxu0 %v2347
    %2734 = vmatmul.bf16.gmra.mxu0 %v2474
    %v2735 = vpop.f32.mrf.mxu0
    %v2736 = vadd.f32 0.0, %v2735
    %v2737 = vpop.f32.mrf.mxu0
    %v2738 = vadd.f32 0.0, %v2737
    %2739 = vmatmul.bf16.gmra.mxu0 %v2477
    %v2740 = vpop.f32.mrf.mxu0
    %v2741 = vadd.f32 0.0, %v2740
    %v2742 = vpop.f32.mrf.mxu0
    %v2743 = vadd.f32 0.0, %v2742
    %2744 = vdwg.mxu0
    %2745 = vmatpush.bf16.msra.mxu0 0
    %2746 = vmatpush.bf16.msra.mxu0 0
    %2747 = vmatpush.bf16.msra.mxu0 0
    %2748 = vmatpush.bf16.msra.mxu0 0
    %2749 = vmatpush.bf16.msra.mxu0 0
    %2750 = vmatpush.bf16.msra.mxu0 0
    %2751 = vmatpush.bf16.msra.mxu0 %v2412
    %2752 = vmatpush.bf16.msra.mxu0 %v2348
    %2753 = vmatmul.bf16.gmra.mxu0 %v2474
    %v2754 = vpop.f32.mrf.mxu0
    %v2755 = vadd.f32 0.0, %v2754
    %v2756 = vpop.f32.mrf.mxu0
    %v2757 = vadd.f32 0.0, %v2756
    %2758 = vmatmul.bf16.gmra.mxu0 %v2477
    %v2759 = vpop.f32.mrf.mxu0
    %v2760 = vadd.f32 0.0, %v2759
    %v2761 = vpop.f32.mrf.mxu0
    %v2762 = vadd.f32 0.0, %v2761
    %2763 = vdwg.mxu0
    %2764 = vmatpush.bf16.msra.mxu0 0
    %2765 = vmatpush.bf16.msra.mxu0 0
    %2766 = vmatpush.bf16.msra.mxu0 0
    %2767 = vmatpush.bf16.msra.mxu0 0
    %2768 = vmatpush.bf16.msra.mxu0 0
    %2769 = vmatpush.bf16.msra.mxu0 0
    %2770 = vmatpush.bf16.msra.mxu0 %v2413
    %2771 = vmatpush.bf16.msra.mxu0 %v2349
    %2772 = vmatmul.bf16.gmra.mxu0 %v2474
    %v2773 = vpop.f32.mrf.mxu0
    %v2774 = vadd.f32 0.0, %v2773
    %v2775 = vpop.f32.mrf.mxu0
    %v2776 = vadd.f32 0.0, %v2775
    %2777 = vmatmul.bf16.gmra.mxu0 %v2477
    %v2778 = vpop.f32.mrf.mxu0
    %v2779 = vadd.f32 0.0, %v2778
    %v2780 = vpop.f32.mrf.mxu0
    %v2781 = vadd.f32 0.0, %v2780
    %2782 = vdwg.mxu0
    %2783 = vmatpush.bf16.msra.mxu0 0
    %2784 = vmatpush.bf16.msra.mxu0 0
    %2785 = vmatpush.bf16.msra.mxu0 0
    %2786 = vmatpush.bf16.msra.mxu0 0
    %2787 = vmatpush.bf16.msra.mxu0 0
    %2788 = vmatpush.bf16.msra.mxu0 0
    %2789 = vmatpush.bf16.msra.mxu0 %v2414
    %2790 = vmatpush.bf16.msra.mxu0 %v2350
    %2791 = vmatmul.bf16.gmra.mxu0 %v2474
    %v2792 = vpop.f32.mrf.mxu0
    %v2793 = vadd.f32 0.0, %v2792
    %v2794 = vpop.f32.mrf.mxu0
    %v2795 = vadd.f32 0.0, %v2794
    %2796 = vmatmul.bf16.gmra.mxu0 %v2477
    %v2797 = vpop.f32.mrf.mxu0
    %v2798 = vadd.f32 0.0, %v2797
    %v2799 = vpop.f32.mrf.mxu0
    %v2800 = vadd.f32 0.0, %v2799
    %2801 = vdwg.mxu0
    %2802 = vmatpush.bf16.msra.mxu0 0
    %2803 = vmatpush.bf16.msra.mxu0 0
    %2804 = vmatpush.bf16.msra.mxu0 0
    %2805 = vmatpush.bf16.msra.mxu0 0
    %2806 = vmatpush.bf16.msra.mxu0 0
    %2807 = vmatpush.bf16.msra.mxu0 0
    %2808 = vmatpush.bf16.msra.mxu0 %v2415
    %2809 = vmatpush.bf16.msra.mxu0 %v2351
    %2810 = vmatmul.bf16.gmra.mxu0 %v2474
    %v2811 = vpop.f32.mrf.mxu0
    %v2812 = vadd.f32 0.0, %v2811
    %v2813 = vpop.f32.mrf.mxu0
    %v2814 = vadd.f32 0.0, %v2813
    %2815 = vmatmul.bf16.gmra.mxu0 %v2477
    %v2816 = vpop.f32.mrf.mxu0
    %v2817 = vadd.f32 0.0, %v2816
    %v2818 = vpop.f32.mrf.mxu0
    %v2819 = vadd.f32 0.0, %v2818
    %2820 = vdwg.mxu0
    %2821 = vmatpush.bf16.msra.mxu0 0
    %2822 = vmatpush.bf16.msra.mxu0 0
    %2823 = vmatpush.bf16.msra.mxu0 0
    %2824 = vmatpush.bf16.msra.mxu0 0
    %2825 = vmatpush.bf16.msra.mxu0 0
    %2826 = vmatpush.bf16.msra.mxu0 0
    %2827 = vmatpush.bf16.msra.mxu0 %v2416
    %2828 = vmatpush.bf16.msra.mxu0 %v2352
    %2829 = vmatmul.bf16.gmra.mxu0 %v2474
    %v2830 = vpop.f32.mrf.mxu0
    %v2831 = vadd.f32 0.0, %v2830
    %v2832 = vpop.f32.mrf.mxu0
    %v2833 = vadd.f32 0.0, %v2832
    %2834 = vmatmul.bf16.gmra.mxu0 %v2477
    %v2835 = vpop.f32.mrf.mxu0
    %v2836 = vadd.f32 0.0, %v2835
    %v2837 = vpop.f32.mrf.mxu0
    %v2838 = vadd.f32 0.0, %v2837
    %2839 = vdwg.mxu0
    %2840 = vmatpush.bf16.msra.mxu0 0
    %2841 = vmatpush.bf16.msra.mxu0 0
    %2842 = vmatpush.bf16.msra.mxu0 0
    %2843 = vmatpush.bf16.msra.mxu0 0
    %2844 = vmatpush.bf16.msra.mxu0 0
    %2845 = vmatpush.bf16.msra.mxu0 0
    %2846 = vmatpush.bf16.msra.mxu0 %v2417
    %2847 = vmatpush.bf16.msra.mxu0 %v2353
    %2848 = vmatmul.bf16.gmra.mxu0 %v2474
    %v2849 = vpop.f32.mrf.mxu0
    %v2850 = vadd.f32 0.0, %v2849
    %v2851 = vpop.f32.mrf.mxu0
    %v2852 = vadd.f32 0.0, %v2851
    %2853 = vmatmul.bf16.gmra.mxu0 %v2477
    %v2854 = vpop.f32.mrf.mxu0
    %v2855 = vadd.f32 0.0, %v2854
    %v2856 = vpop.f32.mrf.mxu0
    %v2857 = vadd.f32 0.0, %v2856
    %2858 = vdwg.mxu0
    %2859 = vmatpush.bf16.msra.mxu0 0
    %2860 = vmatpush.bf16.msra.mxu0 0
    %2861 = vmatpush.bf16.msra.mxu0 0
    %2862 = vmatpush.bf16.msra.mxu0 0
    %2863 = vmatpush.bf16.msra.mxu0 0
    %2864 = vmatpush.bf16.msra.mxu0 0
    %2865 = vmatpush.bf16.msra.mxu0 %v2418
    %2866 = vmatpush.bf16.msra.mxu0 %v2354
    %2867 = vmatmul.bf16.gmra.mxu0 %v2474
    %v2868 = vpop.f32.mrf.mxu0
    %v2869 = vadd.f32 0.0, %v2868
    %v2870 = vpop.f32.mrf.mxu0
    %v2871 = vadd.f32 0.0, %v2870
    %2872 = vmatmul.bf16.gmra.mxu0 %v2477
    %v2873 = vpop.f32.mrf.mxu0
    %v2874 = vadd.f32 0.0, %v2873
    %v2875 = vpop.f32.mrf.mxu0
    %v2876 = vadd.f32 0.0, %v2875
    %2877 = vdwg.mxu0
    %2878 = vmatpush.bf16.msra.mxu0 0
    %2879 = vmatpush.bf16.msra.mxu0 0
    %2880 = vmatpush.bf16.msra.mxu0 0
    %2881 = vmatpush.bf16.msra.mxu0 0
    %2882 = vmatpush.bf16.msra.mxu0 0
    %2883 = vmatpush.bf16.msra.mxu0 0
    %2884 = vmatpush.bf16.msra.mxu0 %v2419
    %2885 = vmatpush.bf16.msra.mxu0 %v2355
    %2886 = vmatmul.bf16.gmra.mxu0 %v2474
    %v2887 = vpop.f32.mrf.mxu0
    %v2888 = vadd.f32 0.0, %v2887
    %v2889 = vpop.f32.mrf.mxu0
    %v2890 = vadd.f32 0.0, %v2889
    %2891 = vmatmul.bf16.gmra.mxu0 %v2477
    %v2892 = vpop.f32.mrf.mxu0
    %v2893 = vadd.f32 0.0, %v2892
    %v2894 = vpop.f32.mrf.mxu0
    %v2895 = vadd.f32 0.0, %v2894
    %2896 = vdwg.mxu0
    %2897 = vmatpush.bf16.msra.mxu0 0
    %2898 = vmatpush.bf16.msra.mxu0 0
    %2899 = vmatpush.bf16.msra.mxu0 0
    %2900 = vmatpush.bf16.msra.mxu0 0
    %2901 = vmatpush.bf16.msra.mxu0 0
    %2902 = vmatpush.bf16.msra.mxu0 0
    %2903 = vmatpush.bf16.msra.mxu0 %v2420
    %2904 = vmatpush.bf16.msra.mxu0 %v2356
    %2905 = vmatmul.bf16.gmra.mxu0 %v2474
    %v2906 = vpop.f32.mrf.mxu0
    %v2907 = vadd.f32 0.0, %v2906
    %v2908 = vpop.f32.mrf.mxu0
    %v2909 = vadd.f32 0.0, %v2908
    %2910 = vmatmul.bf16.gmra.mxu0 %v2477
    %v2911 = vpop.f32.mrf.mxu0
    %v2912 = vadd.f32 0.0, %v2911
    %v2913 = vpop.f32.mrf.mxu0
    %v2914 = vadd.f32 0.0, %v2913
    %2915 = vdwg.mxu0
    %2916 = vmatpush.bf16.msra.mxu0 0
    %2917 = vmatpush.bf16.msra.mxu0 0
    %2918 = vmatpush.bf16.msra.mxu0 0
    %2919 = vmatpush.bf16.msra.mxu0 0
    %2920 = vmatpush.bf16.msra.mxu0 0
    %2921 = vmatpush.bf16.msra.mxu0 0
    %2922 = vmatpush.bf16.msra.mxu0 %v2421
    %2923 = vmatpush.bf16.msra.mxu0 %v2357
    %2924 = vmatmul.bf16.gmra.mxu0 %v2474
    %v2925 = vpop.f32.mrf.mxu0
    %v2926 = vadd.f32 0.0, %v2925
    %v2927 = vpop.f32.mrf.mxu0
    %v2928 = vadd.f32 0.0, %v2927
    %2929 = vmatmul.bf16.gmra.mxu0 %v2477
    %v2930 = vpop.f32.mrf.mxu0
    %v2931 = vadd.f32 0.0, %v2930
    %v2932 = vpop.f32.mrf.mxu0
    %v2933 = vadd.f32 0.0, %v2932
    %2934 = vdwg.mxu0
    %2935 = vmatpush.bf16.msra.mxu0 0
    %2936 = vmatpush.bf16.msra.mxu0 0
    %2937 = vmatpush.bf16.msra.mxu0 0
    %2938 = vmatpush.bf16.msra.mxu0 0
    %2939 = vmatpush.bf16.msra.mxu0 0
    %2940 = vmatpush.bf16.msra.mxu0 0
    %2941 = vmatpush.bf16.msra.mxu0 %v2422
    %2942 = vmatpush.bf16.msra.mxu0 %v2358
    %2943 = vmatmul.bf16.gmra.mxu0 %v2474
    %v2944 = vpop.f32.mrf.mxu0
    %v2945 = vadd.f32 0.0, %v2944
    %v2946 = vpop.f32.mrf.mxu0
    %v2947 = vadd.f32 0.0, %v2946
    %2948 = vmatmul.bf16.gmra.mxu0 %v2477
    %v2949 = vpop.f32.mrf.mxu0
    %v2950 = vadd.f32 0.0, %v2949
    %v2951 = vpop.f32.mrf.mxu0
    %v2952 = vadd.f32 0.0, %v2951
    %2953 = vdwg.mxu0
    %2954 = vmatpush.bf16.msra.mxu0 0
    %2955 = vmatpush.bf16.msra.mxu0 0
    %2956 = vmatpush.bf16.msra.mxu0 0
    %2957 = vmatpush.bf16.msra.mxu0 0
    %2958 = vmatpush.bf16.msra.mxu0 0
    %2959 = vmatpush.bf16.msra.mxu0 0
    %2960 = vmatpush.bf16.msra.mxu0 %v2423
    %2961 = vmatpush.bf16.msra.mxu0 %v2359
    %2962 = vmatmul.bf16.gmra.mxu0 %v2474
    %v2963 = vpop.f32.mrf.mxu0
    %v2964 = vadd.f32 0.0, %v2963
    %v2965 = vpop.f32.mrf.mxu0
    %v2966 = vadd.f32 0.0, %v2965
    %2967 = vmatmul.bf16.gmra.mxu0 %v2477
    %v2968 = vpop.f32.mrf.mxu0
    %v2969 = vadd.f32 0.0, %v2968
    %v2970 = vpop.f32.mrf.mxu0
    %v2971 = vadd.f32 0.0, %v2970
    %2972 = vdwg.mxu0
    %2973 = vmatpush.bf16.msra.mxu0 0
    %2974 = vmatpush.bf16.msra.mxu0 0
    %2975 = vmatpush.bf16.msra.mxu0 0
    %2976 = vmatpush.bf16.msra.mxu0 0
    %2977 = vmatpush.bf16.msra.mxu0 0
    %2978 = vmatpush.bf16.msra.mxu0 0
    %2979 = vmatpush.bf16.msra.mxu0 %v2424
    %2980 = vmatpush.bf16.msra.mxu0 %v2360
    %2981 = vmatmul.bf16.gmra.mxu0 %v2474
    %v2982 = vpop.f32.mrf.mxu0
    %v2983 = vadd.f32 0.0, %v2982
    %v2984 = vpop.f32.mrf.mxu0
    %v2985 = vadd.f32 0.0, %v2984
    %2986 = vmatmul.bf16.gmra.mxu0 %v2477
    %v2987 = vpop.f32.mrf.mxu0
    %v2988 = vadd.f32 0.0, %v2987
    %v2989 = vpop.f32.mrf.mxu0
    %v2990 = vadd.f32 0.0, %v2989
    %2991 = vdwg.mxu0
    %2992 = vmatpush.bf16.msra.mxu0 0
    %2993 = vmatpush.bf16.msra.mxu0 0
    %2994 = vmatpush.bf16.msra.mxu0 0
    %2995 = vmatpush.bf16.msra.mxu0 0
    %2996 = vmatpush.bf16.msra.mxu0 0
    %2997 = vmatpush.bf16.msra.mxu0 0
    %2998 = vmatpush.bf16.msra.mxu0 %v2425
    %2999 = vmatpush.bf16.msra.mxu0 %v2361
    %3000 = vmatmul.bf16.gmra.mxu0 %v2474
    %v3001 = vpop.f32.mrf.mxu0
    %v3002 = vadd.f32 0.0, %v3001
    %v3003 = vpop.f32.mrf.mxu0
    %v3004 = vadd.f32 0.0, %v3003
    %3005 = vmatmul.bf16.gmra.mxu0 %v2477
    %v3006 = vpop.f32.mrf.mxu0
    %v3007 = vadd.f32 0.0, %v3006
    %v3008 = vpop.f32.mrf.mxu0
    %v3009 = vadd.f32 0.0, %v3008
    %3010 = vdwg.mxu0
    %3011 = vmatpush.bf16.msra.mxu0 0
    %3012 = vmatpush.bf16.msra.mxu0 0
    %3013 = vmatpush.bf16.msra.mxu0 0
    %3014 = vmatpush.bf16.msra.mxu0 0
    %3015 = vmatpush.bf16.msra.mxu0 0
    %3016 = vmatpush.bf16.msra.mxu0 0
    %3017 = vmatpush.bf16.msra.mxu0 %v2426
    %3018 = vmatpush.bf16.msra.mxu0 %v2362
    %3019 = vmatmul.bf16.gmra.mxu0 %v2474
    %v3020 = vpop.f32.mrf.mxu0
    %v3021 = vadd.f32 0.0, %v3020
    %v3022 = vpop.f32.mrf.mxu0
    %v3023 = vadd.f32 0.0, %v3022
    %3024 = vmatmul.bf16.gmra.mxu0 %v2477
    %v3025 = vpop.f32.mrf.mxu0
    %v3026 = vadd.f32 0.0, %v3025
    %v3027 = vpop.f32.mrf.mxu0
    %v3028 = vadd.f32 0.0, %v3027
    %3029 = vdwg.mxu0
    %3030 = vmatpush.bf16.msra.mxu0 0
    %3031 = vmatpush.bf16.msra.mxu0 0
    %3032 = vmatpush.bf16.msra.mxu0 0
    %3033 = vmatpush.bf16.msra.mxu0 0
    %3034 = vmatpush.bf16.msra.mxu0 0
    %3035 = vmatpush.bf16.msra.mxu0 0
    %3036 = vmatpush.bf16.msra.mxu0 %v2427
    %3037 = vmatpush.bf16.msra.mxu0 %v2363
    %3038 = vmatmul.bf16.gmra.mxu0 %v2474
    %v3039 = vpop.f32.mrf.mxu0
    %v3040 = vadd.f32 0.0, %v3039
    %v3041 = vpop.f32.mrf.mxu0
    %v3042 = vadd.f32 0.0, %v3041
    %3043 = vmatmul.bf16.gmra.mxu0 %v2477
    %v3044 = vpop.f32.mrf.mxu0
    %v3045 = vadd.f32 0.0, %v3044
    %v3046 = vpop.f32.mrf.mxu0
    %v3047 = vadd.f32 0.0, %v3046
    %3048 = vdwg.mxu0
    %3049 = vmatpush.bf16.msra.mxu0 0
    %3050 = vmatpush.bf16.msra.mxu0 0
    %3051 = vmatpush.bf16.msra.mxu0 0
    %3052 = vmatpush.bf16.msra.mxu0 0
    %3053 = vmatpush.bf16.msra.mxu0 0
    %3054 = vmatpush.bf16.msra.mxu0 0
    %3055 = vmatpush.bf16.msra.mxu0 %v2428
    %3056 = vmatpush.bf16.msra.mxu0 %v2364
    %3057 = vmatmul.bf16.gmra.mxu0 %v2474
    %v3058 = vpop.f32.mrf.mxu0
    %v3059 = vadd.f32 0.0, %v3058
    %v3060 = vpop.f32.mrf.mxu0
    %v3061 = vadd.f32 0.0, %v3060
    %3062 = vmatmul.bf16.gmra.mxu0 %v2477
    %v3063 = vpop.f32.mrf.mxu0
    %v3064 = vadd.f32 0.0, %v3063
    %v3065 = vpop.f32.mrf.mxu0
    %v3066 = vadd.f32 0.0, %v3065
    %3067 = vdwg.mxu0
    %3068 = vmatpush.bf16.msra.mxu0 0
    %3069 = vmatpush.bf16.msra.mxu0 0
    %3070 = vmatpush.bf16.msra.mxu0 0
    %3071 = vmatpush.bf16.msra.mxu0 0
    %3072 = vmatpush.bf16.msra.mxu0 0
    %3073 = vmatpush.bf16.msra.mxu0 0
    %3074 = vmatpush.bf16.msra.mxu0 %v2429
    %3075 = vmatpush.bf16.msra.mxu0 %v2365
    %3076 = vmatmul.bf16.gmra.mxu0 %v2474
    %v3077 = vpop.f32.mrf.mxu0
    %v3078 = vadd.f32 0.0, %v3077
    %v3079 = vpop.f32.mrf.mxu0
    %v3080 = vadd.f32 0.0, %v3079
    %3081 = vmatmul.bf16.gmra.mxu0 %v2477
    %v3082 = vpop.f32.mrf.mxu0
    %v3083 = vadd.f32 0.0, %v3082
    %v3084 = vpop.f32.mrf.mxu0
    %v3085 = vadd.f32 0.0, %v3084
    %3086 = vdwg.mxu0
    %3087 = vmatpush.bf16.msra.mxu0 0
    %3088 = vmatpush.bf16.msra.mxu0 0
    %3089 = vmatpush.bf16.msra.mxu0 0
    %3090 = vmatpush.bf16.msra.mxu0 0
    %3091 = vmatpush.bf16.msra.mxu0 0
    %3092 = vmatpush.bf16.msra.mxu0 0
    %3093 = vmatpush.bf16.msra.mxu0 %v2430
    %3094 = vmatpush.bf16.msra.mxu0 %v2366
    %3095 = vmatmul.bf16.gmra.mxu0 %v2474
    %v3096 = vpop.f32.mrf.mxu0
    %v3097 = vadd.f32 0.0, %v3096
    %v3098 = vpop.f32.mrf.mxu0
    %v3099 = vadd.f32 0.0, %v3098
    %3100 = vmatmul.bf16.gmra.mxu0 %v2477
    %v3101 = vpop.f32.mrf.mxu0
    %v3102 = vadd.f32 0.0, %v3101
    %v3103 = vpop.f32.mrf.mxu0
    %v3104 = vadd.f32 0.0, %v3103
    %3105 = vdwg.mxu0
    %3106 = vmatpush.bf16.msra.mxu0 0
    %3107 = vmatpush.bf16.msra.mxu0 0
    %3108 = vmatpush.bf16.msra.mxu0 0
    %3109 = vmatpush.bf16.msra.mxu0 0
    %3110 = vmatpush.bf16.msra.mxu0 0
    %3111 = vmatpush.bf16.msra.mxu0 0
    %3112 = vmatpush.bf16.msra.mxu0 %v2431
    %3113 = vmatpush.bf16.msra.mxu0 %v2367
    %3114 = vmatmul.bf16.gmra.mxu0 %v2474
    %v3115 = vpop.f32.mrf.mxu0
    %v3116 = vadd.f32 0.0, %v3115
    %v3117 = vpop.f32.mrf.mxu0
    %v3118 = vadd.f32 0.0, %v3117
    %3119 = vmatmul.bf16.gmra.mxu0 %v2477
    %v3120 = vpop.f32.mrf.mxu0
    %v3121 = vadd.f32 0.0, %v3120
    %v3122 = vpop.f32.mrf.mxu0
    %v3123 = vadd.f32 0.0, %v3122
    %3124 = vdwg.mxu0
    %3125 = vmatpush.bf16.msra.mxu0 0
    %3126 = vmatpush.bf16.msra.mxu0 0
    %3127 = vmatpush.bf16.msra.mxu0 0
    %3128 = vmatpush.bf16.msra.mxu0 0
    %3129 = vmatpush.bf16.msra.mxu0 0
    %3130 = vmatpush.bf16.msra.mxu0 0
    %3131 = vmatpush.bf16.msra.mxu0 %v2432
    %3132 = vmatpush.bf16.msra.mxu0 %v2368
    %3133 = vmatmul.bf16.gmra.mxu0 %v2474
    %v3134 = vpop.f32.mrf.mxu0
    %v3135 = vadd.f32 0.0, %v3134
    %v3136 = vpop.f32.mrf.mxu0
    %v3137 = vadd.f32 0.0, %v3136
    %3138 = vmatmul.bf16.gmra.mxu0 %v2477
    %v3139 = vpop.f32.mrf.mxu0
    %v3140 = vadd.f32 0.0, %v3139
    %v3141 = vpop.f32.mrf.mxu0
    %v3142 = vadd.f32 0.0, %v3141
    %3143 = vdwg.mxu0
    %3144 = vmatpush.bf16.msra.mxu0 0
    %3145 = vmatpush.bf16.msra.mxu0 0
    %3146 = vmatpush.bf16.msra.mxu0 0
    %3147 = vmatpush.bf16.msra.mxu0 0
    %3148 = vmatpush.bf16.msra.mxu0 0
    %3149 = vmatpush.bf16.msra.mxu0 0
    %3150 = vmatpush.bf16.msra.mxu0 %v2433
    %3151 = vmatpush.bf16.msra.mxu0 %v2369
    %3152 = vmatmul.bf16.gmra.mxu0 %v2474
    %v3153 = vpop.f32.mrf.mxu0
    %v3154 = vadd.f32 0.0, %v3153
    %v3155 = vpop.f32.mrf.mxu0
    %v3156 = vadd.f32 0.0, %v3155
    %3157 = vmatmul.bf16.gmra.mxu0 %v2477
    %v3158 = vpop.f32.mrf.mxu0
    %v3159 = vadd.f32 0.0, %v3158
    %v3160 = vpop.f32.mrf.mxu0
    %v3161 = vadd.f32 0.0, %v3160
    %3162 = vdwg.mxu0
    %3163 = vmatpush.bf16.msra.mxu0 0
    %3164 = vmatpush.bf16.msra.mxu0 0
    %3165 = vmatpush.bf16.msra.mxu0 0
    %3166 = vmatpush.bf16.msra.mxu0 0
    %3167 = vmatpush.bf16.msra.mxu0 0
    %3168 = vmatpush.bf16.msra.mxu0 0
    %3169 = vmatpush.bf16.msra.mxu0 %v2434
    %3170 = vmatpush.bf16.msra.mxu0 %v2370
    %3171 = vmatmul.bf16.gmra.mxu0 %v2474
    %v3172 = vpop.f32.mrf.mxu0
    %v3173 = vadd.f32 0.0, %v3172
    %v3174 = vpop.f32.mrf.mxu0
    %v3175 = vadd.f32 0.0, %v3174
    %3176 = vmatmul.bf16.gmra.mxu0 %v2477
    %v3177 = vpop.f32.mrf.mxu0
    %v3178 = vadd.f32 0.0, %v3177
    %v3179 = vpop.f32.mrf.mxu0
    %v3180 = vadd.f32 0.0, %v3179
    %3181 = vdwg.mxu0
    %3182 = vmatpush.bf16.msra.mxu0 0
    %3183 = vmatpush.bf16.msra.mxu0 0
    %3184 = vmatpush.bf16.msra.mxu0 0
    %3185 = vmatpush.bf16.msra.mxu0 0
    %3186 = vmatpush.bf16.msra.mxu0 0
    %3187 = vmatpush.bf16.msra.mxu0 0
    %3188 = vmatpush.bf16.msra.mxu0 %v2435
    %3189 = vmatpush.bf16.msra.mxu0 %v2371
    %3190 = vmatmul.bf16.gmra.mxu0 %v2474
    %v3191 = vpop.f32.mrf.mxu0
    %v3192 = vadd.f32 0.0, %v3191
    %v3193 = vpop.f32.mrf.mxu0
    %v3194 = vadd.f32 0.0, %v3193
    %3195 = vmatmul.bf16.gmra.mxu0 %v2477
    %v3196 = vpop.f32.mrf.mxu0
    %v3197 = vadd.f32 0.0, %v3196
    %v3198 = vpop.f32.mrf.mxu0
    %v3199 = vadd.f32 0.0, %v3198
    %3200 = vdwg.mxu0
    %3201 = vmatpush.bf16.msra.mxu0 0
    %3202 = vmatpush.bf16.msra.mxu0 0
    %3203 = vmatpush.bf16.msra.mxu0 0
    %3204 = vmatpush.bf16.msra.mxu0 0
    %3205 = vmatpush.bf16.msra.mxu0 0
    %3206 = vmatpush.bf16.msra.mxu0 0
    %3207 = vmatpush.bf16.msra.mxu0 %v2436
    %3208 = vmatpush.bf16.msra.mxu0 %v2372
    %3209 = vmatmul.bf16.gmra.mxu0 %v2474
    %v3210 = vpop.f32.mrf.mxu0
    %v3211 = vadd.f32 0.0, %v3210
    %v3212 = vpop.f32.mrf.mxu0
    %v3213 = vadd.f32 0.0, %v3212
    %3214 = vmatmul.bf16.gmra.mxu0 %v2477
    %v3215 = vpop.f32.mrf.mxu0
    %v3216 = vadd.f32 0.0, %v3215
    %v3217 = vpop.f32.mrf.mxu0
    %v3218 = vadd.f32 0.0, %v3217
    %3219 = vdwg.mxu0
    %3220 = vmatpush.bf16.msra.mxu0 0
    %3221 = vmatpush.bf16.msra.mxu0 0
    %3222 = vmatpush.bf16.msra.mxu0 0
    %3223 = vmatpush.bf16.msra.mxu0 0
    %3224 = vmatpush.bf16.msra.mxu0 0
    %3225 = vmatpush.bf16.msra.mxu0 0
    %3226 = vmatpush.bf16.msra.mxu0 %v2437
    %3227 = vmatpush.bf16.msra.mxu0 %v2373
    %3228 = vmatmul.bf16.gmra.mxu0 %v2474
    %v3229 = vpop.f32.mrf.mxu0
    %v3230 = vadd.f32 0.0, %v3229
    %v3231 = vpop.f32.mrf.mxu0
    %v3232 = vadd.f32 0.0, %v3231
    %3233 = vmatmul.bf16.gmra.mxu0 %v2477
    %v3234 = vpop.f32.mrf.mxu0
    %v3235 = vadd.f32 0.0, %v3234
    %v3236 = vpop.f32.mrf.mxu0
    %v3237 = vadd.f32 0.0, %v3236
    %3238 = vdwg.mxu0
    %3239 = vmatpush.bf16.msra.mxu0 0
    %3240 = vmatpush.bf16.msra.mxu0 0
    %3241 = vmatpush.bf16.msra.mxu0 0
    %3242 = vmatpush.bf16.msra.mxu0 0
    %3243 = vmatpush.bf16.msra.mxu0 0
    %3244 = vmatpush.bf16.msra.mxu0 0
    %3245 = vmatpush.bf16.msra.mxu0 %v2438
    %3246 = vmatpush.bf16.msra.mxu0 %v2374
    %3247 = vmatmul.bf16.gmra.mxu0 %v2474
    %v3248 = vpop.f32.mrf.mxu0
    %v3249 = vadd.f32 0.0, %v3248
    %v3250 = vpop.f32.mrf.mxu0
    %v3251 = vadd.f32 0.0, %v3250
    %3252 = vmatmul.bf16.gmra.mxu0 %v2477
    %v3253 = vpop.f32.mrf.mxu0
    %v3254 = vadd.f32 0.0, %v3253
    %v3255 = vpop.f32.mrf.mxu0
    %v3256 = vadd.f32 0.0, %v3255
    %3257 = vdwg.mxu0
    %3258 = vmatpush.bf16.msra.mxu0 0
    %3259 = vmatpush.bf16.msra.mxu0 0
    %3260 = vmatpush.bf16.msra.mxu0 0
    %3261 = vmatpush.bf16.msra.mxu0 0
    %3262 = vmatpush.bf16.msra.mxu0 0
    %3263 = vmatpush.bf16.msra.mxu0 0
    %3264 = vmatpush.bf16.msra.mxu0 %v2439
    %3265 = vmatpush.bf16.msra.mxu0 %v2375
    %3266 = vmatmul.bf16.gmra.mxu0 %v2474
    %v3267 = vpop.f32.mrf.mxu0
    %v3268 = vadd.f32 0.0, %v3267
    %v3269 = vpop.f32.mrf.mxu0
    %v3270 = vadd.f32 0.0, %v3269
    %3271 = vmatmul.bf16.gmra.mxu0 %v2477
    %v3272 = vpop.f32.mrf.mxu0
    %v3273 = vadd.f32 0.0, %v3272
    %v3274 = vpop.f32.mrf.mxu0
    %v3275 = vadd.f32 0.0, %v3274
    %3276 = vdwg.mxu0
    %3277 = vmatpush.bf16.msra.mxu0 0
    %3278 = vmatpush.bf16.msra.mxu0 0
    %3279 = vmatpush.bf16.msra.mxu0 0
    %3280 = vmatpush.bf16.msra.mxu0 0
    %3281 = vmatpush.bf16.msra.mxu0 0
    %3282 = vmatpush.bf16.msra.mxu0 0
    %3283 = vmatpush.bf16.msra.mxu0 %v2440
    %3284 = vmatpush.bf16.msra.mxu0 %v2376
    %3285 = vmatmul.bf16.gmra.mxu0 %v2474
    %v3286 = vpop.f32.mrf.mxu0
    %v3287 = vadd.f32 0.0, %v3286
    %v3288 = vpop.f32.mrf.mxu0
    %v3289 = vadd.f32 0.0, %v3288
    %3290 = vmatmul.bf16.gmra.mxu0 %v2477
    %v3291 = vpop.f32.mrf.mxu0
    %v3292 = vadd.f32 0.0, %v3291
    %v3293 = vpop.f32.mrf.mxu0
    %v3294 = vadd.f32 0.0, %v3293
    %3295 = vdwg.mxu0
    %3296 = vmatpush.bf16.msra.mxu0 0
    %3297 = vmatpush.bf16.msra.mxu0 0
    %3298 = vmatpush.bf16.msra.mxu0 0
    %3299 = vmatpush.bf16.msra.mxu0 0
    %3300 = vmatpush.bf16.msra.mxu0 0
    %3301 = vmatpush.bf16.msra.mxu0 0
    %3302 = vmatpush.bf16.msra.mxu0 %v2441
    %3303 = vmatpush.bf16.msra.mxu0 %v2377
    %3304 = vmatmul.bf16.gmra.mxu0 %v2474
    %v3305 = vpop.f32.mrf.mxu0
    %v3306 = vadd.f32 0.0, %v3305
    %v3307 = vpop.f32.mrf.mxu0
    %v3308 = vadd.f32 0.0, %v3307
    %3309 = vmatmul.bf16.gmra.mxu0 %v2477
    %v3310 = vpop.f32.mrf.mxu0
    %v3311 = vadd.f32 0.0, %v3310
    %v3312 = vpop.f32.mrf.mxu0
    %v3313 = vadd.f32 0.0, %v3312
    %3314 = vdwg.mxu0
    %3315 = vmatpush.bf16.msra.mxu0 0
    %3316 = vmatpush.bf16.msra.mxu0 0
    %3317 = vmatpush.bf16.msra.mxu0 0
    %3318 = vmatpush.bf16.msra.mxu0 0
    %3319 = vmatpush.bf16.msra.mxu0 0
    %3320 = vmatpush.bf16.msra.mxu0 0
    %3321 = vmatpush.bf16.msra.mxu0 %v2442
    %3322 = vmatpush.bf16.msra.mxu0 %v2378
    %3323 = vmatmul.bf16.gmra.mxu0 %v2474
    %v3324 = vpop.f32.mrf.mxu0
    %v3325 = vadd.f32 0.0, %v3324
    %v3326 = vpop.f32.mrf.mxu0
    %v3327 = vadd.f32 0.0, %v3326
    %3328 = vmatmul.bf16.gmra.mxu0 %v2477
    %v3329 = vpop.f32.mrf.mxu0
    %v3330 = vadd.f32 0.0, %v3329
    %v3331 = vpop.f32.mrf.mxu0
    %v3332 = vadd.f32 0.0, %v3331
    %3333 = vdwg.mxu0
    %3334 = vmatpush.bf16.msra.mxu0 0
    %3335 = vmatpush.bf16.msra.mxu0 0
    %3336 = vmatpush.bf16.msra.mxu0 0
    %3337 = vmatpush.bf16.msra.mxu0 0
    %3338 = vmatpush.bf16.msra.mxu0 0
    %3339 = vmatpush.bf16.msra.mxu0 0
    %3340 = vmatpush.bf16.msra.mxu0 %v2443
    %3341 = vmatpush.bf16.msra.mxu0 %v2379
    %3342 = vmatmul.bf16.gmra.mxu0 %v2474
    %v3343 = vpop.f32.mrf.mxu0
    %v3344 = vadd.f32 0.0, %v3343
    %v3345 = vpop.f32.mrf.mxu0
    %v3346 = vadd.f32 0.0, %v3345
    %3347 = vmatmul.bf16.gmra.mxu0 %v2477
    %v3348 = vpop.f32.mrf.mxu0
    %v3349 = vadd.f32 0.0, %v3348
    %v3350 = vpop.f32.mrf.mxu0
    %v3351 = vadd.f32 0.0, %v3350
    %3352 = vdwg.mxu0
    %3353 = vmatpush.bf16.msra.mxu0 0
    %3354 = vmatpush.bf16.msra.mxu0 0
    %3355 = vmatpush.bf16.msra.mxu0 0
    %3356 = vmatpush.bf16.msra.mxu0 0
    %3357 = vmatpush.bf16.msra.mxu0 0
    %3358 = vmatpush.bf16.msra.mxu0 0
    %3359 = vmatpush.bf16.msra.mxu0 %v2444
    %3360 = vmatpush.bf16.msra.mxu0 %v2380
    %3361 = vmatmul.bf16.gmra.mxu0 %v2474
    %v3362 = vpop.f32.mrf.mxu0
    %v3363 = vadd.f32 0.0, %v3362
    %v3364 = vpop.f32.mrf.mxu0
    %v3365 = vadd.f32 0.0, %v3364
    %3366 = vmatmul.bf16.gmra.mxu0 %v2477
    %v3367 = vpop.f32.mrf.mxu0
    %v3368 = vadd.f32 0.0, %v3367
    %v3369 = vpop.f32.mrf.mxu0
    %v3370 = vadd.f32 0.0, %v3369
    %3371 = vdwg.mxu0
    %3372 = vmatpush.bf16.msra.mxu0 0
    %3373 = vmatpush.bf16.msra.mxu0 0
    %3374 = vmatpush.bf16.msra.mxu0 0
    %3375 = vmatpush.bf16.msra.mxu0 0
    %3376 = vmatpush.bf16.msra.mxu0 0
    %3377 = vmatpush.bf16.msra.mxu0 0
    %3378 = vmatpush.bf16.msra.mxu0 %v2445
    %3379 = vmatpush.bf16.msra.mxu0 %v2381
    %3380 = vmatmul.bf16.gmra.mxu0 %v2474
    %v3381 = vpop.f32.mrf.mxu0
    %v3382 = vadd.f32 0.0, %v3381
    %v3383 = vpop.f32.mrf.mxu0
    %v3384 = vadd.f32 0.0, %v3383
    %3385 = vmatmul.bf16.gmra.mxu0 %v2477
    %v3386 = vpop.f32.mrf.mxu0
    %v3387 = vadd.f32 0.0, %v3386
    %v3388 = vpop.f32.mrf.mxu0
    %v3389 = vadd.f32 0.0, %v3388
    %3390 = vdwg.mxu0
    %3391 = vmatpush.bf16.msra.mxu0 0
    %3392 = vmatpush.bf16.msra.mxu0 0
    %3393 = vmatpush.bf16.msra.mxu0 0
    %3394 = vmatpush.bf16.msra.mxu0 0
    %3395 = vmatpush.bf16.msra.mxu0 0
    %3396 = vmatpush.bf16.msra.mxu0 0
    %3397 = vmatpush.bf16.msra.mxu0 %v2446
    %3398 = vmatpush.bf16.msra.mxu0 %v2382
    %3399 = vmatmul.bf16.gmra.mxu0 %v2474
    %v3400 = vpop.f32.mrf.mxu0
    %v3401 = vadd.f32 0.0, %v3400
    %v3402 = vpop.f32.mrf.mxu0
    %v3403 = vadd.f32 0.0, %v3402
    %3404 = vmatmul.bf16.gmra.mxu0 %v2477
    %v3405 = vpop.f32.mrf.mxu0
    %v3406 = vadd.f32 0.0, %v3405
    %v3407 = vpop.f32.mrf.mxu0
    %v3408 = vadd.f32 0.0, %v3407
    %3409 = vdwg.mxu0
    %3410 = vmatpush.bf16.msra.mxu0 0
    %3411 = vmatpush.bf16.msra.mxu0 0
    %3412 = vmatpush.bf16.msra.mxu0 0
    %3413 = vmatpush.bf16.msra.mxu0 0
    %3414 = vmatpush.bf16.msra.mxu0 0
    %3415 = vmatpush.bf16.msra.mxu0 0
    %3416 = vmatpush.bf16.msra.mxu0 %v2447
    %3417 = vmatpush.bf16.msra.mxu0 %v2383
    %3418 = vmatmul.bf16.gmra.mxu0 %v2474
    %v3419 = vpop.f32.mrf.mxu0
    %v3420 = vadd.f32 0.0, %v3419
    %v3421 = vpop.f32.mrf.mxu0
    %v3422 = vadd.f32 0.0, %v3421
    %3423 = vmatmul.bf16.gmra.mxu0 %v2477
    %v3424 = vpop.f32.mrf.mxu0
    %v3425 = vadd.f32 0.0, %v3424
    %v3426 = vpop.f32.mrf.mxu0
    %v3427 = vadd.f32 0.0, %v3426
    %3428 = vdwg.mxu0
    %3429 = vmatpush.bf16.msra.mxu0 0
    %3430 = vmatpush.bf16.msra.mxu0 0
    %3431 = vmatpush.bf16.msra.mxu0 0
    %3432 = vmatpush.bf16.msra.mxu0 0
    %3433 = vmatpush.bf16.msra.mxu0 0
    %3434 = vmatpush.bf16.msra.mxu0 0
    %3435 = vmatpush.bf16.msra.mxu0 %v2448
    %3436 = vmatpush.bf16.msra.mxu0 %v2384
    %3437 = vmatmul.bf16.gmra.mxu0 %v2474
    %v3438 = vpop.f32.mrf.mxu0
    %v3439 = vadd.f32 0.0, %v3438
    %v3440 = vpop.f32.mrf.mxu0
    %v3441 = vadd.f32 0.0, %v3440
    %3442 = vmatmul.bf16.gmra.mxu0 %v2477
    %v3443 = vpop.f32.mrf.mxu0
    %v3444 = vadd.f32 0.0, %v3443
    %v3445 = vpop.f32.mrf.mxu0
    %v3446 = vadd.f32 0.0, %v3445
    %3447 = vdwg.mxu0
    %3448 = vmatpush.bf16.msra.mxu0 0
    %3449 = vmatpush.bf16.msra.mxu0 0
    %3450 = vmatpush.bf16.msra.mxu0 0
    %3451 = vmatpush.bf16.msra.mxu0 0
    %3452 = vmatpush.bf16.msra.mxu0 0
    %3453 = vmatpush.bf16.msra.mxu0 0
    %3454 = vmatpush.bf16.msra.mxu0 %v2449
    %3455 = vmatpush.bf16.msra.mxu0 %v2385
    %3456 = vmatmul.bf16.gmra.mxu0 %v2474
    %v3457 = vpop.f32.mrf.mxu0
    %v3458 = vadd.f32 0.0, %v3457
    %v3459 = vpop.f32.mrf.mxu0
    %v3460 = vadd.f32 0.0, %v3459
    %3461 = vmatmul.bf16.gmra.mxu0 %v2477
    %v3462 = vpop.f32.mrf.mxu0
    %v3463 = vadd.f32 0.0, %v3462
    %v3464 = vpop.f32.mrf.mxu0
    %v3465 = vadd.f32 0.0, %v3464
    %3466 = vdwg.mxu0
    %3467 = vmatpush.bf16.msra.mxu0 0
    %3468 = vmatpush.bf16.msra.mxu0 0
    %3469 = vmatpush.bf16.msra.mxu0 0
    %3470 = vmatpush.bf16.msra.mxu0 0
    %3471 = vmatpush.bf16.msra.mxu0 0
    %3472 = vmatpush.bf16.msra.mxu0 0
    %3473 = vmatpush.bf16.msra.mxu0 %v2450
    %3474 = vmatpush.bf16.msra.mxu0 %v2386
    %3475 = vmatmul.bf16.gmra.mxu0 %v2474
    %v3476 = vpop.f32.mrf.mxu0
    %v3477 = vadd.f32 0.0, %v3476
    %v3478 = vpop.f32.mrf.mxu0
    %v3479 = vadd.f32 0.0, %v3478
    %3480 = vmatmul.bf16.gmra.mxu0 %v2477
    %v3481 = vpop.f32.mrf.mxu0
    %v3482 = vadd.f32 0.0, %v3481
    %v3483 = vpop.f32.mrf.mxu0
    %v3484 = vadd.f32 0.0, %v3483
    %3485 = vdwg.mxu0
    %3486 = vmatpush.bf16.msra.mxu0 0
    %3487 = vmatpush.bf16.msra.mxu0 0
    %3488 = vmatpush.bf16.msra.mxu0 0
    %3489 = vmatpush.bf16.msra.mxu0 0
    %3490 = vmatpush.bf16.msra.mxu0 0
    %3491 = vmatpush.bf16.msra.mxu0 0
    %3492 = vmatpush.bf16.msra.mxu0 %v2451
    %3493 = vmatpush.bf16.msra.mxu0 %v2387
    %3494 = vmatmul.bf16.gmra.mxu0 %v2474
    %v3495 = vpop.f32.mrf.mxu0
    %v3496 = vadd.f32 0.0, %v3495
    %v3497 = vpop.f32.mrf.mxu0
    %v3498 = vadd.f32 0.0, %v3497
    %3499 = vmatmul.bf16.gmra.mxu0 %v2477
    %v3500 = vpop.f32.mrf.mxu0
    %v3501 = vadd.f32 0.0, %v3500
    %v3502 = vpop.f32.mrf.mxu0
    %v3503 = vadd.f32 0.0, %v3502
    %3504 = vdwg.mxu0
    %3505 = vmatpush.bf16.msra.mxu0 0
    %3506 = vmatpush.bf16.msra.mxu0 0
    %3507 = vmatpush.bf16.msra.mxu0 0
    %3508 = vmatpush.bf16.msra.mxu0 0
    %3509 = vmatpush.bf16.msra.mxu0 0
    %3510 = vmatpush.bf16.msra.mxu0 0
    %3511 = vmatpush.bf16.msra.mxu0 %v2452
    %3512 = vmatpush.bf16.msra.mxu0 %v2388
    %3513 = vmatmul.bf16.gmra.mxu0 %v2474
    %v3514 = vpop.f32.mrf.mxu0
    %v3515 = vadd.f32 0.0, %v3514
    %v3516 = vpop.f32.mrf.mxu0
    %v3517 = vadd.f32 0.0, %v3516
    %3518 = vmatmul.bf16.gmra.mxu0 %v2477
    %v3519 = vpop.f32.mrf.mxu0
    %v3520 = vadd.f32 0.0, %v3519
    %v3521 = vpop.f32.mrf.mxu0
    %v3522 = vadd.f32 0.0, %v3521
    %3523 = vdwg.mxu0
    %3524 = vmatpush.bf16.msra.mxu0 0
    %3525 = vmatpush.bf16.msra.mxu0 0
    %3526 = vmatpush.bf16.msra.mxu0 0
    %3527 = vmatpush.bf16.msra.mxu0 0
    %3528 = vmatpush.bf16.msra.mxu0 0
    %3529 = vmatpush.bf16.msra.mxu0 0
    %3530 = vmatpush.bf16.msra.mxu0 %v2453
    %3531 = vmatpush.bf16.msra.mxu0 %v2389
    %3532 = vmatmul.bf16.gmra.mxu0 %v2474
    %v3533 = vpop.f32.mrf.mxu0
    %v3534 = vadd.f32 0.0, %v3533
    %v3535 = vpop.f32.mrf.mxu0
    %v3536 = vadd.f32 0.0, %v3535
    %3537 = vmatmul.bf16.gmra.mxu0 %v2477
    %v3538 = vpop.f32.mrf.mxu0
    %v3539 = vadd.f32 0.0, %v3538
    %v3540 = vpop.f32.mrf.mxu0
    %v3541 = vadd.f32 0.0, %v3540
    %3542 = vdwg.mxu0
    %3543 = vmatpush.bf16.msra.mxu0 0
    %3544 = vmatpush.bf16.msra.mxu0 0
    %3545 = vmatpush.bf16.msra.mxu0 0
    %3546 = vmatpush.bf16.msra.mxu0 0
    %3547 = vmatpush.bf16.msra.mxu0 0
    %3548 = vmatpush.bf16.msra.mxu0 0
    %3549 = vmatpush.bf16.msra.mxu0 %v2454
    %3550 = vmatpush.bf16.msra.mxu0 %v2390
    %3551 = vmatmul.bf16.gmra.mxu0 %v2474
    %v3552 = vpop.f32.mrf.mxu0
    %v3553 = vadd.f32 0.0, %v3552
    %v3554 = vpop.f32.mrf.mxu0
    %v3555 = vadd.f32 0.0, %v3554
    %3556 = vmatmul.bf16.gmra.mxu0 %v2477
    %v3557 = vpop.f32.mrf.mxu0
    %v3558 = vadd.f32 0.0, %v3557
    %v3559 = vpop.f32.mrf.mxu0
    %v3560 = vadd.f32 0.0, %v3559
    %3561 = vdwg.mxu0
    %3562 = vmatpush.bf16.msra.mxu0 0
    %3563 = vmatpush.bf16.msra.mxu0 0
    %3564 = vmatpush.bf16.msra.mxu0 0
    %3565 = vmatpush.bf16.msra.mxu0 0
    %3566 = vmatpush.bf16.msra.mxu0 0
    %3567 = vmatpush.bf16.msra.mxu0 0
    %3568 = vmatpush.bf16.msra.mxu0 %v2455
    %3569 = vmatpush.bf16.msra.mxu0 %v2391
    %3570 = vmatmul.bf16.gmra.mxu0 %v2474
    %v3571 = vpop.f32.mrf.mxu0
    %v3572 = vadd.f32 0.0, %v3571
    %v3573 = vpop.f32.mrf.mxu0
    %v3574 = vadd.f32 0.0, %v3573
    %3575 = vmatmul.bf16.gmra.mxu0 %v2477
    %v3576 = vpop.f32.mrf.mxu0
    %v3577 = vadd.f32 0.0, %v3576
    %v3578 = vpop.f32.mrf.mxu0
    %v3579 = vadd.f32 0.0, %v3578
    %3580 = vdwg.mxu0
    %3581 = vmatpush.bf16.msra.mxu0 0
    %3582 = vmatpush.bf16.msra.mxu0 0
    %3583 = vmatpush.bf16.msra.mxu0 0
    %3584 = vmatpush.bf16.msra.mxu0 0
    %3585 = vmatpush.bf16.msra.mxu0 0
    %3586 = vmatpush.bf16.msra.mxu0 0
    %3587 = vmatpush.bf16.msra.mxu0 %v2456
    %3588 = vmatpush.bf16.msra.mxu0 %v2392
    %3589 = vmatmul.bf16.gmra.mxu0 %v2474
    %v3590 = vpop.f32.mrf.mxu0
    %v3591 = vadd.f32 0.0, %v3590
    %v3592 = vpop.f32.mrf.mxu0
    %v3593 = vadd.f32 0.0, %v3592
    %3594 = vmatmul.bf16.gmra.mxu0 %v2477
    %v3595 = vpop.f32.mrf.mxu0
    %v3596 = vadd.f32 0.0, %v3595
    %v3597 = vpop.f32.mrf.mxu0
    %v3598 = vadd.f32 0.0, %v3597
    %3599 = vdwg.mxu0
    %3600 = vmatpush.bf16.msra.mxu0 0
    %3601 = vmatpush.bf16.msra.mxu0 0
    %3602 = vmatpush.bf16.msra.mxu0 0
    %3603 = vmatpush.bf16.msra.mxu0 0
    %3604 = vmatpush.bf16.msra.mxu0 0
    %3605 = vmatpush.bf16.msra.mxu0 0
    %3606 = vmatpush.bf16.msra.mxu0 %v2457
    %3607 = vmatpush.bf16.msra.mxu0 %v2393
    %3608 = vmatmul.bf16.gmra.mxu0 %v2474
    %v3609 = vpop.f32.mrf.mxu0
    %v3610 = vadd.f32 0.0, %v3609
    %v3611 = vpop.f32.mrf.mxu0
    %v3612 = vadd.f32 0.0, %v3611
    %3613 = vmatmul.bf16.gmra.mxu0 %v2477
    %v3614 = vpop.f32.mrf.mxu0
    %v3615 = vadd.f32 0.0, %v3614
    %v3616 = vpop.f32.mrf.mxu0
    %v3617 = vadd.f32 0.0, %v3616
    %3618 = vdwg.mxu0
    %3619 = vmatpush.bf16.msra.mxu0 0
    %3620 = vmatpush.bf16.msra.mxu0 0
    %3621 = vmatpush.bf16.msra.mxu0 0
    %3622 = vmatpush.bf16.msra.mxu0 0
    %3623 = vmatpush.bf16.msra.mxu0 0
    %3624 = vmatpush.bf16.msra.mxu0 0
    %3625 = vmatpush.bf16.msra.mxu0 %v2458
    %3626 = vmatpush.bf16.msra.mxu0 %v2394
    %3627 = vmatmul.bf16.gmra.mxu0 %v2474
    %v3628 = vpop.f32.mrf.mxu0
    %v3629 = vadd.f32 0.0, %v3628
    %v3630 = vpop.f32.mrf.mxu0
    %v3631 = vadd.f32 0.0, %v3630
    %3632 = vmatmul.bf16.gmra.mxu0 %v2477
    %v3633 = vpop.f32.mrf.mxu0
    %v3634 = vadd.f32 0.0, %v3633
    %v3635 = vpop.f32.mrf.mxu0
    %v3636 = vadd.f32 0.0, %v3635
    %3637 = vdwg.mxu0
    %3638 = vmatpush.bf16.msra.mxu0 0
    %3639 = vmatpush.bf16.msra.mxu0 0
    %3640 = vmatpush.bf16.msra.mxu0 0
    %3641 = vmatpush.bf16.msra.mxu0 0
    %3642 = vmatpush.bf16.msra.mxu0 0
    %3643 = vmatpush.bf16.msra.mxu0 0
    %3644 = vmatpush.bf16.msra.mxu0 %v2459
    %3645 = vmatpush.bf16.msra.mxu0 %v2395
    %3646 = vmatmul.bf16.gmra.mxu0 %v2474
    %v3647 = vpop.f32.mrf.mxu0
    %v3648 = vadd.f32 0.0, %v3647
    %v3649 = vpop.f32.mrf.mxu0
    %v3650 = vadd.f32 0.0, %v3649
    %3651 = vmatmul.bf16.gmra.mxu0 %v2477
    %v3652 = vpop.f32.mrf.mxu0
    %v3653 = vadd.f32 0.0, %v3652
    %v3654 = vpop.f32.mrf.mxu0
    %v3655 = vadd.f32 0.0, %v3654
    %3656 = vdwg.mxu0
    %3657 = vmatpush.bf16.msra.mxu0 0
    %3658 = vmatpush.bf16.msra.mxu0 0
    %3659 = vmatpush.bf16.msra.mxu0 0
    %3660 = vmatpush.bf16.msra.mxu0 0
    %3661 = vmatpush.bf16.msra.mxu0 0
    %3662 = vmatpush.bf16.msra.mxu0 0
    %3663 = vmatpush.bf16.msra.mxu0 %v2460
    %3664 = vmatpush.bf16.msra.mxu0 %v2396
    %3665 = vmatmul.bf16.gmra.mxu0 %v2474
    %v3666 = vpop.f32.mrf.mxu0
    %v3667 = vadd.f32 0.0, %v3666
    %v3668 = vpop.f32.mrf.mxu0
    %v3669 = vadd.f32 0.0, %v3668
    %3670 = vmatmul.bf16.gmra.mxu0 %v2477
    %v3671 = vpop.f32.mrf.mxu0
    %v3672 = vadd.f32 0.0, %v3671
    %v3673 = vpop.f32.mrf.mxu0
    %v3674 = vadd.f32 0.0, %v3673
    %3675 = vdwg.mxu0
    %3676 = vmatpush.bf16.msra.mxu0 0
    %3677 = vmatpush.bf16.msra.mxu0 0
    %3678 = vmatpush.bf16.msra.mxu0 0
    %3679 = vmatpush.bf16.msra.mxu0 0
    %3680 = vmatpush.bf16.msra.mxu0 0
    %3681 = vmatpush.bf16.msra.mxu0 0
    %3682 = vmatpush.bf16.msra.mxu0 %v2461
    %3683 = vmatpush.bf16.msra.mxu0 %v2397
    %3684 = vmatmul.bf16.gmra.mxu0 %v2474
    %v3685 = vpop.f32.mrf.mxu0
    %v3686 = vadd.f32 0.0, %v3685
    %v3687 = vpop.f32.mrf.mxu0
    %v3688 = vadd.f32 0.0, %v3687
    %3689 = vmatmul.bf16.gmra.mxu0 %v2477
    %v3690 = vpop.f32.mrf.mxu0
    %v3691 = vadd.f32 0.0, %v3690
    %v3692 = vpop.f32.mrf.mxu0
    %v3693 = vadd.f32 0.0, %v3692
    %3694 = vdwg.mxu0
    %v3695 = vld [vmem:[%s1] sm:$0x1]
    %v3696 = vmul.u32 %v3695, 128
    %v3697 = vlaneseq
    %v3698 = vand.u32 %v3697, 127
    %v3699 = vadd.s32 %v3698, 128
    %v3700 = vadd.s32 %v3698, 256
    %v3701 = vadd.s32 %v3698, 384
    %v3702 = vadd.s32 %v3698, 512
    %v3703 = vadd.s32 %v3698, 640
    %v3704 = vadd.s32 %v3698, 768
    %v3705 = vadd.s32 %v3698, 896
    %v3706 = vadd.s32 %v3698, 1024
    %v3707 = vadd.s32 %v3698, 1152
    %v3708 = vadd.s32 %v3698, 1280
    %v3709 = vadd.s32 %v3698, 1408
    %v3710 = vadd.s32 %v3698, 1536
    %v3711 = vadd.s32 %v3698, 1664
    %v3712 = vadd.s32 %v3698, 1792
    %v3713 = vadd.s32 %v3698, 1920
    %v3714 = vadd.s32 %v3698, 2048
    %v3715 = vadd.s32 %v3698, 2176
    %v3716 = vadd.s32 %v3698, 2304
    %v3717 = vadd.s32 %v3698, 2432
    %v3718 = vadd.s32 %v3698, 2560
    %v3719 = vadd.s32 %v3698, 2688
    %v3720 = vadd.s32 %v3698, 2816
    %v3721 = vadd.s32 %v3698, 2944
    %v3722 = vadd.s32 %v3698, 3072
    %v3723 = vadd.s32 %v3698, 3200
    %v3724 = vadd.s32 %v3698, 3328
    %v3725 = vadd.s32 %v3698, 3456
    %v3726 = vadd.s32 %v3698, 3584
    %v3727 = vadd.s32 %v3698, 3712
    %v3728 = vadd.s32 %v3698, 3840
    %v3729 = vadd.s32 %v3698, 3968
    %v3730 = vadd.s32 %v3698, 4096
    %v3731 = vadd.s32 %v3698, 4224
    %v3732 = vadd.s32 %v3698, 4352
    %v3733 = vadd.s32 %v3698, 4480
    %v3734 = vadd.s32 %v3698, 4608
    %v3735 = vadd.s32 %v3698, 4736
    %v3736 = vadd.s32 %v3698, 4864
    %v3737 = vadd.s32 %v3698, 4992
    %v3738 = vadd.s32 %v3698, 5120
    %v3739 = vadd.s32 %v3698, 5248
    %v3740 = vadd.s32 %v3698, 5376
    %v3741 = vadd.s32 %v3698, 5504
    %v3742 = vadd.s32 %v3698, 5632
    %v3743 = vadd.s32 %v3698, 5760
    %v3744 = vadd.s32 %v3698, 5888
    %v3745 = vadd.s32 %v3698, 6016
    %v3746 = vadd.s32 %v3698, 6144
    %v3747 = vadd.s32 %v3698, 6272
    %v3748 = vadd.s32 %v3698, 6400
    %v3749 = vadd.s32 %v3698, 6528
    %v3750 = vadd.s32 %v3698, 6656
    %v3751 = vadd.s32 %v3698, 6784
    %v3752 = vadd.s32 %v3698, 6912
    %v3753 = vadd.s32 %v3698, 7040
    %v3754 = vadd.s32 %v3698, 7168
    %v3755 = vadd.s32 %v3698, 7296
    %v3756 = vadd.s32 %v3698, 7424
    %v3757 = vadd.s32 %v3698, 7552
    %v3758 = vadd.s32 %v3698, 7680
    %v3759 = vadd.s32 %v3698, 7808
    %v3760 = vadd.s32 %v3698, 7936
    %v3761 = vadd.s32 %v3698, 8064
    %vm3762 = vcmp.lt.s32.totalorder %v3698, %v3696
    %vm3763 = vcmp.lt.s32.totalorder %v3699, %v3696
    %vm3764 = vcmp.lt.s32.totalorder %v3700, %v3696
    %vm3765 = vcmp.lt.s32.totalorder %v3701, %v3696
    %vm3766 = vcmp.lt.s32.totalorder %v3702, %v3696
    %vm3767 = vcmp.lt.s32.totalorder %v3703, %v3696
    %vm3768 = vcmp.lt.s32.totalorder %v3704, %v3696
    %vm3769 = vcmp.lt.s32.totalorder %v3705, %v3696
    %vm3770 = vcmp.lt.s32.totalorder %v3706, %v3696
    %vm3771 = vcmp.lt.s32.totalorder %v3707, %v3696
    %vm3772 = vcmp.lt.s32.totalorder %v3708, %v3696
    %vm3773 = vcmp.lt.s32.totalorder %v3709, %v3696
    %vm3774 = vcmp.lt.s32.totalorder %v3710, %v3696
    %vm3775 = vcmp.lt.s32.totalorder %v3711, %v3696
    %vm3776 = vcmp.lt.s32.totalorder %v3712, %v3696
    %vm3777 = vcmp.lt.s32.totalorder %v3713, %v3696
    %vm3778 = vcmp.lt.s32.totalorder %v3714, %v3696
    %vm3779 = vcmp.lt.s32.totalorder %v3715, %v3696
    %vm3780 = vcmp.lt.s32.totalorder %v3716, %v3696
    %vm3781 = vcmp.lt.s32.totalorder %v3717, %v3696
    %vm3782 = vcmp.lt.s32.totalorder %v3718, %v3696
    %vm3783 = vcmp.lt.s32.totalorder %v3719, %v3696
    %vm3784 = vcmp.lt.s32.totalorder %v3720, %v3696
    %vm3785 = vcmp.lt.s32.totalorder %v3721, %v3696
    %vm3786 = vcmp.lt.s32.totalorder %v3722, %v3696
    %vm3787 = vcmp.lt.s32.totalorder %v3723, %v3696
    %vm3788 = vcmp.lt.s32.totalorder %v3724, %v3696
    %vm3789 = vcmp.lt.s32.totalorder %v3725, %v3696
    %vm3790 = vcmp.lt.s32.totalorder %v3726, %v3696
    %vm3791 = vcmp.lt.s32.totalorder %v3727, %v3696
    %vm3792 = vcmp.lt.s32.totalorder %v3728, %v3696
    %vm3793 = vcmp.lt.s32.totalorder %v3729, %v3696
    %vm3794 = vcmp.lt.s32.totalorder %v3730, %v3696
    %vm3795 = vcmp.lt.s32.totalorder %v3731, %v3696
    %vm3796 = vcmp.lt.s32.totalorder %v3732, %v3696
    %vm3797 = vcmp.lt.s32.totalorder %v3733, %v3696
    %vm3798 = vcmp.lt.s32.totalorder %v3734, %v3696
    %vm3799 = vcmp.lt.s32.totalorder %v3735, %v3696
    %vm3800 = vcmp.lt.s32.totalorder %v3736, %v3696
    %vm3801 = vcmp.lt.s32.totalorder %v3737, %v3696
    %vm3802 = vcmp.lt.s32.totalorder %v3738, %v3696
    %vm3803 = vcmp.lt.s32.totalorder %v3739, %v3696
    %vm3804 = vcmp.lt.s32.totalorder %v3740, %v3696
    %vm3805 = vcmp.lt.s32.totalorder %v3741, %v3696
    %vm3806 = vcmp.lt.s32.totalorder %v3742, %v3696
    %vm3807 = vcmp.lt.s32.totalorder %v3743, %v3696
    %vm3808 = vcmp.lt.s32.totalorder %v3744, %v3696
    %vm3809 = vcmp.lt.s32.totalorder %v3745, %v3696
    %vm3810 = vcmp.lt.s32.totalorder %v3746, %v3696
    %vm3811 = vcmp.lt.s32.totalorder %v3747, %v3696
    %vm3812 = vcmp.lt.s32.totalorder %v3748, %v3696
    %vm3813 = vcmp.lt.s32.totalorder %v3749, %v3696
    %vm3814 = vcmp.lt.s32.totalorder %v3750, %v3696
    %vm3815 = vcmp.lt.s32.totalorder %v3751, %v3696
    %vm3816 = vcmp.lt.s32.totalorder %v3752, %v3696
    %vm3817 = vcmp.lt.s32.totalorder %v3753, %v3696
    %vm3818 = vcmp.lt.s32.totalorder %v3754, %v3696
    %vm3819 = vcmp.lt.s32.totalorder %v3755, %v3696
    %vm3820 = vcmp.lt.s32.totalorder %v3756, %v3696
    %vm3821 = vcmp.lt.s32.totalorder %v3757, %v3696
    %vm3822 = vcmp.lt.s32.totalorder %v3758, %v3696
    %vm3823 = vcmp.lt.s32.totalorder %v3759, %v3696
    %vm3824 = vcmp.lt.s32.totalorder %v3760, %v3696
    %vm3825 = vcmp.lt.s32.totalorder %v3761, %v3696
    %v3826 = vsel %vm3762, 1, 0
    %v3827 = vsel %vm3763, 1, 0
    %v3828 = vsel %vm3764, 1, 0
    %v3829 = vsel %vm3765, 1, 0
    %v3830 = vsel %vm3766, 1, 0
    %v3831 = vsel %vm3767, 1, 0
    %v3832 = vsel %vm3768, 1, 0
    %v3833 = vsel %vm3769, 1, 0
    %v3834 = vsel %vm3770, 1, 0
    %v3835 = vsel %vm3771, 1, 0
    %v3836 = vsel %vm3772, 1, 0
    %v3837 = vsel %vm3773, 1, 0
    %v3838 = vsel %vm3774, 1, 0
    %v3839 = vsel %vm3775, 1, 0
    %v3840 = vsel %vm3776, 1, 0
    %v3841 = vsel %vm3777, 1, 0
    %v3842 = vsel %vm3778, 1, 0
    %v3843 = vsel %vm3779, 1, 0
    %v3844 = vsel %vm3780, 1, 0
    %v3845 = vsel %vm3781, 1, 0
    %v3846 = vsel %vm3782, 1, 0
    %v3847 = vsel %vm3783, 1, 0
    %v3848 = vsel %vm3784, 1, 0
    %v3849 = vsel %vm3785, 1, 0
    %v3850 = vsel %vm3786, 1, 0
    %v3851 = vsel %vm3787, 1, 0
    %v3852 = vsel %vm3788, 1, 0
    %v3853 = vsel %vm3789, 1, 0
    %v3854 = vsel %vm3790, 1, 0
    %v3855 = vsel %vm3791, 1, 0
    %v3856 = vsel %vm3792, 1, 0
    %v3857 = vsel %vm3793, 1, 0
    %v3858 = vsel %vm3794, 1, 0
    %v3859 = vsel %vm3795, 1, 0
    %v3860 = vsel %vm3796, 1, 0
    %v3861 = vsel %vm3797, 1, 0
    %v3862 = vsel %vm3798, 1, 0
    %v3863 = vsel %vm3799, 1, 0
    %v3864 = vsel %vm3800, 1, 0
    %v3865 = vsel %vm3801, 1, 0
    %v3866 = vsel %vm3802, 1, 0
    %v3867 = vsel %vm3803, 1, 0
    %v3868 = vsel %vm3804, 1, 0
    %v3869 = vsel %vm3805, 1, 0
    %v3870 = vsel %vm3806, 1, 0
    %v3871 = vsel %vm3807, 1, 0
    %v3872 = vsel %vm3808, 1, 0
    %v3873 = vsel %vm3809, 1, 0
    %v3874 = vsel %vm3810, 1, 0
    %v3875 = vsel %vm3811, 1, 0
    %v3876 = vsel %vm3812, 1, 0
    %v3877 = vsel %vm3813, 1, 0
    %v3878 = vsel %vm3814, 1, 0
    %v3879 = vsel %vm3815, 1, 0
    %v3880 = vsel %vm3816, 1, 0
    %v3881 = vsel %vm3817, 1, 0
    %v3882 = vsel %vm3818, 1, 0
    %v3883 = vsel %vm3819, 1, 0
    %v3884 = vsel %vm3820, 1, 0
    %v3885 = vsel %vm3821, 1, 0
    %v3886 = vsel %vm3822, 1, 0
    %v3887 = vsel %vm3823, 1, 0
    %v3888 = vsel %vm3824, 1, 0
    %v3889 = vsel %vm3825, 1, 0
    %v3890 = vperm.slane %v3826, 0
    %v3891 = vperm.slane %v3827, 0
    %v3892 = vperm.slane %v3828, 0
    %v3893 = vperm.slane %v3829, 0
    %v3894 = vperm.slane %v3830, 0
    %v3895 = vperm.slane %v3831, 0
    %v3896 = vperm.slane %v3832, 0
    %v3897 = vperm.slane %v3833, 0
    %v3898 = vperm.slane %v3834, 0
    %v3899 = vperm.slane %v3835, 0
    %v3900 = vperm.slane %v3836, 0
    %v3901 = vperm.slane %v3837, 0
    %v3902 = vperm.slane %v3838, 0
    %v3903 = vperm.slane %v3839, 0
    %v3904 = vperm.slane %v3840, 0
    %v3905 = vperm.slane %v3841, 0
    %v3906 = vperm.slane %v3842, 0
    %v3907 = vperm.slane %v3843, 0
    %v3908 = vperm.slane %v3844, 0
    %v3909 = vperm.slane %v3845, 0
    %v3910 = vperm.slane %v3846, 0
    %v3911 = vperm.slane %v3847, 0
    %v3912 = vperm.slane %v3848, 0
    %v3913 = vperm.slane %v3849, 0
    %v3914 = vperm.slane %v3850, 0
    %v3915 = vperm.slane %v3851, 0
    %v3916 = vperm.slane %v3852, 0
    %v3917 = vperm.slane %v3853, 0
    %v3918 = vperm.slane %v3854, 0
    %v3919 = vperm.slane %v3855, 0
    %v3920 = vperm.slane %v3856, 0
    %v3921 = vperm.slane %v3857, 0
    %v3922 = vperm.slane %v3858, 0
    %v3923 = vperm.slane %v3859, 0
    %v3924 = vperm.slane %v3860, 0
    %v3925 = vperm.slane %v3861, 0
    %v3926 = vperm.slane %v3862, 0
    %v3927 = vperm.slane %v3863, 0
    %v3928 = vperm.slane %v3864, 0
    %v3929 = vperm.slane %v3865, 0
    %v3930 = vperm.slane %v3866, 0
    %v3931 = vperm.slane %v3867, 0
    %v3932 = vperm.slane %v3868, 0
    %v3933 = vperm.slane %v3869, 0
    %v3934 = vperm.slane %v3870, 0
    %v3935 = vperm.slane %v3871, 0
    %v3936 = vperm.slane %v3872, 0
    %v3937 = vperm.slane %v3873, 0
    %v3938 = vperm.slane %v3874, 0
    %v3939 = vperm.slane %v3875, 0
    %v3940 = vperm.slane %v3876, 0
    %v3941 = vperm.slane %v3877, 0
    %v3942 = vperm.slane %v3878, 0
    %v3943 = vperm.slane %v3879, 0
    %v3944 = vperm.slane %v3880, 0
    %v3945 = vperm.slane %v3881, 0
    %v3946 = vperm.slane %v3882, 0
    %v3947 = vperm.slane %v3883, 0
    %v3948 = vperm.slane %v3884, 0
    %v3949 = vperm.slane %v3885, 0
    %v3950 = vperm.slane %v3886, 0
    %v3951 = vperm.slane %v3887, 0
    %v3952 = vperm.slane %v3888, 0
    %v3953 = vperm.slane %v3889, 0
    %vm3954 = vcmp.eq.s32.totalorder %v3890, 1
    %vm3955 = vcmp.eq.s32.totalorder %v3891, 1
    %vm3956 = vcmp.eq.s32.totalorder %v3892, 1
    %vm3957 = vcmp.eq.s32.totalorder %v3893, 1
    %vm3958 = vcmp.eq.s32.totalorder %v3894, 1
    %vm3959 = vcmp.eq.s32.totalorder %v3895, 1
    %vm3960 = vcmp.eq.s32.totalorder %v3896, 1
    %vm3961 = vcmp.eq.s32.totalorder %v3897, 1
    %vm3962 = vcmp.eq.s32.totalorder %v3898, 1
    %vm3963 = vcmp.eq.s32.totalorder %v3899, 1
    %vm3964 = vcmp.eq.s32.totalorder %v3900, 1
    %vm3965 = vcmp.eq.s32.totalorder %v3901, 1
    %vm3966 = vcmp.eq.s32.totalorder %v3902, 1
    %vm3967 = vcmp.eq.s32.totalorder %v3903, 1
    %vm3968 = vcmp.eq.s32.totalorder %v3904, 1
    %vm3969 = vcmp.eq.s32.totalorder %v3905, 1
    %vm3970 = vcmp.eq.s32.totalorder %v3906, 1
    %vm3971 = vcmp.eq.s32.totalorder %v3907, 1
    %vm3972 = vcmp.eq.s32.totalorder %v3908, 1
    %vm3973 = vcmp.eq.s32.totalorder %v3909, 1
    %vm3974 = vcmp.eq.s32.totalorder %v3910, 1
    %vm3975 = vcmp.eq.s32.totalorder %v3911, 1
    %vm3976 = vcmp.eq.s32.totalorder %v3912, 1
    %vm3977 = vcmp.eq.s32.totalorder %v3913, 1
    %vm3978 = vcmp.eq.s32.totalorder %v3914, 1
    %vm3979 = vcmp.eq.s32.totalorder %v3915, 1
    %vm3980 = vcmp.eq.s32.totalorder %v3916, 1
    %vm3981 = vcmp.eq.s32.totalorder %v3917, 1
    %vm3982 = vcmp.eq.s32.totalorder %v3918, 1
    %vm3983 = vcmp.eq.s32.totalorder %v3919, 1
    %vm3984 = vcmp.eq.s32.totalorder %v3920, 1
    %vm3985 = vcmp.eq.s32.totalorder %v3921, 1
    %vm3986 = vcmp.eq.s32.totalorder %v3922, 1
    %vm3987 = vcmp.eq.s32.totalorder %v3923, 1
    %vm3988 = vcmp.eq.s32.totalorder %v3924, 1
    %vm3989 = vcmp.eq.s32.totalorder %v3925, 1
    %vm3990 = vcmp.eq.s32.totalorder %v3926, 1
    %vm3991 = vcmp.eq.s32.totalorder %v3927, 1
    %vm3992 = vcmp.eq.s32.totalorder %v3928, 1
    %vm3993 = vcmp.eq.s32.totalorder %v3929, 1
    %vm3994 = vcmp.eq.s32.totalorder %v3930, 1
    %vm3995 = vcmp.eq.s32.totalorder %v3931, 1
    %vm3996 = vcmp.eq.s32.totalorder %v3932, 1
    %vm3997 = vcmp.eq.s32.totalorder %v3933, 1
    %vm3998 = vcmp.eq.s32.totalorder %v3934, 1
    %vm3999 = vcmp.eq.s32.totalorder %v3935, 1
    %vm4000 = vcmp.eq.s32.totalorder %v3936, 1
    %vm4001 = vcmp.eq.s32.totalorder %v3937, 1
    %vm4002 = vcmp.eq.s32.totalorder %v3938, 1
    %vm4003 = vcmp.eq.s32.totalorder %v3939, 1
    %vm4004 = vcmp.eq.s32.totalorder %v3940, 1
    %vm4005 = vcmp.eq.s32.totalorder %v3941, 1
    %vm4006 = vcmp.eq.s32.totalorder %v3942, 1
    %vm4007 = vcmp.eq.s32.totalorder %v3943, 1
    %vm4008 = vcmp.eq.s32.totalorder %v3944, 1
    %vm4009 = vcmp.eq.s32.totalorder %v3945, 1
    %vm4010 = vcmp.eq.s32.totalorder %v3946, 1
    %vm4011 = vcmp.eq.s32.totalorder %v3947, 1
    %vm4012 = vcmp.eq.s32.totalorder %v3948, 1
    %vm4013 = vcmp.eq.s32.totalorder %v3949, 1
    %vm4014 = vcmp.eq.s32.totalorder %v3950, 1
    %vm4015 = vcmp.eq.s32.totalorder %v3951, 1
    %vm4016 = vcmp.eq.s32.totalorder %v3952, 1
    %vm4017 = vcmp.eq.s32.totalorder %v3953, 1
    %v4018 = vsel %vm3954, %v2489, -inf
    %v4019 = vsel %vm3955, %v2508, -inf
    %v4020 = vsel %vm3956, %v2527, -inf
    %v4021 = vsel %vm3957, %v2546, -inf
    %v4022 = vsel %vm3958, %v2565, -inf
    %v4023 = vsel %vm3959, %v2584, -inf
    %v4024 = vsel %vm3960, %v2603, -inf
    %v4025 = vsel %vm3961, %v2622, -inf
    %v4026 = vsel %vm3962, %v2641, -inf
    %v4027 = vsel %vm3963, %v2660, -inf
    %v4028 = vsel %vm3964, %v2679, -inf
    %v4029 = vsel %vm3965, %v2698, -inf
    %v4030 = vsel %vm3966, %v2717, -inf
    %v4031 = vsel %vm3967, %v2736, -inf
    %v4032 = vsel %vm3968, %v2755, -inf
    %v4033 = vsel %vm3969, %v2774, -inf
    %v4034 = vsel %vm3970, %v2793, -inf
    %v4035 = vsel %vm3971, %v2812, -inf
    %v4036 = vsel %vm3972, %v2831, -inf
    %v4037 = vsel %vm3973, %v2850, -inf
    %v4038 = vsel %vm3974, %v2869, -inf
    %v4039 = vsel %vm3975, %v2888, -inf
    %v4040 = vsel %vm3976, %v2907, -inf
    %v4041 = vsel %vm3977, %v2926, -inf
    %v4042 = vsel %vm3978, %v2945, -inf
    %v4043 = vsel %vm3979, %v2964, -inf
    %v4044 = vsel %vm3980, %v2983, -inf
    %v4045 = vsel %vm3981, %v3002, -inf
    %v4046 = vsel %vm3982, %v3021, -inf
    %v4047 = vsel %vm3983, %v3040, -inf
    %v4048 = vsel %vm3984, %v3059, -inf
    %v4049 = vsel %vm3985, %v3078, -inf
    %v4050 = vsel %vm3986, %v3097, -inf
    %v4051 = vsel %vm3987, %v3116, -inf
    %v4052 = vsel %vm3988, %v3135, -inf
    %v4053 = vsel %vm3989, %v3154, -inf
    %v4054 = vsel %vm3990, %v3173, -inf
    %v4055 = vsel %vm3991, %v3192, -inf
    %v4056 = vsel %vm3992, %v3211, -inf
    %v4057 = vsel %vm3993, %v3230, -inf
    %v4058 = vsel %vm3994, %v3249, -inf
    %v4059 = vsel %vm3995, %v3268, -inf
    %v4060 = vsel %vm3996, %v3287, -inf
    %v4061 = vsel %vm3997, %v3306, -inf
    %v4062 = vsel %vm3998, %v3325, -inf
    %v4063 = vsel %vm3999, %v3344, -inf
    %v4064 = vsel %vm4000, %v3363, -inf
    %v4065 = vsel %vm4001, %v3382, -inf
    %v4066 = vsel %vm4002, %v3401, -inf
    %v4067 = vsel %vm4003, %v3420, -inf
    %v4068 = vsel %vm4004, %v3439, -inf
    %v4069 = vsel %vm4005, %v3458, -inf
    %v4070 = vsel %vm4006, %v3477, -inf
    %v4071 = vsel %vm4007, %v3496, -inf
    %v4072 = vsel %vm4008, %v3515, -inf
    %v4073 = vsel %vm4009, %v3534, -inf
    %v4074 = vsel %vm4010, %v3553, -inf
    %v4075 = vsel %vm4011, %v3572, -inf
    %v4076 = vsel %vm4012, %v3591, -inf
    %v4077 = vsel %vm4013, %v3610, -inf
    %v4078 = vsel %vm4014, %v3629, -inf
    %v4079 = vsel %vm4015, %v3648, -inf
    %v4080 = vsel %vm4016, %v3667, -inf
    %v4081 = vsel %vm4017, %v3686, -inf
    %v4082 = vsel %vm3954, %v2491, -inf
    %v4083 = vsel %vm3955, %v2510, -inf
    %v4084 = vsel %vm3956, %v2529, -inf
    %v4085 = vsel %vm3957, %v2548, -inf
    %v4086 = vsel %vm3958, %v2567, -inf
    %v4087 = vsel %vm3959, %v2586, -inf
    %v4088 = vsel %vm3960, %v2605, -inf
    %v4089 = vsel %vm3961, %v2624, -inf
    %v4090 = vsel %vm3962, %v2643, -inf
    %v4091 = vsel %vm3963, %v2662, -inf
    %v4092 = vsel %vm3964, %v2681, -inf
    %v4093 = vsel %vm3965, %v2700, -inf
    %v4094 = vsel %vm3966, %v2719, -inf
    %v4095 = vsel %vm3967, %v2738, -inf
    %v4096 = vsel %vm3968, %v2757, -inf
    %v4097 = vsel %vm3969, %v2776, -inf
    %v4098 = vsel %vm3970, %v2795, -inf
    %v4099 = vsel %vm3971, %v2814, -inf
    %v4100 = vsel %vm3972, %v2833, -inf
    %v4101 = vsel %vm3973, %v2852, -inf
    %v4102 = vsel %vm3974, %v2871, -inf
    %v4103 = vsel %vm3975, %v2890, -inf
    %v4104 = vsel %vm3976, %v2909, -inf
    %v4105 = vsel %vm3977, %v2928, -inf
    %v4106 = vsel %vm3978, %v2947, -inf
    %v4107 = vsel %vm3979, %v2966, -inf
    %v4108 = vsel %vm3980, %v2985, -inf
    %v4109 = vsel %vm3981, %v3004, -inf
    %v4110 = vsel %vm3982, %v3023, -inf
    %v4111 = vsel %vm3983, %v3042, -inf
    %v4112 = vsel %vm3984, %v3061, -inf
    %v4113 = vsel %vm3985, %v3080, -inf
    %v4114 = vsel %vm3986, %v3099, -inf
    %v4115 = vsel %vm3987, %v3118, -inf
    %v4116 = vsel %vm3988, %v3137, -inf
    %v4117 = vsel %vm3989, %v3156, -inf
    %v4118 = vsel %vm3990, %v3175, -inf
    %v4119 = vsel %vm3991, %v3194, -inf
    %v4120 = vsel %vm3992, %v3213, -inf
    %v4121 = vsel %vm3993, %v3232, -inf
    %v4122 = vsel %vm3994, %v3251, -inf
    %v4123 = vsel %vm3995, %v3270, -inf
    %v4124 = vsel %vm3996, %v3289, -inf
    %v4125 = vsel %vm3997, %v3308, -inf
    %v4126 = vsel %vm3998, %v3327, -inf
    %v4127 = vsel %vm3999, %v3346, -inf
    %v4128 = vsel %vm4000, %v3365, -inf
    %v4129 = vsel %vm4001, %v3384, -inf
    %v4130 = vsel %vm4002, %v3403, -inf
    %v4131 = vsel %vm4003, %v3422, -inf
    %v4132 = vsel %vm4004, %v3441, -inf
    %v4133 = vsel %vm4005, %v3460, -inf
    %v4134 = vsel %vm4006, %v3479, -inf
    %v4135 = vsel %vm4007, %v3498, -inf
    %v4136 = vsel %vm4008, %v3517, -inf
    %v4137 = vsel %vm4009, %v3536, -inf
    %v4138 = vsel %vm4010, %v3555, -inf
    %v4139 = vsel %vm4011, %v3574, -inf
    %v4140 = vsel %vm4012, %v3593, -inf
    %v4141 = vsel %vm4013, %v3612, -inf
    %v4142 = vsel %vm4014, %v3631, -inf
    %v4143 = vsel %vm4015, %v3650, -inf
    %v4144 = vsel %vm4016, %v3669, -inf
    %v4145 = vsel %vm4017, %v3688, -inf
    %v4146 = vsel %vm3954, %v2494, -inf
    %v4147 = vsel %vm3955, %v2513, -inf
    %v4148 = vsel %vm3956, %v2532, -inf
    %v4149 = vsel %vm3957, %v2551, -inf
    %v4150 = vsel %vm3958, %v2570, -inf
    %v4151 = vsel %vm3959, %v2589, -inf
    %v4152 = vsel %vm3960, %v2608, -inf
    %v4153 = vsel %vm3961, %v2627, -inf
    %v4154 = vsel %vm3962, %v2646, -inf
    %v4155 = vsel %vm3963, %v2665, -inf
    %v4156 = vsel %vm3964, %v2684, -inf
    %v4157 = vsel %vm3965, %v2703, -inf
    %v4158 = vsel %vm3966, %v2722, -inf
    %v4159 = vsel %vm3967, %v2741, -inf
    %v4160 = vsel %vm3968, %v2760, -inf
    %v4161 = vsel %vm3969, %v2779, -inf
    %v4162 = vsel %vm3970, %v2798, -inf
    %v4163 = vsel %vm3971, %v2817, -inf
    %v4164 = vsel %vm3972, %v2836, -inf
    %v4165 = vsel %vm3973, %v2855, -inf
    %v4166 = vsel %vm3974, %v2874, -inf
    %v4167 = vsel %vm3975, %v2893, -inf
    %v4168 = vsel %vm3976, %v2912, -inf
    %v4169 = vsel %vm3977, %v2931, -inf
    %v4170 = vsel %vm3978, %v2950, -inf
    %v4171 = vsel %vm3979, %v2969, -inf
    %v4172 = vsel %vm3980, %v2988, -inf
    %v4173 = vsel %vm3981, %v3007, -inf
    %v4174 = vsel %vm3982, %v3026, -inf
    %v4175 = vsel %vm3983, %v3045, -inf
    %v4176 = vsel %vm3984, %v3064, -inf
    %v4177 = vsel %vm3985, %v3083, -inf
    %v4178 = vsel %vm3986, %v3102, -inf
    %v4179 = vsel %vm3987, %v3121, -inf
    %v4180 = vsel %vm3988, %v3140, -inf
    %v4181 = vsel %vm3989, %v3159, -inf
    %v4182 = vsel %vm3990, %v3178, -inf
    %v4183 = vsel %vm3991, %v3197, -inf
    %v4184 = vsel %vm3992, %v3216, -inf
    %v4185 = vsel %vm3993, %v3235, -inf
    %v4186 = vsel %vm3994, %v3254, -inf
    %v4187 = vsel %vm3995, %v3273, -inf
    %v4188 = vsel %vm3996, %v3292, -inf
    %v4189 = vsel %vm3997, %v3311, -inf
    %v4190 = vsel %vm3998, %v3330, -inf
    %v4191 = vsel %vm3999, %v3349, -inf
    %v4192 = vsel %vm4000, %v3368, -inf
    %v4193 = vsel %vm4001, %v3387, -inf
    %v4194 = vsel %vm4002, %v3406, -inf
    %v4195 = vsel %vm4003, %v3425, -inf
    %v4196 = vsel %vm4004, %v3444, -inf
    %v4197 = vsel %vm4005, %v3463, -inf
    %v4198 = vsel %vm4006, %v3482, -inf
    %v4199 = vsel %vm4007, %v3501, -inf
    %v4200 = vsel %vm4008, %v3520, -inf
    %v4201 = vsel %vm4009, %v3539, -inf
    %v4202 = vsel %vm4010, %v3558, -inf
    %v4203 = vsel %vm4011, %v3577, -inf
    %v4204 = vsel %vm4012, %v3596, -inf
    %v4205 = vsel %vm4013, %v3615, -inf
    %v4206 = vsel %vm4014, %v3634, -inf
    %v4207 = vsel %vm4015, %v3653, -inf
    %v4208 = vsel %vm4016, %v3672, -inf
    %v4209 = vsel %vm4017, %v3691, -inf
    %v4210 = vsel %vm3954, %v2496, -inf
    %v4211 = vsel %vm3955, %v2515, -inf
    %v4212 = vsel %vm3956, %v2534, -inf
    %v4213 = vsel %vm3957, %v2553, -inf
    %v4214 = vsel %vm3958, %v2572, -inf
    %v4215 = vsel %vm3959, %v2591, -inf
    %v4216 = vsel %vm3960, %v2610, -inf
    %v4217 = vsel %vm3961, %v2629, -inf
    %v4218 = vsel %vm3962, %v2648, -inf
    %v4219 = vsel %vm3963, %v2667, -inf
    %v4220 = vsel %vm3964, %v2686, -inf
    %v4221 = vsel %vm3965, %v2705, -inf
    %v4222 = vsel %vm3966, %v2724, -inf
    %v4223 = vsel %vm3967, %v2743, -inf
    %v4224 = vsel %vm3968, %v2762, -inf
    %v4225 = vsel %vm3969, %v2781, -inf
    %v4226 = vsel %vm3970, %v2800, -inf
    %v4227 = vsel %vm3971, %v2819, -inf
    %v4228 = vsel %vm3972, %v2838, -inf
    %v4229 = vsel %vm3973, %v2857, -inf
    %v4230 = vsel %vm3974, %v2876, -inf
    %v4231 = vsel %vm3975, %v2895, -inf
    %v4232 = vsel %vm3976, %v2914, -inf
    %v4233 = vsel %vm3977, %v2933, -inf
    %v4234 = vsel %vm3978, %v2952, -inf
    %v4235 = vsel %vm3979, %v2971, -inf
    %v4236 = vsel %vm3980, %v2990, -inf
    %v4237 = vsel %vm3981, %v3009, -inf
    %v4238 = vsel %vm3982, %v3028, -inf
    %v4239 = vsel %vm3983, %v3047, -inf
    %v4240 = vsel %vm3984, %v3066, -inf
    %v4241 = vsel %vm3985, %v3085, -inf
    %v4242 = vsel %vm3986, %v3104, -inf
    %v4243 = vsel %vm3987, %v3123, -inf
    %v4244 = vsel %vm3988, %v3142, -inf
    %v4245 = vsel %vm3989, %v3161, -inf
    %v4246 = vsel %vm3990, %v3180, -inf
    %v4247 = vsel %vm3991, %v3199, -inf
    %v4248 = vsel %vm3992, %v3218, -inf
    %v4249 = vsel %vm3993, %v3237, -inf
    %v4250 = vsel %vm3994, %v3256, -inf
    %v4251 = vsel %vm3995, %v3275, -inf
    %v4252 = vsel %vm3996, %v3294, -inf
    %v4253 = vsel %vm3997, %v3313, -inf
    %v4254 = vsel %vm3998, %v3332, -inf
    %v4255 = vsel %vm3999, %v3351, -inf
    %v4256 = vsel %vm4000, %v3370, -inf
    %v4257 = vsel %vm4001, %v3389, -inf
    %v4258 = vsel %vm4002, %v3408, -inf
    %v4259 = vsel %vm4003, %v3427, -inf
    %v4260 = vsel %vm4004, %v3446, -inf
    %v4261 = vsel %vm4005, %v3465, -inf
    %v4262 = vsel %vm4006, %v3484, -inf
    %v4263 = vsel %vm4007, %v3503, -inf
    %v4264 = vsel %vm4008, %v3522, -inf
    %v4265 = vsel %vm4009, %v3541, -inf
    %v4266 = vsel %vm4010, %v3560, -inf
    %v4267 = vsel %vm4011, %v3579, -inf
    %v4268 = vsel %vm4012, %v3598, -inf
    %v4269 = vsel %vm4013, %v3617, -inf
    %v4270 = vsel %vm4014, %v3636, -inf
    %v4271 = vsel %vm4015, %v3655, -inf
    %v4272 = vsel %vm4016, %v3674, -inf
    %v4273 = vsel %vm4017, %v3693, -inf
    %v4274 = vmax.f32 %v4018, %v4050
    %v4275 = vmax.f32 %v4019, %v4051
    %v4276 = vmax.f32 %v4020, %v4052
    %v4277 = vmax.f32 %v4021, %v4053
    %v4278 = vmax.f32 %v4022, %v4054
    %v4279 = vmax.f32 %v4023, %v4055
    %v4280 = vmax.f32 %v4024, %v4056
    %v4281 = vmax.f32 %v4025, %v4057
    %v4282 = vmax.f32 %v4026, %v4058
    %v4283 = vmax.f32 %v4027, %v4059
    %v4284 = vmax.f32 %v4028, %v4060
    %v4285 = vmax.f32 %v4029, %v4061
    %v4286 = vmax.f32 %v4030, %v4062
    %v4287 = vmax.f32 %v4031, %v4063
    %v4288 = vmax.f32 %v4032, %v4064
    %v4289 = vmax.f32 %v4033, %v4065
    %v4290 = vmax.f32 %v4034, %v4066
    %v4291 = vmax.f32 %v4035, %v4067
    %v4292 = vmax.f32 %v4036, %v4068
    %v4293 = vmax.f32 %v4037, %v4069
    %v4294 = vmax.f32 %v4038, %v4070
    %v4295 = vmax.f32 %v4039, %v4071
    %v4296 = vmax.f32 %v4040, %v4072
    %v4297 = vmax.f32 %v4041, %v4073
    %v4298 = vmax.f32 %v4042, %v4074
    %v4299 = vmax.f32 %v4043, %v4075
    %v4300 = vmax.f32 %v4044, %v4076
    %v4301 = vmax.f32 %v4045, %v4077
    %v4302 = vmax.f32 %v4046, %v4078
    %v4303 = vmax.f32 %v4047, %v4079
    %v4304 = vmax.f32 %v4048, %v4080
    %v4305 = vmax.f32 %v4049, %v4081
    %v4306 = vmax.f32 %v4082, %v4114
    %v4307 = vmax.f32 %v4083, %v4115
    %v4308 = vmax.f32 %v4084, %v4116
    %v4309 = vmax.f32 %v4085, %v4117
    %v4310 = vmax.f32 %v4086, %v4118
    %v4311 = vmax.f32 %v4087, %v4119
    %v4312 = vmax.f32 %v4088, %v4120
    %v4313 = vmax.f32 %v4089, %v4121
    %v4314 = vmax.f32 %v4090, %v4122
    %v4315 = vmax.f32 %v4091, %v4123
    %v4316 = vmax.f32 %v4092, %v4124
    %v4317 = vmax.f32 %v4093, %v4125
    %v4318 = vmax.f32 %v4094, %v4126
    %v4319 = vmax.f32 %v4095, %v4127
    %v4320 = vmax.f32 %v4096, %v4128
    %v4321 = vmax.f32 %v4097, %v4129
    %v4322 = vmax.f32 %v4098, %v4130
    %v4323 = vmax.f32 %v4099, %v4131
    %v4324 = vmax.f32 %v4100, %v4132
    %v4325 = vmax.f32 %v4101, %v4133
    %v4326 = vmax.f32 %v4102, %v4134
    %v4327 = vmax.f32 %v4103, %v4135
    %v4328 = vmax.f32 %v4104, %v4136
    %v4329 = vmax.f32 %v4105, %v4137
    %v4330 = vmax.f32 %v4106, %v4138
    %v4331 = vmax.f32 %v4107, %v4139
    %v4332 = vmax.f32 %v4108, %v4140
    %v4333 = vmax.f32 %v4109, %v4141
    %v4334 = vmax.f32 %v4110, %v4142
    %v4335 = vmax.f32 %v4111, %v4143
    %v4336 = vmax.f32 %v4112, %v4144
    %v4337 = vmax.f32 %v4113, %v4145
    %v4338 = vmax.f32 %v4146, %v4178
    %v4339 = vmax.f32 %v4147, %v4179
    %v4340 = vmax.f32 %v4148, %v4180
    %v4341 = vmax.f32 %v4149, %v4181
    %v4342 = vmax.f32 %v4150, %v4182
    %v4343 = vmax.f32 %v4151, %v4183
    %v4344 = vmax.f32 %v4152, %v4184
    %v4345 = vmax.f32 %v4153, %v4185
    %v4346 = vmax.f32 %v4154, %v4186
    %v4347 = vmax.f32 %v4155, %v4187
    %v4348 = vmax.f32 %v4156, %v4188
    %v4349 = vmax.f32 %v4157, %v4189
    %v4350 = vmax.f32 %v4158, %v4190
    %v4351 = vmax.f32 %v4159, %v4191
    %v4352 = vmax.f32 %v4160, %v4192
    %v4353 = vmax.f32 %v4161, %v4193
    %v4354 = vmax.f32 %v4162, %v4194
    %v4355 = vmax.f32 %v4163, %v4195
    %v4356 = vmax.f32 %v4164, %v4196
    %v4357 = vmax.f32 %v4165, %v4197
    %v4358 = vmax.f32 %v4166, %v4198
    %v4359 = vmax.f32 %v4167, %v4199
    %v4360 = vmax.f32 %v4168, %v4200
    %v4361 = vmax.f32 %v4169, %v4201
    %v4362 = vmax.f32 %v4170, %v4202
    %v4363 = vmax.f32 %v4171, %v4203
    %v4364 = vmax.f32 %v4172, %v4204
    %v4365 = vmax.f32 %v4173, %v4205
    %v4366 = vmax.f32 %v4174, %v4206
    %v4367 = vmax.f32 %v4175, %v4207
    %v4368 = vmax.f32 %v4176, %v4208
    %v4369 = vmax.f32 %v4177, %v4209
    %v4370 = vmax.f32 %v4210, %v4242
    %v4371 = vmax.f32 %v4211, %v4243
    %v4372 = vmax.f32 %v4212, %v4244
    %v4373 = vmax.f32 %v4213, %v4245
    %v4374 = vmax.f32 %v4214, %v4246
    %v4375 = vmax.f32 %v4215, %v4247
    %v4376 = vmax.f32 %v4216, %v4248
    %v4377 = vmax.f32 %v4217, %v4249
    %v4378 = vmax.f32 %v4218, %v4250
    %v4379 = vmax.f32 %v4219, %v4251
    %v4380 = vmax.f32 %v4220, %v4252
    %v4381 = vmax.f32 %v4221, %v4253
    %v4382 = vmax.f32 %v4222, %v4254
    %v4383 = vmax.f32 %v4223, %v4255
    %v4384 = vmax.f32 %v4224, %v4256
    %v4385 = vmax.f32 %v4225, %v4257
    %v4386 = vmax.f32 %v4226, %v4258
    %v4387 = vmax.f32 %v4227, %v4259
    %v4388 = vmax.f32 %v4228, %v4260
    %v4389 = vmax.f32 %v4229, %v4261
    %v4390 = vmax.f32 %v4230, %v4262
    %v4391 = vmax.f32 %v4231, %v4263
    %v4392 = vmax.f32 %v4232, %v4264
    %v4393 = vmax.f32 %v4233, %v4265
    %v4394 = vmax.f32 %v4234, %v4266
    %v4395 = vmax.f32 %v4235, %v4267
    %v4396 = vmax.f32 %v4236, %v4268
    %v4397 = vmax.f32 %v4237, %v4269
    %v4398 = vmax.f32 %v4238, %v4270
    %v4399 = vmax.f32 %v4239, %v4271
    %v4400 = vmax.f32 %v4240, %v4272
    %v4401 = vmax.f32 %v4241, %v4273
    %v4402 = vmax.f32 %v4274, %v4290
    %v4403 = vmax.f32 %v4275, %v4291
    %v4404 = vmax.f32 %v4276, %v4292
    %v4405 = vmax.f32 %v4277, %v4293
    %v4406 = vmax.f32 %v4278, %v4294
    %v4407 = vmax.f32 %v4279, %v4295
    %v4408 = vmax.f32 %v4280, %v4296
    %v4409 = vmax.f32 %v4281, %v4297
    %v4410 = vmax.f32 %v4282, %v4298
    %v4411 = vmax.f32 %v4283, %v4299
    %v4412 = vmax.f32 %v4284, %v4300
    %v4413 = vmax.f32 %v4285, %v4301
    %v4414 = vmax.f32 %v4286, %v4302
    %v4415 = vmax.f32 %v4287, %v4303
    %v4416 = vmax.f32 %v4288, %v4304
    %v4417 = vmax.f32 %v4289, %v4305
    %v4418 = vmax.f32 %v4306, %v4322
    %v4419 = vmax.f32 %v4307, %v4323
    %v4420 = vmax.f32 %v4308, %v4324
    %v4421 = vmax.f32 %v4309, %v4325
    %v4422 = vmax.f32 %v4310, %v4326
    %v4423 = vmax.f32 %v4311, %v4327
    %v4424 = vmax.f32 %v4312, %v4328
    %v4425 = vmax.f32 %v4313, %v4329
    %v4426 = vmax.f32 %v4314, %v4330
    %v4427 = vmax.f32 %v4315, %v4331
    %v4428 = vmax.f32 %v4316, %v4332
    %v4429 = vmax.f32 %v4317, %v4333
    %v4430 = vmax.f32 %v4318, %v4334
    %v4431 = vmax.f32 %v4319, %v4335
    %v4432 = vmax.f32 %v4320, %v4336
    %v4433 = vmax.f32 %v4321, %v4337
    %v4434 = vmax.f32 %v4338, %v4354
    %v4435 = vmax.f32 %v4339, %v4355
    %v4436 = vmax.f32 %v4340, %v4356
    %v4437 = vmax.f32 %v4341, %v4357
    %v4438 = vmax.f32 %v4342, %v4358
    %v4439 = vmax.f32 %v4343, %v4359
    %v4440 = vmax.f32 %v4344, %v4360
    %v4441 = vmax.f32 %v4345, %v4361
    %v4442 = vmax.f32 %v4346, %v4362
    %v4443 = vmax.f32 %v4347, %v4363
    %v4444 = vmax.f32 %v4348, %v4364
    %v4445 = vmax.f32 %v4349, %v4365
    %v4446 = vmax.f32 %v4350, %v4366
    %v4447 = vmax.f32 %v4351, %v4367
    %v4448 = vmax.f32 %v4352, %v4368
    %v4449 = vmax.f32 %v4353, %v4369
    %v4450 = vmax.f32 %v4370, %v4386
    %v4451 = vmax.f32 %v4371, %v4387
    %v4452 = vmax.f32 %v4372, %v4388
    %v4453 = vmax.f32 %v4373, %v4389
    %v4454 = vmax.f32 %v4374, %v4390
    %v4455 = vmax.f32 %v4375, %v4391
    %v4456 = vmax.f32 %v4376, %v4392
    %v4457 = vmax.f32 %v4377, %v4393
    %v4458 = vmax.f32 %v4378, %v4394
    %v4459 = vmax.f32 %v4379, %v4395
    %v4460 = vmax.f32 %v4380, %v4396
    %v4461 = vmax.f32 %v4381, %v4397
    %v4462 = vmax.f32 %v4382, %v4398
    %v4463 = vmax.f32 %v4383, %v4399
    %v4464 = vmax.f32 %v4384, %v4400
    %v4465 = vmax.f32 %v4385, %v4401
    %v4466 = vmax.f32 %v4402, %v4410
    %v4467 = vmax.f32 %v4403, %v4411
    %v4468 = vmax.f32 %v4404, %v4412
    %v4469 = vmax.f32 %v4405, %v4413
    %v4470 = vmax.f32 %v4406, %v4414
    %v4471 = vmax.f32 %v4407, %v4415
    %v4472 = vmax.f32 %v4408, %v4416
    %v4473 = vmax.f32 %v4409, %v4417
    %v4474 = vmax.f32 %v4418, %v4426
    %v4475 = vmax.f32 %v4419, %v4427
    %v4476 = vmax.f32 %v4420, %v4428
    %v4477 = vmax.f32 %v4421, %v4429
    %v4478 = vmax.f32 %v4422, %v4430
    %v4479 = vmax.f32 %v4423, %v4431
    %v4480 = vmax.f32 %v4424, %v4432
    %v4481 = vmax.f32 %v4425, %v4433
    %v4482 = vmax.f32 %v4434, %v4442
    %v4483 = vmax.f32 %v4435, %v4443
    %v4484 = vmax.f32 %v4436, %v4444
    %v4485 = vmax.f32 %v4437, %v4445
    %v4486 = vmax.f32 %v4438, %v4446
    %v4487 = vmax.f32 %v4439, %v4447
    %v4488 = vmax.f32 %v4440, %v4448
    %v4489 = vmax.f32 %v4441, %v4449
    %v4490 = vmax.f32 %v4450, %v4458
    %v4491 = vmax.f32 %v4451, %v4459
    %v4492 = vmax.f32 %v4452, %v4460
    %v4493 = vmax.f32 %v4453, %v4461
    %v4494 = vmax.f32 %v4454, %v4462
    %v4495 = vmax.f32 %v4455, %v4463
    %v4496 = vmax.f32 %v4456, %v4464
    %v4497 = vmax.f32 %v4457, %v4465
    %v4498 = vmax.f32 %v4466, %v4470
    %v4499 = vmax.f32 %v4467, %v4471
    %v4500 = vmax.f32 %v4468, %v4472
    %v4501 = vmax.f32 %v4469, %v4473
    %v4502 = vmax.f32 %v4474, %v4478
    %v4503 = vmax.f32 %v4475, %v4479
    %v4504 = vmax.f32 %v4476, %v4480
    %v4505 = vmax.f32 %v4477, %v4481
    %v4506 = vmax.f32 %v4482, %v4486
    %v4507 = vmax.f32 %v4483, %v4487
    %v4508 = vmax.f32 %v4484, %v4488
    %v4509 = vmax.f32 %v4485, %v4489
    %v4510 = vmax.f32 %v4490, %v4494
    %v4511 = vmax.f32 %v4491, %v4495
    %v4512 = vmax.f32 %v4492, %v4496
    %v4513 = vmax.f32 %v4493, %v4497
    %v4514 = vmax.f32 %v4498, %v4500
    %v4515 = vmax.f32 %v4499, %v4501
    %v4516 = vmax.f32 %v4502, %v4504
    %v4517 = vmax.f32 %v4503, %v4505
    %v4518 = vmax.f32 %v4506, %v4508
    %v4519 = vmax.f32 %v4507, %v4509
    %v4520 = vmax.f32 %v4510, %v4512
    %v4521 = vmax.f32 %v4511, %v4513
    %v4522 = vmax.f32 %v4514, %v4515
    %v4523 = vmax.f32 %v4516, %v4517
    %v4524 = vmax.f32 %v4518, %v4519
    %v4525 = vmax.f32 %v4520, %v4521
    %v4526 = vld [vmem:[%s5] sm:$0xff]
    %v4527 = vld [vmem:[%s5 + $0x8] sm:$0xff]
    %v4528 = vld [vmem:[%s5 + $0x10] sm:$0xff]
    %v4529 = vld [vmem:[%s5 + $0x18] sm:$0xff]
    %4531 = vset.pattern.permute.xlu0 0
    %4532 = vperm.xlu0 %4531, %v4526
    %v4533 = vpop.permute.xlu0 %4532
    %4536 = vset.pattern.permute.xlu0 0
    %4537 = vperm.xlu0 %4536, %v4527
    %v4538 = vpop.permute.xlu0 %4537
    %4541 = vset.pattern.permute.xlu0 0
    %4542 = vperm.xlu0 %4541, %v4528
    %v4543 = vpop.permute.xlu0 %4542
    %4546 = vset.pattern.permute.xlu0 0
    %4547 = vperm.xlu0 %4546, %v4529
    %v4548 = vpop.permute.xlu0 %4547
    %v4550 = vadd.f32 %v4522, %v4533
    %v4551 = vadd.f32 %v4523, %v4538
    %v4552 = vadd.f32 %v4524, %v4543
    %v4553 = vadd.f32 %v4525, %v4548
    %vm4554 = vcmp.gt.s32.totalorder %v3695, 0
    %v4555 = vsel %vm4554, 1, 0
    %v4556 = vperm.slane %v4555, 0
    %vm4557 = vcmp.eq.s32.totalorder %v4556, 1
    %v4558 = vsel %vm4557, %v4550, 0.0
    %v4559 = vsel %vm4557, %v4551, 0.0
    %v4560 = vsel %vm4557, %v4552, 0.0
    %v4561 = vsel %vm4557, %v4553, 0.0
    %4562 = vst [vmem:[#allocation5] sm:$0xff] %v4558
    %4563 = vst [vmem:[#allocation5 + $0x8] sm:$0xff] %v4559
    %4564 = vst [vmem:[#allocation5 + $0x10] sm:$0xff] %v4560
    %4565 = vst [vmem:[#allocation5 + $0x18] sm:$0xff] %v4561
    // Predicated region
    $region30: #{tpu_custom_call.1} parent=1 // pred_check
      _
    $region31: #{tpu_custom_call.1} parent=1 // pred_check_branch
      %4567 = sbr.rel (0) target = $region33
    $region32: #{tpu_custom_call.1} parent=1 // pred_region
      %4569 = vsyncadd [#allocation4], 0
      %s4570 = sshll.u32 [#allocation5], 4
      %s4571 = int_to_ptr.vmem [resolvable:$true] %s4570
      %s4572 = sshll.u32 %s6, 4
      %s4573 = int_to_ptr.hbm [resolvable:$true] %s4572
      %4578 = dma.vmem_to_hbm [thread:$0]  %s4571, 512, %s4573, [#allocation4], 128, 128, 8
    $region33: #{tpu_custom_call.1} parent=1 // pred_fallthru
      _
    // Predicated region
    $region34: #{tpu_custom_call.1} parent=1 // pred_check
      _
    $region35: #{tpu_custom_call.1} parent=1 // pred_check_branch
      %4580 = sbr.rel (0) target = $region37
    $region36: #{tpu_custom_call.1} parent=1 // pred_region
      %4582 = dma.done [#allocation4], 512
    $region37: #{tpu_custom_call.1} parent=1 // pred_fallthru
      _
    %4583 = vsyncpa [#allocation3], 1
    %4584 = vsyncpa [#allocation4], 1

</llo_original>
